<compile_context>
chip_gen: v6e
topology: v6e:2x2x1
jax: 0.10.0
libtpu: 0.0.40
codegen_flags: <defaults>
</compile_context>

<pallas_src>
import functools

import jax
import jax.numpy as jnp
from jax.experimental import pallas as pl
from jax.experimental.pallas import tpu as pltpu


# ----------------------------------------------------------------------------
# Multi-bandwidth Gaussian kernel sum.
# ----------------------------------------------------------------------------
def _pow2_sigma_chain(sigmas):
    """If every exp(-l2/sigma_i) equals exp(-l2/sigma_max)**n_i with n_i an
    exact power of two, return (sigma_max, [n_i]); otherwise None."""
    sigmas = [float(s) for s in sigmas]
    if not sigmas:
        return None
    smax = max(sigmas)
    if smax <= 0.0:
        return None
    powers = []
    for s in sigmas:
        if s <= 0.0:
            return None
        r = smax / s
        n = int(round(r))
        if n < 1 or abs(r - n) > 1e-9 * max(1.0, r) or (n & (n - 1)):
            return None
        powers.append(n)
    return smax, powers


def _gaussian_kernel_sum(l2, sigmas):
    """sum_sigma exp(-l2 / sigma).  Default sigmas (1,2,4,8,16) use a single
    EUP exp plus cheap VPU squarings, keeping only two live temporaries."""
    chain = _pow2_sigma_chain(sigmas)
    if chain is not None:
        smax, powers = chain
        counts = {}
        for n in powers:
            counts[n] = counts.get(n, 0) + 1
        base = jnp.exp(l2 * (-1.0 / smax))     # one EUP pass per L2 block
        out = None
        cur = base
        p, max_n = 1, max(powers)
        while True:
            c = counts.get(p, 0)
            if c:
                term = cur if c == 1 else cur * float(c)
                out = term if out is None else out + term
            if p >= max_n:
                break
            cur = cur * cur                    # VPU squaring: base^(2p)
            p *= 2
        return out
    # Generic fallback: one exp per sigma (EUP has its own issue slot).
    out = None
    for s in sigmas:
        t = jnp.exp(l2 * (-1.0 / float(s)))
        out = t if out is None else out + t
    return out


# ----------------------------------------------------------------------------
# Kernel body.
# ----------------------------------------------------------------------------
def _mmd_kernel(src_ref, tgt_ref, out_ref, acc_ref, *, sigmas, batch_size):
    # src_ref / tgt_ref: (D, B, TS) blocks -- TS sequence positions on lanes.
    # out_ref: (8, 128) lane-dense block, written once at finalize.
    # acc_ref: (B, TS) f32 VMEM scratch; persists across grid steps.
    step = pl.program_id(0)
    B = batch_size
    D = src_ref.shape[0]
    TS = src_ref.shape[2]

    @pl.when(step == 0)
    def _init():
        acc_ref[...] = jnp.zeros_like(acc_ref)

    # --- Fused pairwise L2 accumulation over the feature dim ----------------
    # No (B, B, TS, D) intermediate: each feature d contributes a lane-dense
    # (B, B, TS) subtract/square/add (pure VPU), accumulated in place.
    l2_ss = jnp.zeros((B, B, TS), jnp.float32)
    l2_tt = jnp.zeros((B, B, TS), jnp.float32)
    l2_st = jnp.zeros((B, B, TS), jnp.float32)
    for d in range(D):                              # static unroll over features
        xs = src_ref[d].astype(jnp.float32)         # (B, TS)
        xt = tgt_ref[d].astype(jnp.float32)         # (B, TS)
        dss = xs[:, None, :] - xs[None, :, :]       # (B, B, TS)
        dtt = xt[:, None, :] - xt[None, :, :]
        dst = xs[:, None, :] - xt[None, :, :]
        l2_ss = l2_ss + dss * dss
        l2_tt = l2_tt + dtt * dtt
        l2_st = l2_st + dst * dst

    # TODO(synk): for B >~ 64 route the cross terms through the MXU via the Gram identity (L2 = |x|^2 + |y|^2 - 2 x.y, clamped at 0); the fused VPU path is the right choice for small/medium B, and SS/TT upper-triangle-only would save ~1/3 more there.

    k_all = (_gaussian_kernel_sum(l2_ss, sigmas)
             + _gaussian_kernel_sum(l2_tt, sigmas)
             - 2.0 * _gaussian_kernel_sum(l2_st, sigmas))       # (B, B, TS)

    # Vectorised partial sum: reduce only the leading axis (pure VPU adds);
    # the lone cross-sublane / cross-lane reduce happens once, in finalize.
    acc_ref[...] = acc_ref[...] + jnp.sum(k_all, axis=0)

    @pl.when(step == pl.num_programs(0) - 1)
    def _finalize():
        inv_b2 = 1.0 / float(B * B)
        total = jnp.sum(acc_ref[...], keepdims=True) * inv_b2   # (1, 1)
        out_ref[...] = jnp.zeros_like(out_ref) + total


# ----------------------------------------------------------------------------
# Generation-aware VMEM sizing and tile selection.
# ----------------------------------------------------------------------------
def _physical_vmem_bytes():
    try:
        info = pltpu.get_tpu_info()
        for attr in ("vmem_capacity_bytes", "vmem_bytes", "vmem_size_bytes"):
            v = getattr(info, attr, None)
            if v:
                return int(v)
    except Exception:
        pass
    return 64 * 1024 * 1024     # conservative default: v7x per-TensorCore VMEM


def _step_vmem_bytes(ts, B, D, itemsize):
    """Peak VMEM of one grid step: double-buffered inputs + accumulator +
    live (B, B, TS) L2 / kernel-sum intermediates (all f32)."""
    b_pad = -(-max(B, 1) // 8) * 8
    ts_pad = -(-max(ts, 1) // 128) * 128
    inputs = 2 * 2 * D * b_pad * ts_pad * itemsize    # 2 operands x double buffer
    acc = b_pad * ts_pad * 4
    inter = 7 * B * b_pad * ts_pad * 4                # l2_ss/tt/st + exp temps + k_all
    return inputs + acc + inter + 8 * 128 * 4


def _choose_block_positions(S, B, D, itemsize, budget, max_ts=2048):
    """Pick the TS sequence tile: a single full-S block if it fits, otherwise
    the multiple of 128 that fits `budget` with the least zero padding."""
    if S <= max_ts and _step_vmem_bytes(S, B, D, itemsize) <= budget:
        return S, S                                   # block dim == array dim: legal
    cap = 128                                         # 128 is the smallest legal tile
    while cap + 128 <= max_ts and _step_vmem_bytes(cap + 128, B, D, itemsize) <= budget:
        cap += 128
    best_ts, best_pad = 128, -(-S // 128) * 128
    ts = 256
    while ts <= cap:
        padded = -(-S // ts) * ts
        if padded < best_pad or (padded == best_pad and ts > best_ts):
            best_ts, best_pad = ts, padded
        ts += 128
    return best_ts, best_pad


# ----------------------------------------------------------------------------
# Wrapper.
# ----------------------------------------------------------------------------
def mmd_loss_cnn(source, target, *, fix_sigma=(1.0, 2.0, 4.0, 8.0, 16.0)):
    """Pallas equivalent of MMD_loss_CNN(fix_sigma=list(fix_sigma))(source, target).

    source, target: (B, S, D) arrays of identical shape/dtype.
    Returns a scalar float32 loss.
    """
    assert source.shape == target.shape and source.ndim == 3
    B, S, D = source.shape
    itemsize = jnp.dtype(source.dtype).itemsize

    phys_vmem = _physical_vmem_bytes()
    budget = min(phys_vmem * 3 // 8, 56 * 1024 * 1024)   # 24 MiB on v7x, 48 MiB v5e/v6e
    TS, S_pad = _choose_block_positions(S, B, D, itemsize, budget)
    NB = S_pad // TS

    # Lane-dense layout: sequence axis on the 128-wide lane axis -> (D, B, S).
    src = jnp.transpose(source, (2, 0, 1))
    tgt = jnp.transpose(target, (2, 0, 1))
    if S_pad != S:
        # Zero padding is exactly neutral: padded positions give
        # k_ss = k_tt = k_st = len(sigmas), so XX + YY - XY - YX == 0 there.
        pad = ((0, 0), (0, 0), (0, S_pad - S))
        src = jnp.pad(src, pad)
        tgt = jnp.pad(tgt, pad)

    sigmas = tuple(float(x) for x in fix_sigma)
    kernel = functools.partial(_mmd_kernel, sigmas=sigmas, batch_size=B)

    est = _step_vmem_bytes(TS, B, D, itemsize)
    vmem_limit = int(min(phys_vmem * 5 // 8,              # <=40 MiB v7x, <=80 MiB v5e/v6e
                         max(2 * est + (8 << 20), 32 << 20)))

    n_exp = 1 if _pow2_sigma_chain(sigmas) is not None else max(1, len(sigmas))
    cost = pl.CostEstimate(
        flops=int(9 * B * B * S_pad * D + 32 * B * B * S_pad),
        transcendentals=int(3 * B * B * S_pad * n_exp),
        bytes_accessed=int(2 * B * S_pad * D * itemsize + 8 * 128 * 4),
    )

    # TODO(synk): on v7x, shard the S-block axis across the two TensorCores (pltpu.CORE_PARALLEL / pl.core_map); plain "parallel" never split cores, and v5e/v6e want this single sequential axis.
    # If profiling shows exposed input DMA at small B, add pipeline_mode=pl.Buffered(3) to the input BlockSpecs.
    out = pl.pallas_call(
        kernel,
        out_shape=jax.ShapeDtypeStruct((8, 128), jnp.float32),
        grid_spec=pltpu.PrefetchScalarGridSpec(
            num_scalar_prefetch=0,
            grid=(NB,),
            in_specs=[
                pl.BlockSpec((D, B, TS), lambda s: (0, 0, s)),   # source (D, B, S)
                pl.BlockSpec((D, B, TS), lambda s: (0, 0, s)),   # target (D, B, S)
            ],
            out_specs=pl.BlockSpec((8, 128), lambda s: (0, 0)),
            scratch_shapes=[pltpu.VMEM((B, TS), jnp.float32)],
        ),
        compiler_params=pltpu.CompilerParams(
            dimension_semantics=("arbitrary",),
            vmem_limit_bytes=vmem_limit,
        ),
        cost_estimate=cost,
    )(src, tgt)

    return out[0, 0]


# ----------------------------------------------------------------------------
# Pure-JAX reference (mirrors the PyTorch module line by line).
# ----------------------------------------------------------------------------
def _mmd_loss_ref(source, target, fix_sigma=(1.0, 2.0, 4.0, 8.0, 16.0)):
    B = source.shape[0]
    total = jnp.concatenate([source, target], axis=0)           # (2B, S, D)
    diff = total[None, :, :, :] - total[:, None, :, :]          # (2B, 2B, S, D)
    l2 = jnp.sum(diff ** 2, axis=3)                             # (2B, 2B, S)
    kern = sum(jnp.exp(-l2 / sigma) for sigma in fix_sigma)
    xx = kern[:B, :B, :]
    yy = kern[B:, B:, :]
    xy = kern[:B, B:, :]
    yx = kern[B:, :B, :]
    loss_1 = xx + yy - xy - yx
    return jnp.sum(jnp.mean(jnp.mean(loss_1, axis=0), axis=0))


if __name__ == "__main__":
    key = jax.random.PRNGKey(0)
    k_src, k_tgt = jax.random.split(key)
    B, S, D = 4, 8, 32
    source = jax.random.normal(k_src, (B, S, D), dtype=jnp.float32)
    target = jax.random.normal(k_tgt, (B, S, D), dtype=jnp.float32) + 0.5

    loss = mmd_loss_cnn(source, target)
    loss = jax.block_until_ready(loss)

    ref = _mmd_loss_ref(source, target)
    assert jnp.allclose(loss, ref, rtol=1e-4, atol=1e-4), (loss, ref)

    print("KERNEL_OK")
</pallas_src>

<mosaic_0001>
module attributes {stable_mosaic.version = 11 : i64} {
  func.func @_mmd_kernel(%arg0: i32, %arg1: memref<32x4x8xf32, #tpu.memory_space<vmem>>, %arg2: memref<32x4x8xf32, #tpu.memory_space<vmem>>, %arg3: memref<8x128xf32, #tpu.memory_space<vmem>>, %arg4: memref<4x8xf32, #tpu.memory_space<vmem>>) attributes {dimension_semantics = [#tpu.dimension_semantics<arbitrary>], iteration_bounds = array<i64: 1>, scalar_prefetch = 0 : i64, scratch_operands = 1 : i64, tpu.core_type = #tpu.core_type<tc>, window_params = [{transform_indices = @transform_0, window_bounds = array<i64: 32, 4, 8>}, {transform_indices = @transform_1, window_bounds = array<i64: 32, 4, 8>}, {pipeline_mode = #tpu.pipeline_mode<synchronous>, transform_indices = @transform_2, window_bounds = array<i64: 8, 128>}]} {
    %c0_i32 = arith.constant 0 : i32
    %0 = arith.cmpi eq, %arg0, %c0_i32 : i32
    %1 = arith.extui %0 : i1 to i32
    %c0_i32_0 = arith.constant 0 : i32
    %2 = arith.cmpi ne, %1, %c0_i32_0 : i32
    scf.if %2 {
      %cst_174 = arith.constant 0.000000e+00 : f32
      %850 = vector.broadcast %cst_174 : f32 to vector<4x8xf32>
      %c0_175 = arith.constant 0 : index
      %c0_176 = arith.constant 0 : index
      %851 = vector.load %arg4[%c0_175, %c0_176] : memref<4x8xf32, #tpu.memory_space<vmem>>, vector<4x8xf32>
      tpu.vector_store %arg4[%c0_175, %c0_176], %850 {strides = array<i32>} : memref<4x8xf32, #tpu.memory_space<vmem>>, vector<4x8xf32>,
    } else {
    }
    %cst = arith.constant 0.000000e+00 : f32
    %3 = vector.broadcast %cst : f32 to vector<4x4x8xf32>
    %cst_1 = arith.constant 0.000000e+00 : f32
    %4 = vector.broadcast %cst_1 : f32 to vector<4x4x8xf32>
    %cst_2 = arith.constant 0.000000e+00 : f32
    %5 = vector.broadcast %cst_2 : f32 to vector<4x4x8xf32>
    %c0 = arith.constant 0 : index
    %c0_3 = arith.constant 0 : index
    %c0_4 = arith.constant 0 : index
    %6 = vector.load %arg1[%c0, %c0_3, %c0_4] : memref<32x4x8xf32, #tpu.memory_space<vmem>>, vector<1x4x8xf32>
    %7 = vector.shape_cast %6 : vector<1x4x8xf32> to vector<4x8xf32>
    %c0_5 = arith.constant 0 : index
    %c0_6 = arith.constant 0 : index
    %c0_7 = arith.constant 0 : index
    %8 = vector.load %arg2[%c0_5, %c0_6, %c0_7] : memref<32x4x8xf32, #tpu.memory_space<vmem>>, vector<1x4x8xf32>
    %9 = vector.shape_cast %8 : vector<1x4x8xf32> to vector<4x8xf32>
    %10 = vector.shape_cast %7 : vector<4x8xf32> to vector<4x1x8xf32>
    %11 = vector.shape_cast %7 : vector<4x8xf32> to vector<1x4x8xf32>
    %12 = vector.broadcast %10 : vector<4x1x8xf32> to vector<4x4x8xf32>
    %13 = vector.broadcast %11 : vector<1x4x8xf32> to vector<4x4x8xf32>
    %14 = arith.subf %12, %13 : vector<4x4x8xf32>
    %15 = vector.shape_cast %9 : vector<4x8xf32> to vector<4x1x8xf32>
    %16 = vector.shape_cast %9 : vector<4x8xf32> to vector<1x4x8xf32>
    %17 = vector.broadcast %15 : vector<4x1x8xf32> to vector<4x4x8xf32>
    %18 = vector.broadcast %16 : vector<1x4x8xf32> to vector<4x4x8xf32>
    %19 = arith.subf %17, %18 : vector<4x4x8xf32>
    %20 = vector.shape_cast %7 : vector<4x8xf32> to vector<4x1x8xf32>
    %21 = vector.shape_cast %9 : vector<4x8xf32> to vector<1x4x8xf32>
    %22 = vector.broadcast %20 : vector<4x1x8xf32> to vector<4x4x8xf32>
    %23 = vector.broadcast %21 : vector<1x4x8xf32> to vector<4x4x8xf32>
    %24 = arith.subf %22, %23 : vector<4x4x8xf32>
    %25 = arith.mulf %14, %14 : vector<4x4x8xf32>
    %26 = arith.addf %3, %25 : vector<4x4x8xf32>
    %27 = arith.mulf %19, %19 : vector<4x4x8xf32>
    %28 = arith.addf %4, %27 : vector<4x4x8xf32>
    %29 = arith.mulf %24, %24 : vector<4x4x8xf32>
    %30 = arith.addf %5, %29 : vector<4x4x8xf32>
    %c1 = arith.constant 1 : index
    %c0_8 = arith.constant 0 : index
    %c0_9 = arith.constant 0 : index
    %31 = vector.load %arg1[%c1, %c0_8, %c0_9] : memref<32x4x8xf32, #tpu.memory_space<vmem>>, vector<1x4x8xf32>
    %32 = vector.shape_cast %31 : vector<1x4x8xf32> to vector<4x8xf32>
    %c1_10 = arith.constant 1 : index
    %c0_11 = arith.constant 0 : index
    %c0_12 = arith.constant 0 : index
    %33 = vector.load %arg2[%c1_10, %c0_11, %c0_12] : memref<32x4x8xf32, #tpu.memory_space<vmem>>, vector<1x4x8xf32>
    %34 = vector.shape_cast %33 : vector<1x4x8xf32> to vector<4x8xf32>
    %35 = vector.shape_cast %32 : vector<4x8xf32> to vector<4x1x8xf32>
    %36 = vector.shape_cast %32 : vector<4x8xf32> to vector<1x4x8xf32>
    %37 = vector.broadcast %35 : vector<4x1x8xf32> to vector<4x4x8xf32>
    %38 = vector.broadcast %36 : vector<1x4x8xf32> to vector<4x4x8xf32>
    %39 = arith.subf %37, %38 : vector<4x4x8xf32>
    %40 = vector.shape_cast %34 : vector<4x8xf32> to vector<4x1x8xf32>
    %41 = vector.shape_cast %34 : vector<4x8xf32> to vector<1x4x8xf32>
    %42 = vector.broadcast %40 : vector<4x1x8xf32> to vector<4x4x8xf32>
    %43 = vector.broadcast %41 : vector<1x4x8xf32> to vector<4x4x8xf32>
    %44 = arith.subf %42, %43 : vector<4x4x8xf32>
    %45 = vector.shape_cast %32 : vector<4x8xf32> to vector<4x1x8xf32>
    %46 = vector.shape_cast %34 : vector<4x8xf32> to vector<1x4x8xf32>
    %47 = vector.broadcast %45 : vector<4x1x8xf32> to vector<4x4x8xf32>
    %48 = vector.broadcast %46 : vector<1x4x8xf32> to vector<4x4x8xf32>
    %49 = arith.subf %47, %48 : vector<4x4x8xf32>
    %50 = arith.mulf %39, %39 : vector<4x4x8xf32>
    %51 = arith.addf %26, %50 : vector<4x4x8xf32>
    %52 = arith.mulf %44, %44 : vector<4x4x8xf32>
    %53 = arith.addf %28, %52 : vector<4x4x8xf32>
    %54 = arith.mulf %49, %49 : vector<4x4x8xf32>
    %55 = arith.addf %30, %54 : vector<4x4x8xf32>
    %c2 = arith.constant 2 : index
    %c0_13 = arith.constant 0 : index
    %c0_14 = arith.constant 0 : index
    %56 = vector.load %arg1[%c2, %c0_13, %c0_14] : memref<32x4x8xf32, #tpu.memory_space<vmem>>, vector<1x4x8xf32>
    %57 = vector.shape_cast %56 : vector<1x4x8xf32> to vector<4x8xf32>
    %c2_15 = arith.constant 2 : index
    %c0_16 = arith.constant 0 : index
    %c0_17 = arith.constant 0 : index
    %58 = vector.load %arg2[%c2_15, %c0_16, %c0_17] : memref<32x4x8xf32, #tpu.memory_space<vmem>>, vector<1x4x8xf32>
    %59 = vector.shape_cast %58 : vector<1x4x8xf32> to vector<4x8xf32>
    %60 = vector.shape_cast %57 : vector<4x8xf32> to vector<4x1x8xf32>
    %61 = vector.shape_cast %57 : vector<4x8xf32> to vector<1x4x8xf32>
    %62 = vector.broadcast %60 : vector<4x1x8xf32> to vector<4x4x8xf32>
    %63 = vector.broadcast %61 : vector<1x4x8xf32> to vector<4x4x8xf32>
    %64 = arith.subf %62, %63 : vector<4x4x8xf32>
    %65 = vector.shape_cast %59 : vector<4x8xf32> to vector<4x1x8xf32>
    %66 = vector.shape_cast %59 : vector<4x8xf32> to vector<1x4x8xf32>
    %67 = vector.broadcast %65 : vector<4x1x8xf32> to vector<4x4x8xf32>
    %68 = vector.broadcast %66 : vector<1x4x8xf32> to vector<4x4x8xf32>
    %69 = arith.subf %67, %68 : vector<4x4x8xf32>
    %70 = vector.shape_cast %57 : vector<4x8xf32> to vector<4x1x8xf32>
    %71 = vector.shape_cast %59 : vector<4x8xf32> to vector<1x4x8xf32>
    %72 = vector.broadcast %70 : vector<4x1x8xf32> to vector<4x4x8xf32>
    %73 = vector.broadcast %71 : vector<1x4x8xf32> to vector<4x4x8xf32>
    %74 = arith.subf %72, %73 : vector<4x4x8xf32>
    %75 = arith.mulf %64, %64 : vector<4x4x8xf32>
    %76 = arith.addf %51, %75 : vector<4x4x8xf32>
    %77 = arith.mulf %69, %69 : vector<4x4x8xf32>
    %78 = arith.addf %53, %77 : vector<4x4x8xf32>
    %79 = arith.mulf %74, %74 : vector<4x4x8xf32>
    %80 = arith.addf %55, %79 : vector<4x4x8xf32>
    %c3 = arith.constant 3 : index
    %c0_18 = arith.constant 0 : index
    %c0_19 = arith.constant 0 : index
    %81 = vector.load %arg1[%c3, %c0_18, %c0_19] : memref<32x4x8xf32, #tpu.memory_space<vmem>>, vector<1x4x8xf32>
    %82 = vector.shape_cast %81 : vector<1x4x8xf32> to vector<4x8xf32>
    %c3_20 = arith.constant 3 : index
    %c0_21 = arith.constant 0 : index
    %c0_22 = arith.constant 0 : index
    %83 = vector.load %arg2[%c3_20, %c0_21, %c0_22] : memref<32x4x8xf32, #tpu.memory_space<vmem>>, vector<1x4x8xf32>
    %84 = vector.shape_cast %83 : vector<1x4x8xf32> to vector<4x8xf32>
    %85 = vector.shape_cast %82 : vector<4x8xf32> to vector<4x1x8xf32>
    %86 = vector.shape_cast %82 : vector<4x8xf32> to vector<1x4x8xf32>
    %87 = vector.broadcast %85 : vector<4x1x8xf32> to vector<4x4x8xf32>
    %88 = vector.broadcast %86 : vector<1x4x8xf32> to vector<4x4x8xf32>
    %89 = arith.subf %87, %88 : vector<4x4x8xf32>
    %90 = vector.shape_cast %84 : vector<4x8xf32> to vector<4x1x8xf32>
    %91 = vector.shape_cast %84 : vector<4x8xf32> to vector<1x4x8xf32>
    %92 = vector.broadcast %90 : vector<4x1x8xf32> to vector<4x4x8xf32>
    %93 = vector.broadcast %91 : vector<1x4x8xf32> to vector<4x4x8xf32>
    %94 = arith.subf %92, %93 : vector<4x4x8xf32>
    %95 = vector.shape_cast %82 : vector<4x8xf32> to vector<4x1x8xf32>
    %96 = vector.shape_cast %84 : vector<4x8xf32> to vector<1x4x8xf32>
    %97 = vector.broadcast %95 : vector<4x1x8xf32> to vector<4x4x8xf32>
    %98 = vector.broadcast %96 : vector<1x4x8xf32> to vector<4x4x8xf32>
    %99 = arith.subf %97, %98 : vector<4x4x8xf32>
    %100 = arith.mulf %89, %89 : vector<4x4x8xf32>
    %101 = arith.addf %76, %100 : vector<4x4x8xf32>
    %102 = arith.mulf %94, %94 : vector<4x4x8xf32>
    %103 = arith.addf %78, %102 : vector<4x4x8xf32>
    %104 = arith.mulf %99, %99 : vector<4x4x8xf32>
    %105 = arith.addf %80, %104 : vector<4x4x8xf32>
    %c4 = arith.constant 4 : index
    %c0_23 = arith.constant 0 : index
    %c0_24 = arith.constant 0 : index
    %106 = vector.load %arg1[%c4, %c0_23, %c0_24] : memref<32x4x8xf32, #tpu.memory_space<vmem>>, vector<1x4x8xf32>
    %107 = vector.shape_cast %106 : vector<1x4x8xf32> to vector<4x8xf32>
    %c4_25 = arith.constant 4 : index
    %c0_26 = arith.constant 0 : index
    %c0_27 = arith.constant 0 : index
    %108 = vector.load %arg2[%c4_25, %c0_26, %c0_27] : memref<32x4x8xf32, #tpu.memory_space<vmem>>, vector<1x4x8xf32>
    %109 = vector.shape_cast %108 : vector<1x4x8xf32> to vector<4x8xf32>
    %110 = vector.shape_cast %107 : vector<4x8xf32> to vector<4x1x8xf32>
    %111 = vector.shape_cast %107 : vector<4x8xf32> to vector<1x4x8xf32>
    %112 = vector.broadcast %110 : vector<4x1x8xf32> to vector<4x4x8xf32>
    %113 = vector.broadcast %111 : vector<1x4x8xf32> to vector<4x4x8xf32>
    %114 = arith.subf %112, %113 : vector<4x4x8xf32>
    %115 = vector.shape_cast %109 : vector<4x8xf32> to vector<4x1x8xf32>
    %116 = vector.shape_cast %109 : vector<4x8xf32> to vector<1x4x8xf32>
    %117 = vector.broadcast %115 : vector<4x1x8xf32> to vector<4x4x8xf32>
    %118 = vector.broadcast %116 : vector<1x4x8xf32> to vector<4x4x8xf32>
    %119 = arith.subf %117, %118 : vector<4x4x8xf32>
    %120 = vector.shape_cast %107 : vector<4x8xf32> to vector<4x1x8xf32>
    %121 = vector.shape_cast %109 : vector<4x8xf32> to vector<1x4x8xf32>
    %122 = vector.broadcast %120 : vector<4x1x8xf32> to vector<4x4x8xf32>
    %123 = vector.broadcast %121 : vector<1x4x8xf32> to vector<4x4x8xf32>
    %124 = arith.subf %122, %123 : vector<4x4x8xf32>
    %125 = arith.mulf %114, %114 : vector<4x4x8xf32>
    %126 = arith.addf %101, %125 : vector<4x4x8xf32>
    %127 = arith.mulf %119, %119 : vector<4x4x8xf32>
    %128 = arith.addf %103, %127 : vector<4x4x8xf32>
    %129 = arith.mulf %124, %124 : vector<4x4x8xf32>
    %130 = arith.addf %105, %129 : vector<4x4x8xf32>
    %c5 = arith.constant 5 : index
    %c0_28 = arith.constant 0 : index
    %c0_29 = arith.constant 0 : index
    %131 = vector.load %arg1[%c5, %c0_28, %c0_29] : memref<32x4x8xf32, #tpu.memory_space<vmem>>, vector<1x4x8xf32>
    %132 = vector.shape_cast %131 : vector<1x4x8xf32> to vector<4x8xf32>
    %c5_30 = arith.constant 5 : index
    %c0_31 = arith.constant 0 : index
    %c0_32 = arith.constant 0 : index
    %133 = vector.load %arg2[%c5_30, %c0_31, %c0_32] : memref<32x4x8xf32, #tpu.memory_space<vmem>>, vector<1x4x8xf32>
    %134 = vector.shape_cast %133 : vector<1x4x8xf32> to vector<4x8xf32>
    %135 = vector.shape_cast %132 : vector<4x8xf32> to vector<4x1x8xf32>
    %136 = vector.shape_cast %132 : vector<4x8xf32> to vector<1x4x8xf32>
    %137 = vector.broadcast %135 : vector<4x1x8xf32> to vector<4x4x8xf32>
    %138 = vector.broadcast %136 : vector<1x4x8xf32> to vector<4x4x8xf32>
    %139 = arith.subf %137, %138 : vector<4x4x8xf32>
    %140 = vector.shape_cast %134 : vector<4x8xf32> to vector<4x1x8xf32>
    %141 = vector.shape_cast %134 : vector<4x8xf32> to vector<1x4x8xf32>
    %142 = vector.broadcast %140 : vector<4x1x8xf32> to vector<4x4x8xf32>
    %143 = vector.broadcast %141 : vector<1x4x8xf32> to vector<4x4x8xf32>
    %144 = arith.subf %142, %143 : vector<4x4x8xf32>
    %145 = vector.shape_cast %132 : vector<4x8xf32> to vector<4x1x8xf32>
    %146 = vector.shape_cast %134 : vector<4x8xf32> to vector<1x4x8xf32>
    %147 = vector.broadcast %145 : vector<4x1x8xf32> to vector<4x4x8xf32>
    %148 = vector.broadcast %146 : vector<1x4x8xf32> to vector<4x4x8xf32>
    %149 = arith.subf %147, %148 : vector<4x4x8xf32>
    %150 = arith.mulf %139, %139 : vector<4x4x8xf32>
    %151 = arith.addf %126, %150 : vector<4x4x8xf32>
    %152 = arith.mulf %144, %144 : vector<4x4x8xf32>
    %153 = arith.addf %128, %152 : vector<4x4x8xf32>
    %154 = arith.mulf %149, %149 : vector<4x4x8xf32>
    %155 = arith.addf %130, %154 : vector<4x4x8xf32>
    %c6 = arith.constant 6 : index
    %c0_33 = arith.constant 0 : index
    %c0_34 = arith.constant 0 : index
    %156 = vector.load %arg1[%c6, %c0_33, %c0_34] : memref<32x4x8xf32, #tpu.memory_space<vmem>>, vector<1x4x8xf32>
    %157 = vector.shape_cast %156 : vector<1x4x8xf32> to vector<4x8xf32>
    %c6_35 = arith.constant 6 : index
    %c0_36 = arith.constant 0 : index
    %c0_37 = arith.constant 0 : index
    %158 = vector.load %arg2[%c6_35, %c0_36, %c0_37] : memref<32x4x8xf32, #tpu.memory_space<vmem>>, vector<1x4x8xf32>
    %159 = vector.shape_cast %158 : vector<1x4x8xf32> to vector<4x8xf32>
    %160 = vector.shape_cast %157 : vector<4x8xf32> to vector<4x1x8xf32>
    %161 = vector.shape_cast %157 : vector<4x8xf32> to vector<1x4x8xf32>
    %162 = vector.broadcast %160 : vector<4x1x8xf32> to vector<4x4x8xf32>
    %163 = vector.broadcast %161 : vector<1x4x8xf32> to vector<4x4x8xf32>
    %164 = arith.subf %162, %163 : vector<4x4x8xf32>
    %165 = vector.shape_cast %159 : vector<4x8xf32> to vector<4x1x8xf32>
    %166 = vector.shape_cast %159 : vector<4x8xf32> to vector<1x4x8xf32>
    %167 = vector.broadcast %165 : vector<4x1x8xf32> to vector<4x4x8xf32>
    %168 = vector.broadcast %166 : vector<1x4x8xf32> to vector<4x4x8xf32>
    %169 = arith.subf %167, %168 : vector<4x4x8xf32>
    %170 = vector.shape_cast %157 : vector<4x8xf32> to vector<4x1x8xf32>
    %171 = vector.shape_cast %159 : vector<4x8xf32> to vector<1x4x8xf32>
    %172 = vector.broadcast %170 : vector<4x1x8xf32> to vector<4x4x8xf32>
    %173 = vector.broadcast %171 : vector<1x4x8xf32> to vector<4x4x8xf32>
    %174 = arith.subf %172, %173 : vector<4x4x8xf32>
    %175 = arith.mulf %164, %164 : vector<4x4x8xf32>
    %176 = arith.addf %151, %175 : vector<4x4x8xf32>
    %177 = arith.mulf %169, %169 : vector<4x4x8xf32>
    %178 = arith.addf %153, %177 : vector<4x4x8xf32>
    %179 = arith.mulf %174, %174 : vector<4x4x8xf32>
    %180 = arith.addf %155, %179 : vector<4x4x8xf32>
    %c7 = arith.constant 7 : index
    %c0_38 = arith.constant 0 : index
    %c0_39 = arith.constant 0 : index
    %181 = vector.load %arg1[%c7, %c0_38, %c0_39] : memref<32x4x8xf32, #tpu.memory_space<vmem>>, vector<1x4x8xf32>
    %182 = vector.shape_cast %181 : vector<1x4x8xf32> to vector<4x8xf32>
    %c7_40 = arith.constant 7 : index
    %c0_41 = arith.constant 0 : index
    %c0_42 = arith.constant 0 : index
    %183 = vector.load %arg2[%c7_40, %c0_41, %c0_42] : memref<32x4x8xf32, #tpu.memory_space<vmem>>, vector<1x4x8xf32>
    %184 = vector.shape_cast %183 : vector<1x4x8xf32> to vector<4x8xf32>
    %185 = vector.shape_cast %182 : vector<4x8xf32> to vector<4x1x8xf32>
    %186 = vector.shape_cast %182 : vector<4x8xf32> to vector<1x4x8xf32>
    %187 = vector.broadcast %185 : vector<4x1x8xf32> to vector<4x4x8xf32>
    %188 = vector.broadcast %186 : vector<1x4x8xf32> to vector<4x4x8xf32>
    %189 = arith.subf %187, %188 : vector<4x4x8xf32>
    %190 = vector.shape_cast %184 : vector<4x8xf32> to vector<4x1x8xf32>
    %191 = vector.shape_cast %184 : vector<4x8xf32> to vector<1x4x8xf32>
    %192 = vector.broadcast %190 : vector<4x1x8xf32> to vector<4x4x8xf32>
    %193 = vector.broadcast %191 : vector<1x4x8xf32> to vector<4x4x8xf32>
    %194 = arith.subf %192, %193 : vector<4x4x8xf32>
    %195 = vector.shape_cast %182 : vector<4x8xf32> to vector<4x1x8xf32>
    %196 = vector.shape_cast %184 : vector<4x8xf32> to vector<1x4x8xf32>
    %197 = vector.broadcast %195 : vector<4x1x8xf32> to vector<4x4x8xf32>
    %198 = vector.broadcast %196 : vector<1x4x8xf32> to vector<4x4x8xf32>
    %199 = arith.subf %197, %198 : vector<4x4x8xf32>
    %200 = arith.mulf %189, %189 : vector<4x4x8xf32>
    %201 = arith.addf %176, %200 : vector<4x4x8xf32>
    %202 = arith.mulf %194, %194 : vector<4x4x8xf32>
    %203 = arith.addf %178, %202 : vector<4x4x8xf32>
    %204 = arith.mulf %199, %199 : vector<4x4x8xf32>
    %205 = arith.addf %180, %204 : vector<4x4x8xf32>
    %c8 = arith.constant 8 : index
    %c0_43 = arith.constant 0 : index
    %c0_44 = arith.constant 0 : index
    %206 = vector.load %arg1[%c8, %c0_43, %c0_44] : memref<32x4x8xf32, #tpu.memory_space<vmem>>, vector<1x4x8xf32>
    %207 = vector.shape_cast %206 : vector<1x4x8xf32> to vector<4x8xf32>
    %c8_45 = arith.constant 8 : index
    %c0_46 = arith.constant 0 : index
    %c0_47 = arith.constant 0 : index
    %208 = vector.load %arg2[%c8_45, %c0_46, %c0_47] : memref<32x4x8xf32, #tpu.memory_space<vmem>>, vector<1x4x8xf32>
    %209 = vector.shape_cast %208 : vector<1x4x8xf32> to vector<4x8xf32>
    %210 = vector.shape_cast %207 : vector<4x8xf32> to vector<4x1x8xf32>
    %211 = vector.shape_cast %207 : vector<4x8xf32> to vector<1x4x8xf32>
    %212 = vector.broadcast %210 : vector<4x1x8xf32> to vector<4x4x8xf32>
    %213 = vector.broadcast %211 : vector<1x4x8xf32> to vector<4x4x8xf32>
    %214 = arith.subf %212, %213 : vector<4x4x8xf32>
    %215 = vector.shape_cast %209 : vector<4x8xf32> to vector<4x1x8xf32>
    %216 = vector.shape_cast %209 : vector<4x8xf32> to vector<1x4x8xf32>
    %217 = vector.broadcast %215 : vector<4x1x8xf32> to vector<4x4x8xf32>
    %218 = vector.broadcast %216 : vector<1x4x8xf32> to vector<4x4x8xf32>
    %219 = arith.subf %217, %218 : vector<4x4x8xf32>
    %220 = vector.shape_cast %207 : vector<4x8xf32> to vector<4x1x8xf32>
    %221 = vector.shape_cast %209 : vector<4x8xf32> to vector<1x4x8xf32>
    %222 = vector.broadcast %220 : vector<4x1x8xf32> to vector<4x4x8xf32>
    %223 = vector.broadcast %221 : vector<1x4x8xf32> to vector<4x4x8xf32>
    %224 = arith.subf %222, %223 : vector<4x4x8xf32>
    %225 = arith.mulf %214, %214 : vector<4x4x8xf32>
    %226 = arith.addf %201, %225 : vector<4x4x8xf32>
    %227 = arith.mulf %219, %219 : vector<4x4x8xf32>
    %228 = arith.addf %203, %227 : vector<4x4x8xf32>
    %229 = arith.mulf %224, %224 : vector<4x4x8xf32>
    %230 = arith.addf %205, %229 : vector<4x4x8xf32>
    %c9 = arith.constant 9 : index
    %c0_48 = arith.constant 0 : index
    %c0_49 = arith.constant 0 : index
    %231 = vector.load %arg1[%c9, %c0_48, %c0_49] : memref<32x4x8xf32, #tpu.memory_space<vmem>>, vector<1x4x8xf32>
    %232 = vector.shape_cast %231 : vector<1x4x8xf32> to vector<4x8xf32>
    %c9_50 = arith.constant 9 : index
    %c0_51 = arith.constant 0 : index
    %c0_52 = arith.constant 0 : index
    %233 = vector.load %arg2[%c9_50, %c0_51, %c0_52] : memref<32x4x8xf32, #tpu.memory_space<vmem>>, vector<1x4x8xf32>
    %234 = vector.shape_cast %233 : vector<1x4x8xf32> to vector<4x8xf32>
    %235 = vector.shape_cast %232 : vector<4x8xf32> to vector<4x1x8xf32>
    %236 = vector.shape_cast %232 : vector<4x8xf32> to vector<1x4x8xf32>
    %237 = vector.broadcast %235 : vector<4x1x8xf32> to vector<4x4x8xf32>
    %238 = vector.broadcast %236 : vector<1x4x8xf32> to vector<4x4x8xf32>
    %239 = arith.subf %237, %238 : vector<4x4x8xf32>
    %240 = vector.shape_cast %234 : vector<4x8xf32> to vector<4x1x8xf32>
    %241 = vector.shape_cast %234 : vector<4x8xf32> to vector<1x4x8xf32>
    %242 = vector.broadcast %240 : vector<4x1x8xf32> to vector<4x4x8xf32>
    %243 = vector.broadcast %241 : vector<1x4x8xf32> to vector<4x4x8xf32>
    %244 = arith.subf %242, %243 : vector<4x4x8xf32>
    %245 = vector.shape_cast %232 : vector<4x8xf32> to vector<4x1x8xf32>
    %246 = vector.shape_cast %234 : vector<4x8xf32> to vector<1x4x8xf32>
    %247 = vector.broadcast %245 : vector<4x1x8xf32> to vector<4x4x8xf32>
    %248 = vector.broadcast %246 : vector<1x4x8xf32> to vector<4x4x8xf32>
    %249 = arith.subf %247, %248 : vector<4x4x8xf32>
    %250 = arith.mulf %239, %239 : vector<4x4x8xf32>
    %251 = arith.addf %226, %250 : vector<4x4x8xf32>
    %252 = arith.mulf %244, %244 : vector<4x4x8xf32>
    %253 = arith.addf %228, %252 : vector<4x4x8xf32>
    %254 = arith.mulf %249, %249 : vector<4x4x8xf32>
    %255 = arith.addf %230, %254 : vector<4x4x8xf32>
    %c10 = arith.constant 10 : index
    %c0_53 = arith.constant 0 : index
    %c0_54 = arith.constant 0 : index
    %256 = vector.load %arg1[%c10, %c0_53, %c0_54] : memref<32x4x8xf32, #tpu.memory_space<vmem>>, vector<1x4x8xf32>
    %257 = vector.shape_cast %256 : vector<1x4x8xf32> to vector<4x8xf32>
    %c10_55 = arith.constant 10 : index
    %c0_56 = arith.constant 0 : index
    %c0_57 = arith.constant 0 : index
    %258 = vector.load %arg2[%c10_55, %c0_56, %c0_57] : memref<32x4x8xf32, #tpu.memory_space<vmem>>, vector<1x4x8xf32>
    %259 = vector.shape_cast %258 : vector<1x4x8xf32> to vector<4x8xf32>
    %260 = vector.shape_cast %257 : vector<4x8xf32> to vector<4x1x8xf32>
    %261 = vector.shape_cast %257 : vector<4x8xf32> to vector<1x4x8xf32>
    %262 = vector.broadcast %260 : vector<4x1x8xf32> to vector<4x4x8xf32>
    %263 = vector.broadcast %261 : vector<1x4x8xf32> to vector<4x4x8xf32>
    %264 = arith.subf %262, %263 : vector<4x4x8xf32>
    %265 = vector.shape_cast %259 : vector<4x8xf32> to vector<4x1x8xf32>
    %266 = vector.shape_cast %259 : vector<4x8xf32> to vector<1x4x8xf32>
    %267 = vector.broadcast %265 : vector<4x1x8xf32> to vector<4x4x8xf32>
    %268 = vector.broadcast %266 : vector<1x4x8xf32> to vector<4x4x8xf32>
    %269 = arith.subf %267, %268 : vector<4x4x8xf32>
    %270 = vector.shape_cast %257 : vector<4x8xf32> to vector<4x1x8xf32>
    %271 = vector.shape_cast %259 : vector<4x8xf32> to vector<1x4x8xf32>
    %272 = vector.broadcast %270 : vector<4x1x8xf32> to vector<4x4x8xf32>
    %273 = vector.broadcast %271 : vector<1x4x8xf32> to vector<4x4x8xf32>
    %274 = arith.subf %272, %273 : vector<4x4x8xf32>
    %275 = arith.mulf %264, %264 : vector<4x4x8xf32>
    %276 = arith.addf %251, %275 : vector<4x4x8xf32>
    %277 = arith.mulf %269, %269 : vector<4x4x8xf32>
    %278 = arith.addf %253, %277 : vector<4x4x8xf32>
    %279 = arith.mulf %274, %274 : vector<4x4x8xf32>
    %280 = arith.addf %255, %279 : vector<4x4x8xf32>
    %c11 = arith.constant 11 : index
    %c0_58 = arith.constant 0 : index
    %c0_59 = arith.constant 0 : index
    %281 = vector.load %arg1[%c11, %c0_58, %c0_59] : memref<32x4x8xf32, #tpu.memory_space<vmem>>, vector<1x4x8xf32>
    %282 = vector.shape_cast %281 : vector<1x4x8xf32> to vector<4x8xf32>
    %c11_60 = arith.constant 11 : index
    %c0_61 = arith.constant 0 : index
    %c0_62 = arith.constant 0 : index
    %283 = vector.load %arg2[%c11_60, %c0_61, %c0_62] : memref<32x4x8xf32, #tpu.memory_space<vmem>>, vector<1x4x8xf32>
    %284 = vector.shape_cast %283 : vector<1x4x8xf32> to vector<4x8xf32>
    %285 = vector.shape_cast %282 : vector<4x8xf32> to vector<4x1x8xf32>
    %286 = vector.shape_cast %282 : vector<4x8xf32> to vector<1x4x8xf32>
    %287 = vector.broadcast %285 : vector<4x1x8xf32> to vector<4x4x8xf32>
    %288 = vector.broadcast %286 : vector<1x4x8xf32> to vector<4x4x8xf32>
    %289 = arith.subf %287, %288 : vector<4x4x8xf32>
    %290 = vector.shape_cast %284 : vector<4x8xf32> to vector<4x1x8xf32>
    %291 = vector.shape_cast %284 : vector<4x8xf32> to vector<1x4x8xf32>
    %292 = vector.broadcast %290 : vector<4x1x8xf32> to vector<4x4x8xf32>
    %293 = vector.broadcast %291 : vector<1x4x8xf32> to vector<4x4x8xf32>
    %294 = arith.subf %292, %293 : vector<4x4x8xf32>
    %295 = vector.shape_cast %282 : vector<4x8xf32> to vector<4x1x8xf32>
    %296 = vector.shape_cast %284 : vector<4x8xf32> to vector<1x4x8xf32>
    %297 = vector.broadcast %295 : vector<4x1x8xf32> to vector<4x4x8xf32>
    %298 = vector.broadcast %296 : vector<1x4x8xf32> to vector<4x4x8xf32>
    %299 = arith.subf %297, %298 : vector<4x4x8xf32>
    %300 = arith.mulf %289, %289 : vector<4x4x8xf32>
    %301 = arith.addf %276, %300 : vector<4x4x8xf32>
    %302 = arith.mulf %294, %294 : vector<4x4x8xf32>
    %303 = arith.addf %278, %302 : vector<4x4x8xf32>
    %304 = arith.mulf %299, %299 : vector<4x4x8xf32>
    %305 = arith.addf %280, %304 : vector<4x4x8xf32>
    %c12 = arith.constant 12 : index
    %c0_63 = arith.constant 0 : index
    %c0_64 = arith.constant 0 : index
    %306 = vector.load %arg1[%c12, %c0_63, %c0_64] : memref<32x4x8xf32, #tpu.memory_space<vmem>>, vector<1x4x8xf32>
    %307 = vector.shape_cast %306 : vector<1x4x8xf32> to vector<4x8xf32>
    %c12_65 = arith.constant 12 : index
    %c0_66 = arith.constant 0 : index
    %c0_67 = arith.constant 0 : index
    %308 = vector.load %arg2[%c12_65, %c0_66, %c0_67] : memref<32x4x8xf32, #tpu.memory_space<vmem>>, vector<1x4x8xf32>
    %309 = vector.shape_cast %308 : vector<1x4x8xf32> to vector<4x8xf32>
    %310 = vector.shape_cast %307 : vector<4x8xf32> to vector<4x1x8xf32>
    %311 = vector.shape_cast %307 : vector<4x8xf32> to vector<1x4x8xf32>
    %312 = vector.broadcast %310 : vector<4x1x8xf32> to vector<4x4x8xf32>
    %313 = vector.broadcast %311 : vector<1x4x8xf32> to vector<4x4x8xf32>
    %314 = arith.subf %312, %313 : vector<4x4x8xf32>
    %315 = vector.shape_cast %309 : vector<4x8xf32> to vector<4x1x8xf32>
    %316 = vector.shape_cast %309 : vector<4x8xf32> to vector<1x4x8xf32>
    %317 = vector.broadcast %315 : vector<4x1x8xf32> to vector<4x4x8xf32>
    %318 = vector.broadcast %316 : vector<1x4x8xf32> to vector<4x4x8xf32>
    %319 = arith.subf %317, %318 : vector<4x4x8xf32>
    %320 = vector.shape_cast %307 : vector<4x8xf32> to vector<4x1x8xf32>
    %321 = vector.shape_cast %309 : vector<4x8xf32> to vector<1x4x8xf32>
    %322 = vector.broadcast %320 : vector<4x1x8xf32> to vector<4x4x8xf32>
    %323 = vector.broadcast %321 : vector<1x4x8xf32> to vector<4x4x8xf32>
    %324 = arith.subf %322, %323 : vector<4x4x8xf32>
    %325 = arith.mulf %314, %314 : vector<4x4x8xf32>
    %326 = arith.addf %301, %325 : vector<4x4x8xf32>
    %327 = arith.mulf %319, %319 : vector<4x4x8xf32>
    %328 = arith.addf %303, %327 : vector<4x4x8xf32>
    %329 = arith.mulf %324, %324 : vector<4x4x8xf32>
    %330 = arith.addf %305, %329 : vector<4x4x8xf32>
    %c13 = arith.constant 13 : index
    %c0_68 = arith.constant 0 : index
    %c0_69 = arith.constant 0 : index
    %331 = vector.load %arg1[%c13, %c0_68, %c0_69] : memref<32x4x8xf32, #tpu.memory_space<vmem>>, vector<1x4x8xf32>
    %332 = vector.shape_cast %331 : vector<1x4x8xf32> to vector<4x8xf32>
    %c13_70 = arith.constant 13 : index
    %c0_71 = arith.constant 0 : index
    %c0_72 = arith.constant 0 : index
    %333 = vector.load %arg2[%c13_70, %c0_71, %c0_72] : memref<32x4x8xf32, #tpu.memory_space<vmem>>, vector<1x4x8xf32>
    %334 = vector.shape_cast %333 : vector<1x4x8xf32> to vector<4x8xf32>
    %335 = vector.shape_cast %332 : vector<4x8xf32> to vector<4x1x8xf32>
    %336 = vector.shape_cast %332 : vector<4x8xf32> to vector<1x4x8xf32>
    %337 = vector.broadcast %335 : vector<4x1x8xf32> to vector<4x4x8xf32>
    %338 = vector.broadcast %336 : vector<1x4x8xf32> to vector<4x4x8xf32>
    %339 = arith.subf %337, %338 : vector<4x4x8xf32>
    %340 = vector.shape_cast %334 : vector<4x8xf32> to vector<4x1x8xf32>
    %341 = vector.shape_cast %334 : vector<4x8xf32> to vector<1x4x8xf32>
    %342 = vector.broadcast %340 : vector<4x1x8xf32> to vector<4x4x8xf32>
    %343 = vector.broadcast %341 : vector<1x4x8xf32> to vector<4x4x8xf32>
    %344 = arith.subf %342, %343 : vector<4x4x8xf32>
    %345 = vector.shape_cast %332 : vector<4x8xf32> to vector<4x1x8xf32>
    %346 = vector.shape_cast %334 : vector<4x8xf32> to vector<1x4x8xf32>
    %347 = vector.broadcast %345 : vector<4x1x8xf32> to vector<4x4x8xf32>
    %348 = vector.broadcast %346 : vector<1x4x8xf32> to vector<4x4x8xf32>
    %349 = arith.subf %347, %348 : vector<4x4x8xf32>
    %350 = arith.mulf %339, %339 : vector<4x4x8xf32>
    %351 = arith.addf %326, %350 : vector<4x4x8xf32>
    %352 = arith.mulf %344, %344 : vector<4x4x8xf32>
    %353 = arith.addf %328, %352 : vector<4x4x8xf32>
    %354 = arith.mulf %349, %349 : vector<4x4x8xf32>
    %355 = arith.addf %330, %354 : vector<4x4x8xf32>
    %c14 = arith.constant 14 : index
    %c0_73 = arith.constant 0 : index
    %c0_74 = arith.constant 0 : index
    %356 = vector.load %arg1[%c14, %c0_73, %c0_74] : memref<32x4x8xf32, #tpu.memory_space<vmem>>, vector<1x4x8xf32>
    %357 = vector.shape_cast %356 : vector<1x4x8xf32> to vector<4x8xf32>
    %c14_75 = arith.constant 14 : index
    %c0_76 = arith.constant 0 : index
    %c0_77 = arith.constant 0 : index
    %358 = vector.load %arg2[%c14_75, %c0_76, %c0_77] : memref<32x4x8xf32, #tpu.memory_space<vmem>>, vector<1x4x8xf32>
    %359 = vector.shape_cast %358 : vector<1x4x8xf32> to vector<4x8xf32>
    %360 = vector.shape_cast %357 : vector<4x8xf32> to vector<4x1x8xf32>
    %361 = vector.shape_cast %357 : vector<4x8xf32> to vector<1x4x8xf32>
    %362 = vector.broadcast %360 : vector<4x1x8xf32> to vector<4x4x8xf32>
    %363 = vector.broadcast %361 : vector<1x4x8xf32> to vector<4x4x8xf32>
    %364 = arith.subf %362, %363 : vector<4x4x8xf32>
    %365 = vector.shape_cast %359 : vector<4x8xf32> to vector<4x1x8xf32>
    %366 = vector.shape_cast %359 : vector<4x8xf32> to vector<1x4x8xf32>
    %367 = vector.broadcast %365 : vector<4x1x8xf32> to vector<4x4x8xf32>
    %368 = vector.broadcast %366 : vector<1x4x8xf32> to vector<4x4x8xf32>
    %369 = arith.subf %367, %368 : vector<4x4x8xf32>
    %370 = vector.shape_cast %357 : vector<4x8xf32> to vector<4x1x8xf32>
    %371 = vector.shape_cast %359 : vector<4x8xf32> to vector<1x4x8xf32>
    %372 = vector.broadcast %370 : vector<4x1x8xf32> to vector<4x4x8xf32>
    %373 = vector.broadcast %371 : vector<1x4x8xf32> to vector<4x4x8xf32>
    %374 = arith.subf %372, %373 : vector<4x4x8xf32>
    %375 = arith.mulf %364, %364 : vector<4x4x8xf32>
    %376 = arith.addf %351, %375 : vector<4x4x8xf32>
    %377 = arith.mulf %369, %369 : vector<4x4x8xf32>
    %378 = arith.addf %353, %377 : vector<4x4x8xf32>
    %379 = arith.mulf %374, %374 : vector<4x4x8xf32>
    %380 = arith.addf %355, %379 : vector<4x4x8xf32>
    %c15 = arith.constant 15 : index
    %c0_78 = arith.constant 0 : index
    %c0_79 = arith.constant 0 : index
    %381 = vector.load %arg1[%c15, %c0_78, %c0_79] : memref<32x4x8xf32, #tpu.memory_space<vmem>>, vector<1x4x8xf32>
    %382 = vector.shape_cast %381 : vector<1x4x8xf32> to vector<4x8xf32>
    %c15_80 = arith.constant 15 : index
    %c0_81 = arith.constant 0 : index
    %c0_82 = arith.constant 0 : index
    %383 = vector.load %arg2[%c15_80, %c0_81, %c0_82] : memref<32x4x8xf32, #tpu.memory_space<vmem>>, vector<1x4x8xf32>
    %384 = vector.shape_cast %383 : vector<1x4x8xf32> to vector<4x8xf32>
    %385 = vector.shape_cast %382 : vector<4x8xf32> to vector<4x1x8xf32>
    %386 = vector.shape_cast %382 : vector<4x8xf32> to vector<1x4x8xf32>
    %387 = vector.broadcast %385 : vector<4x1x8xf32> to vector<4x4x8xf32>
    %388 = vector.broadcast %386 : vector<1x4x8xf32> to vector<4x4x8xf32>
    %389 = arith.subf %387, %388 : vector<4x4x8xf32>
    %390 = vector.shape_cast %384 : vector<4x8xf32> to vector<4x1x8xf32>
    %391 = vector.shape_cast %384 : vector<4x8xf32> to vector<1x4x8xf32>
    %392 = vector.broadcast %390 : vector<4x1x8xf32> to vector<4x4x8xf32>
    %393 = vector.broadcast %391 : vector<1x4x8xf32> to vector<4x4x8xf32>
    %394 = arith.subf %392, %393 : vector<4x4x8xf32>
    %395 = vector.shape_cast %382 : vector<4x8xf32> to vector<4x1x8xf32>
    %396 = vector.shape_cast %384 : vector<4x8xf32> to vector<1x4x8xf32>
    %397 = vector.broadcast %395 : vector<4x1x8xf32> to vector<4x4x8xf32>
    %398 = vector.broadcast %396 : vector<1x4x8xf32> to vector<4x4x8xf32>
    %399 = arith.subf %397, %398 : vector<4x4x8xf32>
    %400 = arith.mulf %389, %389 : vector<4x4x8xf32>
    %401 = arith.addf %376, %400 : vector<4x4x8xf32>
    %402 = arith.mulf %394, %394 : vector<4x4x8xf32>
    %403 = arith.addf %378, %402 : vector<4x4x8xf32>
    %404 = arith.mulf %399, %399 : vector<4x4x8xf32>
    %405 = arith.addf %380, %404 : vector<4x4x8xf32>
    %c16 = arith.constant 16 : index
    %c0_83 = arith.constant 0 : index
    %c0_84 = arith.constant 0 : index
    %406 = vector.load %arg1[%c16, %c0_83, %c0_84] : memref<32x4x8xf32, #tpu.memory_space<vmem>>, vector<1x4x8xf32>
    %407 = vector.shape_cast %406 : vector<1x4x8xf32> to vector<4x8xf32>
    %c16_85 = arith.constant 16 : index
    %c0_86 = arith.constant 0 : index
    %c0_87 = arith.constant 0 : index
    %408 = vector.load %arg2[%c16_85, %c0_86, %c0_87] : memref<32x4x8xf32, #tpu.memory_space<vmem>>, vector<1x4x8xf32>
    %409 = vector.shape_cast %408 : vector<1x4x8xf32> to vector<4x8xf32>
    %410 = vector.shape_cast %407 : vector<4x8xf32> to vector<4x1x8xf32>
    %411 = vector.shape_cast %407 : vector<4x8xf32> to vector<1x4x8xf32>
    %412 = vector.broadcast %410 : vector<4x1x8xf32> to vector<4x4x8xf32>
    %413 = vector.broadcast %411 : vector<1x4x8xf32> to vector<4x4x8xf32>
    %414 = arith.subf %412, %413 : vector<4x4x8xf32>
    %415 = vector.shape_cast %409 : vector<4x8xf32> to vector<4x1x8xf32>
    %416 = vector.shape_cast %409 : vector<4x8xf32> to vector<1x4x8xf32>
    %417 = vector.broadcast %415 : vector<4x1x8xf32> to vector<4x4x8xf32>
    %418 = vector.broadcast %416 : vector<1x4x8xf32> to vector<4x4x8xf32>
    %419 = arith.subf %417, %418 : vector<4x4x8xf32>
    %420 = vector.shape_cast %407 : vector<4x8xf32> to vector<4x1x8xf32>
    %421 = vector.shape_cast %409 : vector<4x8xf32> to vector<1x4x8xf32>
    %422 = vector.broadcast %420 : vector<4x1x8xf32> to vector<4x4x8xf32>
    %423 = vector.broadcast %421 : vector<1x4x8xf32> to vector<4x4x8xf32>
    %424 = arith.subf %422, %423 : vector<4x4x8xf32>
    %425 = arith.mulf %414, %414 : vector<4x4x8xf32>
    %426 = arith.addf %401, %425 : vector<4x4x8xf32>
    %427 = arith.mulf %419, %419 : vector<4x4x8xf32>
    %428 = arith.addf %403, %427 : vector<4x4x8xf32>
    %429 = arith.mulf %424, %424 : vector<4x4x8xf32>
    %430 = arith.addf %405, %429 : vector<4x4x8xf32>
    %c17 = arith.constant 17 : index
    %c0_88 = arith.constant 0 : index
    %c0_89 = arith.constant 0 : index
    %431 = vector.load %arg1[%c17, %c0_88, %c0_89] : memref<32x4x8xf32, #tpu.memory_space<vmem>>, vector<1x4x8xf32>
    %432 = vector.shape_cast %431 : vector<1x4x8xf32> to vector<4x8xf32>
    %c17_90 = arith.constant 17 : index
    %c0_91 = arith.constant 0 : index
    %c0_92 = arith.constant 0 : index
    %433 = vector.load %arg2[%c17_90, %c0_91, %c0_92] : memref<32x4x8xf32, #tpu.memory_space<vmem>>, vector<1x4x8xf32>
    %434 = vector.shape_cast %433 : vector<1x4x8xf32> to vector<4x8xf32>
    %435 = vector.shape_cast %432 : vector<4x8xf32> to vector<4x1x8xf32>
    %436 = vector.shape_cast %432 : vector<4x8xf32> to vector<1x4x8xf32>
    %437 = vector.broadcast %435 : vector<4x1x8xf32> to vector<4x4x8xf32>
    %438 = vector.broadcast %436 : vector<1x4x8xf32> to vector<4x4x8xf32>
    %439 = arith.subf %437, %438 : vector<4x4x8xf32>
    %440 = vector.shape_cast %434 : vector<4x8xf32> to vector<4x1x8xf32>
    %441 = vector.shape_cast %434 : vector<4x8xf32> to vector<1x4x8xf32>
    %442 = vector.broadcast %440 : vector<4x1x8xf32> to vector<4x4x8xf32>
    %443 = vector.broadcast %441 : vector<1x4x8xf32> to vector<4x4x8xf32>
    %444 = arith.subf %442, %443 : vector<4x4x8xf32>
    %445 = vector.shape_cast %432 : vector<4x8xf32> to vector<4x1x8xf32>
    %446 = vector.shape_cast %434 : vector<4x8xf32> to vector<1x4x8xf32>
    %447 = vector.broadcast %445 : vector<4x1x8xf32> to vector<4x4x8xf32>
    %448 = vector.broadcast %446 : vector<1x4x8xf32> to vector<4x4x8xf32>
    %449 = arith.subf %447, %448 : vector<4x4x8xf32>
    %450 = arith.mulf %439, %439 : vector<4x4x8xf32>
    %451 = arith.addf %426, %450 : vector<4x4x8xf32>
    %452 = arith.mulf %444, %444 : vector<4x4x8xf32>
    %453 = arith.addf %428, %452 : vector<4x4x8xf32>
    %454 = arith.mulf %449, %449 : vector<4x4x8xf32>
    %455 = arith.addf %430, %454 : vector<4x4x8xf32>
    %c18 = arith.constant 18 : index
    %c0_93 = arith.constant 0 : index
    %c0_94 = arith.constant 0 : index
    %456 = vector.load %arg1[%c18, %c0_93, %c0_94] : memref<32x4x8xf32, #tpu.memory_space<vmem>>, vector<1x4x8xf32>
    %457 = vector.shape_cast %456 : vector<1x4x8xf32> to vector<4x8xf32>
    %c18_95 = arith.constant 18 : index
    %c0_96 = arith.constant 0 : index
    %c0_97 = arith.constant 0 : index
    %458 = vector.load %arg2[%c18_95, %c0_96, %c0_97] : memref<32x4x8xf32, #tpu.memory_space<vmem>>, vector<1x4x8xf32>
    %459 = vector.shape_cast %458 : vector<1x4x8xf32> to vector<4x8xf32>
    %460 = vector.shape_cast %457 : vector<4x8xf32> to vector<4x1x8xf32>
    %461 = vector.shape_cast %457 : vector<4x8xf32> to vector<1x4x8xf32>
    %462 = vector.broadcast %460 : vector<4x1x8xf32> to vector<4x4x8xf32>
    %463 = vector.broadcast %461 : vector<1x4x8xf32> to vector<4x4x8xf32>
    %464 = arith.subf %462, %463 : vector<4x4x8xf32>
    %465 = vector.shape_cast %459 : vector<4x8xf32> to vector<4x1x8xf32>
    %466 = vector.shape_cast %459 : vector<4x8xf32> to vector<1x4x8xf32>
    %467 = vector.broadcast %465 : vector<4x1x8xf32> to vector<4x4x8xf32>
    %468 = vector.broadcast %466 : vector<1x4x8xf32> to vector<4x4x8xf32>
    %469 = arith.subf %467, %468 : vector<4x4x8xf32>
    %470 = vector.shape_cast %457 : vector<4x8xf32> to vector<4x1x8xf32>
    %471 = vector.shape_cast %459 : vector<4x8xf32> to vector<1x4x8xf32>
    %472 = vector.broadcast %470 : vector<4x1x8xf32> to vector<4x4x8xf32>
    %473 = vector.broadcast %471 : vector<1x4x8xf32> to vector<4x4x8xf32>
    %474 = arith.subf %472, %473 : vector<4x4x8xf32>
    %475 = arith.mulf %464, %464 : vector<4x4x8xf32>
    %476 = arith.addf %451, %475 : vector<4x4x8xf32>
    %477 = arith.mulf %469, %469 : vector<4x4x8xf32>
    %478 = arith.addf %453, %477 : vector<4x4x8xf32>
    %479 = arith.mulf %474, %474 : vector<4x4x8xf32>
    %480 = arith.addf %455, %479 : vector<4x4x8xf32>
    %c19 = arith.constant 19 : index
    %c0_98 = arith.constant 0 : index
    %c0_99 = arith.constant 0 : index
    %481 = vector.load %arg1[%c19, %c0_98, %c0_99] : memref<32x4x8xf32, #tpu.memory_space<vmem>>, vector<1x4x8xf32>
    %482 = vector.shape_cast %481 : vector<1x4x8xf32> to vector<4x8xf32>
    %c19_100 = arith.constant 19 : index
    %c0_101 = arith.constant 0 : index
    %c0_102 = arith.constant 0 : index
    %483 = vector.load %arg2[%c19_100, %c0_101, %c0_102] : memref<32x4x8xf32, #tpu.memory_space<vmem>>, vector<1x4x8xf32>
    %484 = vector.shape_cast %483 : vector<1x4x8xf32> to vector<4x8xf32>
    %485 = vector.shape_cast %482 : vector<4x8xf32> to vector<4x1x8xf32>
    %486 = vector.shape_cast %482 : vector<4x8xf32> to vector<1x4x8xf32>
    %487 = vector.broadcast %485 : vector<4x1x8xf32> to vector<4x4x8xf32>
    %488 = vector.broadcast %486 : vector<1x4x8xf32> to vector<4x4x8xf32>
    %489 = arith.subf %487, %488 : vector<4x4x8xf32>
    %490 = vector.shape_cast %484 : vector<4x8xf32> to vector<4x1x8xf32>
    %491 = vector.shape_cast %484 : vector<4x8xf32> to vector<1x4x8xf32>
    %492 = vector.broadcast %490 : vector<4x1x8xf32> to vector<4x4x8xf32>
    %493 = vector.broadcast %491 : vector<1x4x8xf32> to vector<4x4x8xf32>
    %494 = arith.subf %492, %493 : vector<4x4x8xf32>
    %495 = vector.shape_cast %482 : vector<4x8xf32> to vector<4x1x8xf32>
    %496 = vector.shape_cast %484 : vector<4x8xf32> to vector<1x4x8xf32>
    %497 = vector.broadcast %495 : vector<4x1x8xf32> to vector<4x4x8xf32>
    %498 = vector.broadcast %496 : vector<1x4x8xf32> to vector<4x4x8xf32>
    %499 = arith.subf %497, %498 : vector<4x4x8xf32>
    %500 = arith.mulf %489, %489 : vector<4x4x8xf32>
    %501 = arith.addf %476, %500 : vector<4x4x8xf32>
    %502 = arith.mulf %494, %494 : vector<4x4x8xf32>
    %503 = arith.addf %478, %502 : vector<4x4x8xf32>
    %504 = arith.mulf %499, %499 : vector<4x4x8xf32>
    %505 = arith.addf %480, %504 : vector<4x4x8xf32>
    %c20 = arith.constant 20 : index
    %c0_103 = arith.constant 0 : index
    %c0_104 = arith.constant 0 : index
    %506 = vector.load %arg1[%c20, %c0_103, %c0_104] : memref<32x4x8xf32, #tpu.memory_space<vmem>>, vector<1x4x8xf32>
    %507 = vector.shape_cast %506 : vector<1x4x8xf32> to vector<4x8xf32>
    %c20_105 = arith.constant 20 : index
    %c0_106 = arith.constant 0 : index
    %c0_107 = arith.constant 0 : index
    %508 = vector.load %arg2[%c20_105, %c0_106, %c0_107] : memref<32x4x8xf32, #tpu.memory_space<vmem>>, vector<1x4x8xf32>
    %509 = vector.shape_cast %508 : vector<1x4x8xf32> to vector<4x8xf32>
    %510 = vector.shape_cast %507 : vector<4x8xf32> to vector<4x1x8xf32>
    %511 = vector.shape_cast %507 : vector<4x8xf32> to vector<1x4x8xf32>
    %512 = vector.broadcast %510 : vector<4x1x8xf32> to vector<4x4x8xf32>
    %513 = vector.broadcast %511 : vector<1x4x8xf32> to vector<4x4x8xf32>
    %514 = arith.subf %512, %513 : vector<4x4x8xf32>
    %515 = vector.shape_cast %509 : vector<4x8xf32> to vector<4x1x8xf32>
    %516 = vector.shape_cast %509 : vector<4x8xf32> to vector<1x4x8xf32>
    %517 = vector.broadcast %515 : vector<4x1x8xf32> to vector<4x4x8xf32>
    %518 = vector.broadcast %516 : vector<1x4x8xf32> to vector<4x4x8xf32>
    %519 = arith.subf %517, %518 : vector<4x4x8xf32>
    %520 = vector.shape_cast %507 : vector<4x8xf32> to vector<4x1x8xf32>
    %521 = vector.shape_cast %509 : vector<4x8xf32> to vector<1x4x8xf32>
    %522 = vector.broadcast %520 : vector<4x1x8xf32> to vector<4x4x8xf32>
    %523 = vector.broadcast %521 : vector<1x4x8xf32> to vector<4x4x8xf32>
    %524 = arith.subf %522, %523 : vector<4x4x8xf32>
    %525 = arith.mulf %514, %514 : vector<4x4x8xf32>
    %526 = arith.addf %501, %525 : vector<4x4x8xf32>
    %527 = arith.mulf %519, %519 : vector<4x4x8xf32>
    %528 = arith.addf %503, %527 : vector<4x4x8xf32>
    %529 = arith.mulf %524, %524 : vector<4x4x8xf32>
    %530 = arith.addf %505, %529 : vector<4x4x8xf32>
    %c21 = arith.constant 21 : index
    %c0_108 = arith.constant 0 : index
    %c0_109 = arith.constant 0 : index
    %531 = vector.load %arg1[%c21, %c0_108, %c0_109] : memref<32x4x8xf32, #tpu.memory_space<vmem>>, vector<1x4x8xf32>
    %532 = vector.shape_cast %531 : vector<1x4x8xf32> to vector<4x8xf32>
    %c21_110 = arith.constant 21 : index
    %c0_111 = arith.constant 0 : index
    %c0_112 = arith.constant 0 : index
    %533 = vector.load %arg2[%c21_110, %c0_111, %c0_112] : memref<32x4x8xf32, #tpu.memory_space<vmem>>, vector<1x4x8xf32>
    %534 = vector.shape_cast %533 : vector<1x4x8xf32> to vector<4x8xf32>
    %535 = vector.shape_cast %532 : vector<4x8xf32> to vector<4x1x8xf32>
    %536 = vector.shape_cast %532 : vector<4x8xf32> to vector<1x4x8xf32>
    %537 = vector.broadcast %535 : vector<4x1x8xf32> to vector<4x4x8xf32>
    %538 = vector.broadcast %536 : vector<1x4x8xf32> to vector<4x4x8xf32>
    %539 = arith.subf %537, %538 : vector<4x4x8xf32>
    %540 = vector.shape_cast %534 : vector<4x8xf32> to vector<4x1x8xf32>
    %541 = vector.shape_cast %534 : vector<4x8xf32> to vector<1x4x8xf32>
    %542 = vector.broadcast %540 : vector<4x1x8xf32> to vector<4x4x8xf32>
    %543 = vector.broadcast %541 : vector<1x4x8xf32> to vector<4x4x8xf32>
    %544 = arith.subf %542, %543 : vector<4x4x8xf32>
    %545 = vector.shape_cast %532 : vector<4x8xf32> to vector<4x1x8xf32>
    %546 = vector.shape_cast %534 : vector<4x8xf32> to vector<1x4x8xf32>
    %547 = vector.broadcast %545 : vector<4x1x8xf32> to vector<4x4x8xf32>
    %548 = vector.broadcast %546 : vector<1x4x8xf32> to vector<4x4x8xf32>
    %549 = arith.subf %547, %548 : vector<4x4x8xf32>
    %550 = arith.mulf %539, %539 : vector<4x4x8xf32>
    %551 = arith.addf %526, %550 : vector<4x4x8xf32>
    %552 = arith.mulf %544, %544 : vector<4x4x8xf32>
    %553 = arith.addf %528, %552 : vector<4x4x8xf32>
    %554 = arith.mulf %549, %549 : vector<4x4x8xf32>
    %555 = arith.addf %530, %554 : vector<4x4x8xf32>
    %c22 = arith.constant 22 : index
    %c0_113 = arith.constant 0 : index
    %c0_114 = arith.constant 0 : index
    %556 = vector.load %arg1[%c22, %c0_113, %c0_114] : memref<32x4x8xf32, #tpu.memory_space<vmem>>, vector<1x4x8xf32>
    %557 = vector.shape_cast %556 : vector<1x4x8xf32> to vector<4x8xf32>
    %c22_115 = arith.constant 22 : index
    %c0_116 = arith.constant 0 : index
    %c0_117 = arith.constant 0 : index
    %558 = vector.load %arg2[%c22_115, %c0_116, %c0_117] : memref<32x4x8xf32, #tpu.memory_space<vmem>>, vector<1x4x8xf32>
    %559 = vector.shape_cast %558 : vector<1x4x8xf32> to vector<4x8xf32>
    %560 = vector.shape_cast %557 : vector<4x8xf32> to vector<4x1x8xf32>
    %561 = vector.shape_cast %557 : vector<4x8xf32> to vector<1x4x8xf32>
    %562 = vector.broadcast %560 : vector<4x1x8xf32> to vector<4x4x8xf32>
    %563 = vector.broadcast %561 : vector<1x4x8xf32> to vector<4x4x8xf32>
    %564 = arith.subf %562, %563 : vector<4x4x8xf32>
    %565 = vector.shape_cast %559 : vector<4x8xf32> to vector<4x1x8xf32>
    %566 = vector.shape_cast %559 : vector<4x8xf32> to vector<1x4x8xf32>
    %567 = vector.broadcast %565 : vector<4x1x8xf32> to vector<4x4x8xf32>
    %568 = vector.broadcast %566 : vector<1x4x8xf32> to vector<4x4x8xf32>
    %569 = arith.subf %567, %568 : vector<4x4x8xf32>
    %570 = vector.shape_cast %557 : vector<4x8xf32> to vector<4x1x8xf32>
    %571 = vector.shape_cast %559 : vector<4x8xf32> to vector<1x4x8xf32>
    %572 = vector.broadcast %570 : vector<4x1x8xf32> to vector<4x4x8xf32>
    %573 = vector.broadcast %571 : vector<1x4x8xf32> to vector<4x4x8xf32>
    %574 = arith.subf %572, %573 : vector<4x4x8xf32>
    %575 = arith.mulf %564, %564 : vector<4x4x8xf32>
    %576 = arith.addf %551, %575 : vector<4x4x8xf32>
    %577 = arith.mulf %569, %569 : vector<4x4x8xf32>
    %578 = arith.addf %553, %577 : vector<4x4x8xf32>
    %579 = arith.mulf %574, %574 : vector<4x4x8xf32>
    %580 = arith.addf %555, %579 : vector<4x4x8xf32>
    %c23 = arith.constant 23 : index
    %c0_118 = arith.constant 0 : index
    %c0_119 = arith.constant 0 : index
    %581 = vector.load %arg1[%c23, %c0_118, %c0_119] : memref<32x4x8xf32, #tpu.memory_space<vmem>>, vector<1x4x8xf32>
    %582 = vector.shape_cast %581 : vector<1x4x8xf32> to vector<4x8xf32>
    %c23_120 = arith.constant 23 : index
    %c0_121 = arith.constant 0 : index
    %c0_122 = arith.constant 0 : index
    %583 = vector.load %arg2[%c23_120, %c0_121, %c0_122] : memref<32x4x8xf32, #tpu.memory_space<vmem>>, vector<1x4x8xf32>
    %584 = vector.shape_cast %583 : vector<1x4x8xf32> to vector<4x8xf32>
    %585 = vector.shape_cast %582 : vector<4x8xf32> to vector<4x1x8xf32>
    %586 = vector.shape_cast %582 : vector<4x8xf32> to vector<1x4x8xf32>
    %587 = vector.broadcast %585 : vector<4x1x8xf32> to vector<4x4x8xf32>
    %588 = vector.broadcast %586 : vector<1x4x8xf32> to vector<4x4x8xf32>
    %589 = arith.subf %587, %588 : vector<4x4x8xf32>
    %590 = vector.shape_cast %584 : vector<4x8xf32> to vector<4x1x8xf32>
    %591 = vector.shape_cast %584 : vector<4x8xf32> to vector<1x4x8xf32>
    %592 = vector.broadcast %590 : vector<4x1x8xf32> to vector<4x4x8xf32>
    %593 = vector.broadcast %591 : vector<1x4x8xf32> to vector<4x4x8xf32>
    %594 = arith.subf %592, %593 : vector<4x4x8xf32>
    %595 = vector.shape_cast %582 : vector<4x8xf32> to vector<4x1x8xf32>
    %596 = vector.shape_cast %584 : vector<4x8xf32> to vector<1x4x8xf32>
    %597 = vector.broadcast %595 : vector<4x1x8xf32> to vector<4x4x8xf32>
    %598 = vector.broadcast %596 : vector<1x4x8xf32> to vector<4x4x8xf32>
    %599 = arith.subf %597, %598 : vector<4x4x8xf32>
    %600 = arith.mulf %589, %589 : vector<4x4x8xf32>
    %601 = arith.addf %576, %600 : vector<4x4x8xf32>
    %602 = arith.mulf %594, %594 : vector<4x4x8xf32>
    %603 = arith.addf %578, %602 : vector<4x4x8xf32>
    %604 = arith.mulf %599, %599 : vector<4x4x8xf32>
    %605 = arith.addf %580, %604 : vector<4x4x8xf32>
    %c24 = arith.constant 24 : index
    %c0_123 = arith.constant 0 : index
    %c0_124 = arith.constant 0 : index
    %606 = vector.load %arg1[%c24, %c0_123, %c0_124] : memref<32x4x8xf32, #tpu.memory_space<vmem>>, vector<1x4x8xf32>
    %607 = vector.shape_cast %606 : vector<1x4x8xf32> to vector<4x8xf32>
    %c24_125 = arith.constant 24 : index
    %c0_126 = arith.constant 0 : index
    %c0_127 = arith.constant 0 : index
    %608 = vector.load %arg2[%c24_125, %c0_126, %c0_127] : memref<32x4x8xf32, #tpu.memory_space<vmem>>, vector<1x4x8xf32>
    %609 = vector.shape_cast %608 : vector<1x4x8xf32> to vector<4x8xf32>
    %610 = vector.shape_cast %607 : vector<4x8xf32> to vector<4x1x8xf32>
    %611 = vector.shape_cast %607 : vector<4x8xf32> to vector<1x4x8xf32>
    %612 = vector.broadcast %610 : vector<4x1x8xf32> to vector<4x4x8xf32>
    %613 = vector.broadcast %611 : vector<1x4x8xf32> to vector<4x4x8xf32>
    %614 = arith.subf %612, %613 : vector<4x4x8xf32>
    %615 = vector.shape_cast %609 : vector<4x8xf32> to vector<4x1x8xf32>
    %616 = vector.shape_cast %609 : vector<4x8xf32> to vector<1x4x8xf32>
    %617 = vector.broadcast %615 : vector<4x1x8xf32> to vector<4x4x8xf32>
    %618 = vector.broadcast %616 : vector<1x4x8xf32> to vector<4x4x8xf32>
    %619 = arith.subf %617, %618 : vector<4x4x8xf32>
    %620 = vector.shape_cast %607 : vector<4x8xf32> to vector<4x1x8xf32>
    %621 = vector.shape_cast %609 : vector<4x8xf32> to vector<1x4x8xf32>
    %622 = vector.broadcast %620 : vector<4x1x8xf32> to vector<4x4x8xf32>
    %623 = vector.broadcast %621 : vector<1x4x8xf32> to vector<4x4x8xf32>
    %624 = arith.subf %622, %623 : vector<4x4x8xf32>
    %625 = arith.mulf %614, %614 : vector<4x4x8xf32>
    %626 = arith.addf %601, %625 : vector<4x4x8xf32>
    %627 = arith.mulf %619, %619 : vector<4x4x8xf32>
    %628 = arith.addf %603, %627 : vector<4x4x8xf32>
    %629 = arith.mulf %624, %624 : vector<4x4x8xf32>
    %630 = arith.addf %605, %629 : vector<4x4x8xf32>
    %c25 = arith.constant 25 : index
    %c0_128 = arith.constant 0 : index
    %c0_129 = arith.constant 0 : index
    %631 = vector.load %arg1[%c25, %c0_128, %c0_129] : memref<32x4x8xf32, #tpu.memory_space<vmem>>, vector<1x4x8xf32>
    %632 = vector.shape_cast %631 : vector<1x4x8xf32> to vector<4x8xf32>
    %c25_130 = arith.constant 25 : index
    %c0_131 = arith.constant 0 : index
    %c0_132 = arith.constant 0 : index
    %633 = vector.load %arg2[%c25_130, %c0_131, %c0_132] : memref<32x4x8xf32, #tpu.memory_space<vmem>>, vector<1x4x8xf32>
    %634 = vector.shape_cast %633 : vector<1x4x8xf32> to vector<4x8xf32>
    %635 = vector.shape_cast %632 : vector<4x8xf32> to vector<4x1x8xf32>
    %636 = vector.shape_cast %632 : vector<4x8xf32> to vector<1x4x8xf32>
    %637 = vector.broadcast %635 : vector<4x1x8xf32> to vector<4x4x8xf32>
    %638 = vector.broadcast %636 : vector<1x4x8xf32> to vector<4x4x8xf32>
    %639 = arith.subf %637, %638 : vector<4x4x8xf32>
    %640 = vector.shape_cast %634 : vector<4x8xf32> to vector<4x1x8xf32>
    %641 = vector.shape_cast %634 : vector<4x8xf32> to vector<1x4x8xf32>
    %642 = vector.broadcast %640 : vector<4x1x8xf32> to vector<4x4x8xf32>
    %643 = vector.broadcast %641 : vector<1x4x8xf32> to vector<4x4x8xf32>
    %644 = arith.subf %642, %643 : vector<4x4x8xf32>
    %645 = vector.shape_cast %632 : vector<4x8xf32> to vector<4x1x8xf32>
    %646 = vector.shape_cast %634 : vector<4x8xf32> to vector<1x4x8xf32>
    %647 = vector.broadcast %645 : vector<4x1x8xf32> to vector<4x4x8xf32>
    %648 = vector.broadcast %646 : vector<1x4x8xf32> to vector<4x4x8xf32>
    %649 = arith.subf %647, %648 : vector<4x4x8xf32>
    %650 = arith.mulf %639, %639 : vector<4x4x8xf32>
    %651 = arith.addf %626, %650 : vector<4x4x8xf32>
    %652 = arith.mulf %644, %644 : vector<4x4x8xf32>
    %653 = arith.addf %628, %652 : vector<4x4x8xf32>
    %654 = arith.mulf %649, %649 : vector<4x4x8xf32>
    %655 = arith.addf %630, %654 : vector<4x4x8xf32>
    %c26 = arith.constant 26 : index
    %c0_133 = arith.constant 0 : index
    %c0_134 = arith.constant 0 : index
    %656 = vector.load %arg1[%c26, %c0_133, %c0_134] : memref<32x4x8xf32, #tpu.memory_space<vmem>>, vector<1x4x8xf32>
    %657 = vector.shape_cast %656 : vector<1x4x8xf32> to vector<4x8xf32>
    %c26_135 = arith.constant 26 : index
    %c0_136 = arith.constant 0 : index
    %c0_137 = arith.constant 0 : index
    %658 = vector.load %arg2[%c26_135, %c0_136, %c0_137] : memref<32x4x8xf32, #tpu.memory_space<vmem>>, vector<1x4x8xf32>
    %659 = vector.shape_cast %658 : vector<1x4x8xf32> to vector<4x8xf32>
    %660 = vector.shape_cast %657 : vector<4x8xf32> to vector<4x1x8xf32>
    %661 = vector.shape_cast %657 : vector<4x8xf32> to vector<1x4x8xf32>
    %662 = vector.broadcast %660 : vector<4x1x8xf32> to vector<4x4x8xf32>
    %663 = vector.broadcast %661 : vector<1x4x8xf32> to vector<4x4x8xf32>
    %664 = arith.subf %662, %663 : vector<4x4x8xf32>
    %665 = vector.shape_cast %659 : vector<4x8xf32> to vector<4x1x8xf32>
    %666 = vector.shape_cast %659 : vector<4x8xf32> to vector<1x4x8xf32>
    %667 = vector.broadcast %665 : vector<4x1x8xf32> to vector<4x4x8xf32>
    %668 = vector.broadcast %666 : vector<1x4x8xf32> to vector<4x4x8xf32>
    %669 = arith.subf %667, %668 : vector<4x4x8xf32>
    %670 = vector.shape_cast %657 : vector<4x8xf32> to vector<4x1x8xf32>
    %671 = vector.shape_cast %659 : vector<4x8xf32> to vector<1x4x8xf32>
    %672 = vector.broadcast %670 : vector<4x1x8xf32> to vector<4x4x8xf32>
    %673 = vector.broadcast %671 : vector<1x4x8xf32> to vector<4x4x8xf32>
    %674 = arith.subf %672, %673 : vector<4x4x8xf32>
    %675 = arith.mulf %664, %664 : vector<4x4x8xf32>
    %676 = arith.addf %651, %675 : vector<4x4x8xf32>
    %677 = arith.mulf %669, %669 : vector<4x4x8xf32>
    %678 = arith.addf %653, %677 : vector<4x4x8xf32>
    %679 = arith.mulf %674, %674 : vector<4x4x8xf32>
    %680 = arith.addf %655, %679 : vector<4x4x8xf32>
    %c27 = arith.constant 27 : index
    %c0_138 = arith.constant 0 : index
    %c0_139 = arith.constant 0 : index
    %681 = vector.load %arg1[%c27, %c0_138, %c0_139] : memref<32x4x8xf32, #tpu.memory_space<vmem>>, vector<1x4x8xf32>
    %682 = vector.shape_cast %681 : vector<1x4x8xf32> to vector<4x8xf32>
    %c27_140 = arith.constant 27 : index
    %c0_141 = arith.constant 0 : index
    %c0_142 = arith.constant 0 : index
    %683 = vector.load %arg2[%c27_140, %c0_141, %c0_142] : memref<32x4x8xf32, #tpu.memory_space<vmem>>, vector<1x4x8xf32>
    %684 = vector.shape_cast %683 : vector<1x4x8xf32> to vector<4x8xf32>
    %685 = vector.shape_cast %682 : vector<4x8xf32> to vector<4x1x8xf32>
    %686 = vector.shape_cast %682 : vector<4x8xf32> to vector<1x4x8xf32>
    %687 = vector.broadcast %685 : vector<4x1x8xf32> to vector<4x4x8xf32>
    %688 = vector.broadcast %686 : vector<1x4x8xf32> to vector<4x4x8xf32>
    %689 = arith.subf %687, %688 : vector<4x4x8xf32>
    %690 = vector.shape_cast %684 : vector<4x8xf32> to vector<4x1x8xf32>
    %691 = vector.shape_cast %684 : vector<4x8xf32> to vector<1x4x8xf32>
    %692 = vector.broadcast %690 : vector<4x1x8xf32> to vector<4x4x8xf32>
    %693 = vector.broadcast %691 : vector<1x4x8xf32> to vector<4x4x8xf32>
    %694 = arith.subf %692, %693 : vector<4x4x8xf32>
    %695 = vector.shape_cast %682 : vector<4x8xf32> to vector<4x1x8xf32>
    %696 = vector.shape_cast %684 : vector<4x8xf32> to vector<1x4x8xf32>
    %697 = vector.broadcast %695 : vector<4x1x8xf32> to vector<4x4x8xf32>
    %698 = vector.broadcast %696 : vector<1x4x8xf32> to vector<4x4x8xf32>
    %699 = arith.subf %697, %698 : vector<4x4x8xf32>
    %700 = arith.mulf %689, %689 : vector<4x4x8xf32>
    %701 = arith.addf %676, %700 : vector<4x4x8xf32>
    %702 = arith.mulf %694, %694 : vector<4x4x8xf32>
    %703 = arith.addf %678, %702 : vector<4x4x8xf32>
    %704 = arith.mulf %699, %699 : vector<4x4x8xf32>
    %705 = arith.addf %680, %704 : vector<4x4x8xf32>
    %c28 = arith.constant 28 : index
    %c0_143 = arith.constant 0 : index
    %c0_144 = arith.constant 0 : index
    %706 = vector.load %arg1[%c28, %c0_143, %c0_144] : memref<32x4x8xf32, #tpu.memory_space<vmem>>, vector<1x4x8xf32>
    %707 = vector.shape_cast %706 : vector<1x4x8xf32> to vector<4x8xf32>
    %c28_145 = arith.constant 28 : index
    %c0_146 = arith.constant 0 : index
    %c0_147 = arith.constant 0 : index
    %708 = vector.load %arg2[%c28_145, %c0_146, %c0_147] : memref<32x4x8xf32, #tpu.memory_space<vmem>>, vector<1x4x8xf32>
    %709 = vector.shape_cast %708 : vector<1x4x8xf32> to vector<4x8xf32>
    %710 = vector.shape_cast %707 : vector<4x8xf32> to vector<4x1x8xf32>
    %711 = vector.shape_cast %707 : vector<4x8xf32> to vector<1x4x8xf32>
    %712 = vector.broadcast %710 : vector<4x1x8xf32> to vector<4x4x8xf32>
    %713 = vector.broadcast %711 : vector<1x4x8xf32> to vector<4x4x8xf32>
    %714 = arith.subf %712, %713 : vector<4x4x8xf32>
    %715 = vector.shape_cast %709 : vector<4x8xf32> to vector<4x1x8xf32>
    %716 = vector.shape_cast %709 : vector<4x8xf32> to vector<1x4x8xf32>
    %717 = vector.broadcast %715 : vector<4x1x8xf32> to vector<4x4x8xf32>
    %718 = vector.broadcast %716 : vector<1x4x8xf32> to vector<4x4x8xf32>
    %719 = arith.subf %717, %718 : vector<4x4x8xf32>
    %720 = vector.shape_cast %707 : vector<4x8xf32> to vector<4x1x8xf32>
    %721 = vector.shape_cast %709 : vector<4x8xf32> to vector<1x4x8xf32>
    %722 = vector.broadcast %720 : vector<4x1x8xf32> to vector<4x4x8xf32>
    %723 = vector.broadcast %721 : vector<1x4x8xf32> to vector<4x4x8xf32>
    %724 = arith.subf %722, %723 : vector<4x4x8xf32>
    %725 = arith.mulf %714, %714 : vector<4x4x8xf32>
    %726 = arith.addf %701, %725 : vector<4x4x8xf32>
    %727 = arith.mulf %719, %719 : vector<4x4x8xf32>
    %728 = arith.addf %703, %727 : vector<4x4x8xf32>
    %729 = arith.mulf %724, %724 : vector<4x4x8xf32>
    %730 = arith.addf %705, %729 : vector<4x4x8xf32>
    %c29 = arith.constant 29 : index
    %c0_148 = arith.constant 0 : index
    %c0_149 = arith.constant 0 : index
    %731 = vector.load %arg1[%c29, %c0_148, %c0_149] : memref<32x4x8xf32, #tpu.memory_space<vmem>>, vector<1x4x8xf32>
    %732 = vector.shape_cast %731 : vector<1x4x8xf32> to vector<4x8xf32>
    %c29_150 = arith.constant 29 : index
    %c0_151 = arith.constant 0 : index
    %c0_152 = arith.constant 0 : index
    %733 = vector.load %arg2[%c29_150, %c0_151, %c0_152] : memref<32x4x8xf32, #tpu.memory_space<vmem>>, vector<1x4x8xf32>
    %734 = vector.shape_cast %733 : vector<1x4x8xf32> to vector<4x8xf32>
    %735 = vector.shape_cast %732 : vector<4x8xf32> to vector<4x1x8xf32>
    %736 = vector.shape_cast %732 : vector<4x8xf32> to vector<1x4x8xf32>
    %737 = vector.broadcast %735 : vector<4x1x8xf32> to vector<4x4x8xf32>
    %738 = vector.broadcast %736 : vector<1x4x8xf32> to vector<4x4x8xf32>
    %739 = arith.subf %737, %738 : vector<4x4x8xf32>
    %740 = vector.shape_cast %734 : vector<4x8xf32> to vector<4x1x8xf32>
    %741 = vector.shape_cast %734 : vector<4x8xf32> to vector<1x4x8xf32>
    %742 = vector.broadcast %740 : vector<4x1x8xf32> to vector<4x4x8xf32>
    %743 = vector.broadcast %741 : vector<1x4x8xf32> to vector<4x4x8xf32>
    %744 = arith.subf %742, %743 : vector<4x4x8xf32>
    %745 = vector.shape_cast %732 : vector<4x8xf32> to vector<4x1x8xf32>
    %746 = vector.shape_cast %734 : vector<4x8xf32> to vector<1x4x8xf32>
    %747 = vector.broadcast %745 : vector<4x1x8xf32> to vector<4x4x8xf32>
    %748 = vector.broadcast %746 : vector<1x4x8xf32> to vector<4x4x8xf32>
    %749 = arith.subf %747, %748 : vector<4x4x8xf32>
    %750 = arith.mulf %739, %739 : vector<4x4x8xf32>
    %751 = arith.addf %726, %750 : vector<4x4x8xf32>
    %752 = arith.mulf %744, %744 : vector<4x4x8xf32>
    %753 = arith.addf %728, %752 : vector<4x4x8xf32>
    %754 = arith.mulf %749, %749 : vector<4x4x8xf32>
    %755 = arith.addf %730, %754 : vector<4x4x8xf32>
    %c30 = arith.constant 30 : index
    %c0_153 = arith.constant 0 : index
    %c0_154 = arith.constant 0 : index
    %756 = vector.load %arg1[%c30, %c0_153, %c0_154] : memref<32x4x8xf32, #tpu.memory_space<vmem>>, vector<1x4x8xf32>
    %757 = vector.shape_cast %756 : vector<1x4x8xf32> to vector<4x8xf32>
    %c30_155 = arith.constant 30 : index
    %c0_156 = arith.constant 0 : index
    %c0_157 = arith.constant 0 : index
    %758 = vector.load %arg2[%c30_155, %c0_156, %c0_157] : memref<32x4x8xf32, #tpu.memory_space<vmem>>, vector<1x4x8xf32>
    %759 = vector.shape_cast %758 : vector<1x4x8xf32> to vector<4x8xf32>
    %760 = vector.shape_cast %757 : vector<4x8xf32> to vector<4x1x8xf32>
    %761 = vector.shape_cast %757 : vector<4x8xf32> to vector<1x4x8xf32>
    %762 = vector.broadcast %760 : vector<4x1x8xf32> to vector<4x4x8xf32>
    %763 = vector.broadcast %761 : vector<1x4x8xf32> to vector<4x4x8xf32>
    %764 = arith.subf %762, %763 : vector<4x4x8xf32>
    %765 = vector.shape_cast %759 : vector<4x8xf32> to vector<4x1x8xf32>
    %766 = vector.shape_cast %759 : vector<4x8xf32> to vector<1x4x8xf32>
    %767 = vector.broadcast %765 : vector<4x1x8xf32> to vector<4x4x8xf32>
    %768 = vector.broadcast %766 : vector<1x4x8xf32> to vector<4x4x8xf32>
    %769 = arith.subf %767, %768 : vector<4x4x8xf32>
    %770 = vector.shape_cast %757 : vector<4x8xf32> to vector<4x1x8xf32>
    %771 = vector.shape_cast %759 : vector<4x8xf32> to vector<1x4x8xf32>
    %772 = vector.broadcast %770 : vector<4x1x8xf32> to vector<4x4x8xf32>
    %773 = vector.broadcast %771 : vector<1x4x8xf32> to vector<4x4x8xf32>
    %774 = arith.subf %772, %773 : vector<4x4x8xf32>
    %775 = arith.mulf %764, %764 : vector<4x4x8xf32>
    %776 = arith.addf %751, %775 : vector<4x4x8xf32>
    %777 = arith.mulf %769, %769 : vector<4x4x8xf32>
    %778 = arith.addf %753, %777 : vector<4x4x8xf32>
    %779 = arith.mulf %774, %774 : vector<4x4x8xf32>
    %780 = arith.addf %755, %779 : vector<4x4x8xf32>
    %c31 = arith.constant 31 : index
    %c0_158 = arith.constant 0 : index
    %c0_159 = arith.constant 0 : index
    %781 = vector.load %arg1[%c31, %c0_158, %c0_159] : memref<32x4x8xf32, #tpu.memory_space<vmem>>, vector<1x4x8xf32>
    %782 = vector.shape_cast %781 : vector<1x4x8xf32> to vector<4x8xf32>
    %c31_160 = arith.constant 31 : index
    %c0_161 = arith.constant 0 : index
    %c0_162 = arith.constant 0 : index
    %783 = vector.load %arg2[%c31_160, %c0_161, %c0_162] : memref<32x4x8xf32, #tpu.memory_space<vmem>>, vector<1x4x8xf32>
    %784 = vector.shape_cast %783 : vector<1x4x8xf32> to vector<4x8xf32>
    %785 = vector.shape_cast %782 : vector<4x8xf32> to vector<4x1x8xf32>
    %786 = vector.shape_cast %782 : vector<4x8xf32> to vector<1x4x8xf32>
    %787 = vector.broadcast %785 : vector<4x1x8xf32> to vector<4x4x8xf32>
    %788 = vector.broadcast %786 : vector<1x4x8xf32> to vector<4x4x8xf32>
    %789 = arith.subf %787, %788 : vector<4x4x8xf32>
    %790 = vector.shape_cast %784 : vector<4x8xf32> to vector<4x1x8xf32>
    %791 = vector.shape_cast %784 : vector<4x8xf32> to vector<1x4x8xf32>
    %792 = vector.broadcast %790 : vector<4x1x8xf32> to vector<4x4x8xf32>
    %793 = vector.broadcast %791 : vector<1x4x8xf32> to vector<4x4x8xf32>
    %794 = arith.subf %792, %793 : vector<4x4x8xf32>
    %795 = vector.shape_cast %782 : vector<4x8xf32> to vector<4x1x8xf32>
    %796 = vector.shape_cast %784 : vector<4x8xf32> to vector<1x4x8xf32>
    %797 = vector.broadcast %795 : vector<4x1x8xf32> to vector<4x4x8xf32>
    %798 = vector.broadcast %796 : vector<1x4x8xf32> to vector<4x4x8xf32>
    %799 = arith.subf %797, %798 : vector<4x4x8xf32>
    %800 = arith.mulf %789, %789 : vector<4x4x8xf32>
    %801 = arith.addf %776, %800 : vector<4x4x8xf32>
    %802 = arith.mulf %794, %794 : vector<4x4x8xf32>
    %803 = arith.addf %778, %802 : vector<4x4x8xf32>
    %804 = arith.mulf %799, %799 : vector<4x4x8xf32>
    %805 = arith.addf %780, %804 : vector<4x4x8xf32>
    %cst_163 = arith.constant -6.250000e-02 : f32
    %806 = vector.broadcast %cst_163 : f32 to vector<4x4x8xf32>
    %807 = arith.mulf %801, %806 : vector<4x4x8xf32>
    %808 = math.exp %807 : vector<4x4x8xf32>
    %809 = arith.mulf %808, %808 : vector<4x4x8xf32>
    %810 = arith.addf %808, %809 : vector<4x4x8xf32>
    %811 = arith.mulf %809, %809 : vector<4x4x8xf32>
    %812 = arith.addf %810, %811 : vector<4x4x8xf32>
    %813 = arith.mulf %811, %811 : vector<4x4x8xf32>
    %814 = arith.addf %812, %813 : vector<4x4x8xf32>
    %815 = arith.mulf %813, %813 : vector<4x4x8xf32>
    %816 = arith.addf %814, %815 : vector<4x4x8xf32>
    %cst_164 = arith.constant -6.250000e-02 : f32
    %817 = vector.broadcast %cst_164 : f32 to vector<4x4x8xf32>
    %818 = arith.mulf %803, %817 : vector<4x4x8xf32>
    %819 = math.exp %818 : vector<4x4x8xf32>
    %820 = arith.mulf %819, %819 : vector<4x4x8xf32>
    %821 = arith.addf %819, %820 : vector<4x4x8xf32>
    %822 = arith.mulf %820, %820 : vector<4x4x8xf32>
    %823 = arith.addf %821, %822 : vector<4x4x8xf32>
    %824 = arith.mulf %822, %822 : vector<4x4x8xf32>
    %825 = arith.addf %823, %824 : vector<4x4x8xf32>
    %826 = arith.mulf %824, %824 : vector<4x4x8xf32>
    %827 = arith.addf %825, %826 : vector<4x4x8xf32>
    %828 = arith.addf %816, %827 : vector<4x4x8xf32>
    %cst_165 = arith.constant -6.250000e-02 : f32
    %829 = vector.broadcast %cst_165 : f32 to vector<4x4x8xf32>
    %830 = arith.mulf %805, %829 : vector<4x4x8xf32>
    %831 = math.exp %830 : vector<4x4x8xf32>
    %832 = arith.mulf %831, %831 : vector<4x4x8xf32>
    %833 = arith.addf %831, %832 : vector<4x4x8xf32>
    %834 = arith.mulf %832, %832 : vector<4x4x8xf32>
    %835 = arith.addf %833, %834 : vector<4x4x8xf32>
    %836 = arith.mulf %834, %834 : vector<4x4x8xf32>
    %837 = arith.addf %835, %836 : vector<4x4x8xf32>
    %838 = arith.mulf %836, %836 : vector<4x4x8xf32>
    %839 = arith.addf %837, %838 : vector<4x4x8xf32>
    %cst_166 = arith.constant 2.000000e+00 : f32
    %840 = vector.broadcast %cst_166 : f32 to vector<4x4x8xf32>
    %841 = arith.mulf %840, %839 : vector<4x4x8xf32>
    %842 = arith.subf %828, %841 : vector<4x4x8xf32>
    %c0_167 = arith.constant 0 : index
    %c0_168 = arith.constant 0 : index
    %843 = vector.load %arg4[%c0_167, %c0_168] : memref<4x8xf32, #tpu.memory_space<vmem>>, vector<4x8xf32>
    %cst_169 = arith.constant dense<0.000000e+00> : vector<4x8xf32>
    %844 = vector.multi_reduction <add>, %842, %cst_169 [0] : vector<4x4x8xf32> to vector<4x8xf32>
    %845 = arith.addf %843, %844 : vector<4x8xf32>
    %c0_170 = arith.constant 0 : index
    %c0_171 = arith.constant 0 : index
    %846 = vector.load %arg4[%c0_170, %c0_171] : memref<4x8xf32, #tpu.memory_space<vmem>>, vector<4x8xf32>
    tpu.vector_store %arg4[%c0_170, %c0_171], %845 {strides = array<i32>} : memref<4x8xf32, #tpu.memory_space<vmem>>, vector<4x8xf32>,
    %c0_i32_172 = arith.constant 0 : i32
    %847 = arith.cmpi eq, %arg0, %c0_i32_172 : i32
    %848 = arith.extui %847 : i1 to i32
    %c0_i32_173 = arith.constant 0 : i32
    %849 = arith.cmpi ne, %848, %c0_i32_173 : i32
    scf.if %849 {
      %c0_174 = arith.constant 0 : index
      %c0_175 = arith.constant 0 : index
      %850 = vector.load %arg4[%c0_174, %c0_175] : memref<4x8xf32, #tpu.memory_space<vmem>>, vector<4x8xf32>
      %851 = vector.shape_cast %850 : vector<4x8xf32> to vector<1x4x8xf32>
      %cst_176 = arith.constant dense<0.000000e+00> : vector<1xf32>
      %852 = vector.multi_reduction <add>, %851, %cst_176 [1, 2] : vector<1x4x8xf32> to vector<1xf32>
      %853 = vector.shape_cast %852 : vector<1xf32> to vector<1x1x1xf32>
      %854 = vector.extract %853[0, 0, 0] : f32 from vector<1x1x1xf32>
      %855 = vector.broadcast %854 : f32 to vector<1x1xf32>
      %cst_177 = arith.constant 6.250000e-02 : f32
      %856 = vector.broadcast %cst_177 : f32 to vector<1x1xf32>
      %857 = arith.mulf %855, %856 : vector<1x1xf32>
      %cst_178 = arith.constant 0.000000e+00 : f32
      %858 = vector.broadcast %cst_178 : f32 to vector<8x128xf32>
      %859 = vector.broadcast %857 : vector<1x1xf32> to vector<8x128xf32>
      %860 = arith.addf %858, %859 : vector<8x128xf32>
      %c0_179 = arith.constant 0 : index
      %c0_180 = arith.constant 0 : index
      %861 = vector.load %arg3[%c0_179, %c0_180] : memref<8x128xf32, #tpu.memory_space<vmem>>, vector<8x128xf32>
      tpu.vector_store %arg3[%c0_179, %c0_180], %860 {strides = array<i32>} : memref<8x128xf32, #tpu.memory_space<vmem>>, vector<8x128xf32>,
    } else {
    }
    return
  }
  func.func @transform_0(%arg0: i32) -> (i32, i32, i32) {
    %c0_i32 = arith.constant 0 : i32
    %c0_i32_0 = arith.constant 0 : i32
    %c0_i32_1 = arith.constant 0 : i32
    return %c0_i32, %c0_i32_0, %arg0 : i32, i32, i32
  }
  func.func @transform_1(%arg0: i32) -> (i32, i32, i32) {
    %c0_i32 = arith.constant 0 : i32
    %c0_i32_0 = arith.constant 0 : i32
    %c0_i32_1 = arith.constant 0 : i32
    return %c0_i32, %c0_i32_0, %arg0 : i32, i32, i32
  }
  func.func @transform_2(%arg0: i32) -> (i32, i32) {
    %c0_i32 = arith.constant 0 : i32
    %c0_i32_0 = arith.constant 0 : i32
    %c0_i32_1 = arith.constant 0 : i32
    return %c0_i32, %c0_i32_0 : i32, i32
  }
}

</mosaic_0001>

<llo_original>
// kernel: tpu_custom_call.1
$region0: #{tpu_custom_call.1}
  #allocation0 [shape = 'u32[]', space=smem, size = 0x4, offset = 0x4, fixed_abs, tag = 'smem constant byte address 0x4 - core index']
  #allocation1 [shape = 'u32[144,128]{1,0:T(1,128)}', space=vmem, size = 0x12000, scoped, tag = 'internal scratch']
  #allocation2 [shape = 'f32[4,8]{1,0:T(4,128)}', space=vmem, size = 0x800, scoped, tag = 'scratch operand']
  %s0 = inlined_call_operand.vmem [shape: f32[32,4,8], index: 0, kind: input, shape index: {}]
  %s1 = inlined_call_operand.vmem [shape: f32[32,4,8], index: 1, kind: input, shape index: {}]
  %s2 = inlined_call_operand.hbm [shape: f32[8,128], index: 2, kind: output, shape index: {}]
  %s3 = sld [smem:[#allocation0]]
  $region26: #{tpu_custom_call.1} parent=0
    _
  %s5 = ssub.s32 1, %s3
  %s6 = scalar_select 0, %s5, %s3
  $region1: #{tpu_custom_call.1} parent=0
    #allocation3 [shape = 'u8[4096]{0}', space=vmem, size = 0x1000, scoped, tag = 'output window, operand 0, single buffered']
    #allocation4 [shape = 's32[1]{0}', space=sflag, size = 0x4, scoped, tag = 'scoped memory for tpu_custom_call.1']
    %7 = vsyncpa [#allocation4], 0
    // Predicated region
    $region2: #{tpu_custom_call.1} parent=1 // pred_check
      _
    $region3: #{tpu_custom_call.1} parent=1 // pred_check_branch
      %9 = sbr.rel (0) target = $region5
    $region4: #{tpu_custom_call.1} parent=1 // pred_region
      _
    $region5: #{tpu_custom_call.1} parent=1 // pred_fallthru
      _
    // Predicated region
    $region6: #{tpu_custom_call.1} parent=1 // pred_check
      _
    $region7: #{tpu_custom_call.1} parent=1 // pred_check_branch
      %11 = sbr.rel (0) target = $region9
    $region8: #{tpu_custom_call.1} parent=1 // pred_region
      _
    $region9: #{tpu_custom_call.1} parent=1 // pred_fallthru
      _
    %p12 = scmp.eq.s32.totalorder 0, 0
    // Predicated region
    $region10: #{tpu_custom_call.1} parent=1 // pred_check
      %p13 = pneg %p12
    $region11: #{tpu_custom_call.1} parent=1 // pred_check_branch
      %15 = sbr.rel (%p13) target = $region13
    $region12: #{tpu_custom_call.1} parent=1 // pred_region
      %vm16 = vcmask 60416
      %17 = vst.msk [vmem:[#allocation2] sm:$0xf] %vm16, 0.0
    $region13: #{tpu_custom_call.1} parent=1 // pred_fallthru
      _
    %v18 = vld [vmem:[%s0] sm:$0xf]
    %v19 = vld [vmem:[%s1] sm:$0xf]
    %v22 = vunpack.c.l.s4 1966171168
    %v23 = vunpack.c.0.s8 %v22
    %v24 = vlaneseq
    %v25 = vshrl.u32 %v24, 7
    %v26 = vsub.s32 %v23, %v25
    %v27 = vrot.slane %v18, %v26
    %v28 = vcombine.high %v27, %v27
    %v30 = vunpack.c.l.s4 1966171168
    %v31 = vunpack.c.0.s8 %v30
    %v32 = vlaneseq
    %v33 = vshrl.u32 %v32, 7
    %v34 = vsub.s32 %v31, %v33
    %v35 = vrot.slane %v27, %v34
    %v37 = vunpack.c.l.s4 1966171168
    %v38 = vunpack.c.0.s8 %v37
    %v39 = vlaneseq
    %v40 = vshrl.u32 %v39, 7
    %v41 = vsub.s32 %v38, %v40
    %v42 = vrot.slane %v28, %v41
    %v43 = vcombine.high %v35, %v35
    %v44 = vcombine.high %v42, %v42
    %v45 = vlaneseq
    %v46 = vshrl.u32 %v45, 7
    %v47 = vsub.s32 0, %v46
    %v48 = vrot.slane %v35, %v47
    %v49 = vlaneseq
    %v50 = vshrl.u32 %v49, 7
    %v51 = vsub.s32 0, %v50
    %v52 = vrot.slane %v42, %v51
    %v53 = vlaneseq
    %v54 = vshrl.u32 %v53, 7
    %v55 = vsub.s32 0, %v54
    %v56 = vrot.slane %v43, %v55
    %v57 = vlaneseq
    %v58 = vshrl.u32 %v57, 7
    %v59 = vsub.s32 0, %v58
    %v60 = vrot.slane %v44, %v59
    %v65 = vsub.f32 %v48, %v18
    %v66 = vsub.f32 %v52, %v18
    %v67 = vsub.f32 %v56, %v18
    %v68 = vsub.f32 %v60, %v18
    %v71 = vunpack.c.l.s4 1966171168
    %v72 = vunpack.c.0.s8 %v71
    %v73 = vlaneseq
    %v74 = vshrl.u32 %v73, 7
    %v75 = vsub.s32 %v72, %v74
    %v76 = vrot.slane %v19, %v75
    %v77 = vcombine.high %v76, %v76
    %v79 = vunpack.c.l.s4 1966171168
    %v80 = vunpack.c.0.s8 %v79
    %v81 = vlaneseq
    %v82 = vshrl.u32 %v81, 7
    %v83 = vsub.s32 %v80, %v82
    %v84 = vrot.slane %v76, %v83
    %v86 = vunpack.c.l.s4 1966171168
    %v87 = vunpack.c.0.s8 %v86
    %v88 = vlaneseq
    %v89 = vshrl.u32 %v88, 7
    %v90 = vsub.s32 %v87, %v89
    %v91 = vrot.slane %v77, %v90
    %v92 = vcombine.high %v84, %v84
    %v93 = vcombine.high %v91, %v91
    %v94 = vlaneseq
    %v95 = vshrl.u32 %v94, 7
    %v96 = vsub.s32 0, %v95
    %v97 = vrot.slane %v84, %v96
    %v98 = vlaneseq
    %v99 = vshrl.u32 %v98, 7
    %v100 = vsub.s32 0, %v99
    %v101 = vrot.slane %v91, %v100
    %v102 = vlaneseq
    %v103 = vshrl.u32 %v102, 7
    %v104 = vsub.s32 0, %v103
    %v105 = vrot.slane %v92, %v104
    %v106 = vlaneseq
    %v107 = vshrl.u32 %v106, 7
    %v108 = vsub.s32 0, %v107
    %v109 = vrot.slane %v93, %v108
    %v114 = vsub.f32 %v97, %v19
    %v115 = vsub.f32 %v101, %v19
    %v116 = vsub.f32 %v105, %v19
    %v117 = vsub.f32 %v109, %v19
    %v118 = vsub.f32 %v48, %v19
    %v119 = vsub.f32 %v52, %v19
    %v120 = vsub.f32 %v56, %v19
    %v121 = vsub.f32 %v60, %v19
    %v122 = vmul.f32 %v65, %v65
    %v123 = vmul.f32 %v66, %v66
    %v124 = vmul.f32 %v67, %v67
    %v125 = vmul.f32 %v68, %v68
    %v126 = vadd.f32 %v122, 0.0
    %v127 = vadd.f32 %v123, 0.0
    %v128 = vadd.f32 %v124, 0.0
    %v129 = vadd.f32 %v125, 0.0
    %v130 = vmul.f32 %v114, %v114
    %v131 = vmul.f32 %v115, %v115
    %v132 = vmul.f32 %v116, %v116
    %v133 = vmul.f32 %v117, %v117
    %v134 = vadd.f32 %v130, 0.0
    %v135 = vadd.f32 %v131, 0.0
    %v136 = vadd.f32 %v132, 0.0
    %v137 = vadd.f32 %v133, 0.0
    %v138 = vmul.f32 %v118, %v118
    %v139 = vmul.f32 %v119, %v119
    %v140 = vmul.f32 %v120, %v120
    %v141 = vmul.f32 %v121, %v121
    %v142 = vadd.f32 %v138, 0.0
    %v143 = vadd.f32 %v139, 0.0
    %v144 = vadd.f32 %v140, 0.0
    %v145 = vadd.f32 %v141, 0.0
    %s146 = scalar_lea.vmem %s0, 4
    %v147 = vld [vmem:[%s146] sm:$0xf]
    %s148 = scalar_lea.vmem %s1, 4
    %v149 = vld [vmem:[%s148] sm:$0xf]
    %v152 = vunpack.c.l.s4 1966171168
    %v153 = vunpack.c.0.s8 %v152
    %v154 = vlaneseq
    %v155 = vshrl.u32 %v154, 7
    %v156 = vsub.s32 %v153, %v155
    %v157 = vrot.slane %v147, %v156
    %v158 = vcombine.high %v157, %v157
    %v160 = vunpack.c.l.s4 1966171168
    %v161 = vunpack.c.0.s8 %v160
    %v162 = vlaneseq
    %v163 = vshrl.u32 %v162, 7
    %v164 = vsub.s32 %v161, %v163
    %v165 = vrot.slane %v157, %v164
    %v167 = vunpack.c.l.s4 1966171168
    %v168 = vunpack.c.0.s8 %v167
    %v169 = vlaneseq
    %v170 = vshrl.u32 %v169, 7
    %v171 = vsub.s32 %v168, %v170
    %v172 = vrot.slane %v158, %v171
    %v173 = vcombine.high %v165, %v165
    %v174 = vcombine.high %v172, %v172
    %v175 = vlaneseq
    %v176 = vshrl.u32 %v175, 7
    %v177 = vsub.s32 0, %v176
    %v178 = vrot.slane %v165, %v177
    %v179 = vlaneseq
    %v180 = vshrl.u32 %v179, 7
    %v181 = vsub.s32 0, %v180
    %v182 = vrot.slane %v172, %v181
    %v183 = vlaneseq
    %v184 = vshrl.u32 %v183, 7
    %v185 = vsub.s32 0, %v184
    %v186 = vrot.slane %v173, %v185
    %v187 = vlaneseq
    %v188 = vshrl.u32 %v187, 7
    %v189 = vsub.s32 0, %v188
    %v190 = vrot.slane %v174, %v189
    %v195 = vsub.f32 %v178, %v147
    %v196 = vsub.f32 %v182, %v147
    %v197 = vsub.f32 %v186, %v147
    %v198 = vsub.f32 %v190, %v147
    %v201 = vunpack.c.l.s4 1966171168
    %v202 = vunpack.c.0.s8 %v201
    %v203 = vlaneseq
    %v204 = vshrl.u32 %v203, 7
    %v205 = vsub.s32 %v202, %v204
    %v206 = vrot.slane %v149, %v205
    %v207 = vcombine.high %v206, %v206
    %v209 = vunpack.c.l.s4 1966171168
    %v210 = vunpack.c.0.s8 %v209
    %v211 = vlaneseq
    %v212 = vshrl.u32 %v211, 7
    %v213 = vsub.s32 %v210, %v212
    %v214 = vrot.slane %v206, %v213
    %v216 = vunpack.c.l.s4 1966171168
    %v217 = vunpack.c.0.s8 %v216
    %v218 = vlaneseq
    %v219 = vshrl.u32 %v218, 7
    %v220 = vsub.s32 %v217, %v219
    %v221 = vrot.slane %v207, %v220
    %v222 = vcombine.high %v214, %v214
    %v223 = vcombine.high %v221, %v221
    %v224 = vlaneseq
    %v225 = vshrl.u32 %v224, 7
    %v226 = vsub.s32 0, %v225
    %v227 = vrot.slane %v214, %v226
    %v228 = vlaneseq
    %v229 = vshrl.u32 %v228, 7
    %v230 = vsub.s32 0, %v229
    %v231 = vrot.slane %v221, %v230
    %v232 = vlaneseq
    %v233 = vshrl.u32 %v232, 7
    %v234 = vsub.s32 0, %v233
    %v235 = vrot.slane %v222, %v234
    %v236 = vlaneseq
    %v237 = vshrl.u32 %v236, 7
    %v238 = vsub.s32 0, %v237
    %v239 = vrot.slane %v223, %v238
    %v244 = vsub.f32 %v227, %v149
    %v245 = vsub.f32 %v231, %v149
    %v246 = vsub.f32 %v235, %v149
    %v247 = vsub.f32 %v239, %v149
    %v248 = vsub.f32 %v178, %v149
    %v249 = vsub.f32 %v182, %v149
    %v250 = vsub.f32 %v186, %v149
    %v251 = vsub.f32 %v190, %v149
    %v252 = vmul.f32 %v195, %v195
    %v253 = vmul.f32 %v196, %v196
    %v254 = vmul.f32 %v197, %v197
    %v255 = vmul.f32 %v198, %v198
    %v256 = vadd.f32 %v126, %v252
    %v257 = vadd.f32 %v127, %v253
    %v258 = vadd.f32 %v128, %v254
    %v259 = vadd.f32 %v129, %v255
    %v260 = vmul.f32 %v244, %v244
    %v261 = vmul.f32 %v245, %v245
    %v262 = vmul.f32 %v246, %v246
    %v263 = vmul.f32 %v247, %v247
    %v264 = vadd.f32 %v134, %v260
    %v265 = vadd.f32 %v135, %v261
    %v266 = vadd.f32 %v136, %v262
    %v267 = vadd.f32 %v137, %v263
    %v268 = vmul.f32 %v248, %v248
    %v269 = vmul.f32 %v249, %v249
    %v270 = vmul.f32 %v250, %v250
    %v271 = vmul.f32 %v251, %v251
    %v272 = vadd.f32 %v142, %v268
    %v273 = vadd.f32 %v143, %v269
    %v274 = vadd.f32 %v144, %v270
    %v275 = vadd.f32 %v145, %v271
    %s276 = scalar_lea.vmem %s0, 8
    %v277 = vld [vmem:[%s276] sm:$0xf]
    %s278 = scalar_lea.vmem %s1, 8
    %v279 = vld [vmem:[%s278] sm:$0xf]
    %v282 = vunpack.c.l.s4 1966171168
    %v283 = vunpack.c.0.s8 %v282
    %v284 = vlaneseq
    %v285 = vshrl.u32 %v284, 7
    %v286 = vsub.s32 %v283, %v285
    %v287 = vrot.slane %v277, %v286
    %v288 = vcombine.high %v287, %v287
    %v290 = vunpack.c.l.s4 1966171168
    %v291 = vunpack.c.0.s8 %v290
    %v292 = vlaneseq
    %v293 = vshrl.u32 %v292, 7
    %v294 = vsub.s32 %v291, %v293
    %v295 = vrot.slane %v287, %v294
    %v297 = vunpack.c.l.s4 1966171168
    %v298 = vunpack.c.0.s8 %v297
    %v299 = vlaneseq
    %v300 = vshrl.u32 %v299, 7
    %v301 = vsub.s32 %v298, %v300
    %v302 = vrot.slane %v288, %v301
    %v303 = vcombine.high %v295, %v295
    %v304 = vcombine.high %v302, %v302
    %v305 = vlaneseq
    %v306 = vshrl.u32 %v305, 7
    %v307 = vsub.s32 0, %v306
    %v308 = vrot.slane %v295, %v307
    %v309 = vlaneseq
    %v310 = vshrl.u32 %v309, 7
    %v311 = vsub.s32 0, %v310
    %v312 = vrot.slane %v302, %v311
    %v313 = vlaneseq
    %v314 = vshrl.u32 %v313, 7
    %v315 = vsub.s32 0, %v314
    %v316 = vrot.slane %v303, %v315
    %v317 = vlaneseq
    %v318 = vshrl.u32 %v317, 7
    %v319 = vsub.s32 0, %v318
    %v320 = vrot.slane %v304, %v319
    %v325 = vsub.f32 %v308, %v277
    %v326 = vsub.f32 %v312, %v277
    %v327 = vsub.f32 %v316, %v277
    %v328 = vsub.f32 %v320, %v277
    %v331 = vunpack.c.l.s4 1966171168
    %v332 = vunpack.c.0.s8 %v331
    %v333 = vlaneseq
    %v334 = vshrl.u32 %v333, 7
    %v335 = vsub.s32 %v332, %v334
    %v336 = vrot.slane %v279, %v335
    %v337 = vcombine.high %v336, %v336
    %v339 = vunpack.c.l.s4 1966171168
    %v340 = vunpack.c.0.s8 %v339
    %v341 = vlaneseq
    %v342 = vshrl.u32 %v341, 7
    %v343 = vsub.s32 %v340, %v342
    %v344 = vrot.slane %v336, %v343
    %v346 = vunpack.c.l.s4 1966171168
    %v347 = vunpack.c.0.s8 %v346
    %v348 = vlaneseq
    %v349 = vshrl.u32 %v348, 7
    %v350 = vsub.s32 %v347, %v349
    %v351 = vrot.slane %v337, %v350
    %v352 = vcombine.high %v344, %v344
    %v353 = vcombine.high %v351, %v351
    %v354 = vlaneseq
    %v355 = vshrl.u32 %v354, 7
    %v356 = vsub.s32 0, %v355
    %v357 = vrot.slane %v344, %v356
    %v358 = vlaneseq
    %v359 = vshrl.u32 %v358, 7
    %v360 = vsub.s32 0, %v359
    %v361 = vrot.slane %v351, %v360
    %v362 = vlaneseq
    %v363 = vshrl.u32 %v362, 7
    %v364 = vsub.s32 0, %v363
    %v365 = vrot.slane %v352, %v364
    %v366 = vlaneseq
    %v367 = vshrl.u32 %v366, 7
    %v368 = vsub.s32 0, %v367
    %v369 = vrot.slane %v353, %v368
    %v374 = vsub.f32 %v357, %v279
    %v375 = vsub.f32 %v361, %v279
    %v376 = vsub.f32 %v365, %v279
    %v377 = vsub.f32 %v369, %v279
    %v378 = vsub.f32 %v308, %v279
    %v379 = vsub.f32 %v312, %v279
    %v380 = vsub.f32 %v316, %v279
    %v381 = vsub.f32 %v320, %v279
    %v382 = vmul.f32 %v325, %v325
    %v383 = vmul.f32 %v326, %v326
    %v384 = vmul.f32 %v327, %v327
    %v385 = vmul.f32 %v328, %v328
    %v386 = vadd.f32 %v256, %v382
    %v387 = vadd.f32 %v257, %v383
    %v388 = vadd.f32 %v258, %v384
    %v389 = vadd.f32 %v259, %v385
    %v390 = vmul.f32 %v374, %v374
    %v391 = vmul.f32 %v375, %v375
    %v392 = vmul.f32 %v376, %v376
    %v393 = vmul.f32 %v377, %v377
    %v394 = vadd.f32 %v264, %v390
    %v395 = vadd.f32 %v265, %v391
    %v396 = vadd.f32 %v266, %v392
    %v397 = vadd.f32 %v267, %v393
    %v398 = vmul.f32 %v378, %v378
    %v399 = vmul.f32 %v379, %v379
    %v400 = vmul.f32 %v380, %v380
    %v401 = vmul.f32 %v381, %v381
    %v402 = vadd.f32 %v272, %v398
    %v403 = vadd.f32 %v273, %v399
    %v404 = vadd.f32 %v274, %v400
    %v405 = vadd.f32 %v275, %v401
    %s406 = scalar_lea.vmem %s0, 12
    %v407 = vld [vmem:[%s406] sm:$0xf]
    %s408 = scalar_lea.vmem %s1, 12
    %v409 = vld [vmem:[%s408] sm:$0xf]
    %v412 = vunpack.c.l.s4 1966171168
    %v413 = vunpack.c.0.s8 %v412
    %v414 = vlaneseq
    %v415 = vshrl.u32 %v414, 7
    %v416 = vsub.s32 %v413, %v415
    %v417 = vrot.slane %v407, %v416
    %v418 = vcombine.high %v417, %v417
    %v420 = vunpack.c.l.s4 1966171168
    %v421 = vunpack.c.0.s8 %v420
    %v422 = vlaneseq
    %v423 = vshrl.u32 %v422, 7
    %v424 = vsub.s32 %v421, %v423
    %v425 = vrot.slane %v417, %v424
    %v427 = vunpack.c.l.s4 1966171168
    %v428 = vunpack.c.0.s8 %v427
    %v429 = vlaneseq
    %v430 = vshrl.u32 %v429, 7
    %v431 = vsub.s32 %v428, %v430
    %v432 = vrot.slane %v418, %v431
    %v433 = vcombine.high %v425, %v425
    %v434 = vcombine.high %v432, %v432
    %v435 = vlaneseq
    %v436 = vshrl.u32 %v435, 7
    %v437 = vsub.s32 0, %v436
    %v438 = vrot.slane %v425, %v437
    %v439 = vlaneseq
    %v440 = vshrl.u32 %v439, 7
    %v441 = vsub.s32 0, %v440
    %v442 = vrot.slane %v432, %v441
    %v443 = vlaneseq
    %v444 = vshrl.u32 %v443, 7
    %v445 = vsub.s32 0, %v444
    %v446 = vrot.slane %v433, %v445
    %v447 = vlaneseq
    %v448 = vshrl.u32 %v447, 7
    %v449 = vsub.s32 0, %v448
    %v450 = vrot.slane %v434, %v449
    %v455 = vsub.f32 %v438, %v407
    %v456 = vsub.f32 %v442, %v407
    %v457 = vsub.f32 %v446, %v407
    %v458 = vsub.f32 %v450, %v407
    %v461 = vunpack.c.l.s4 1966171168
    %v462 = vunpack.c.0.s8 %v461
    %v463 = vlaneseq
    %v464 = vshrl.u32 %v463, 7
    %v465 = vsub.s32 %v462, %v464
    %v466 = vrot.slane %v409, %v465
    %v467 = vcombine.high %v466, %v466
    %v469 = vunpack.c.l.s4 1966171168
    %v470 = vunpack.c.0.s8 %v469
    %v471 = vlaneseq
    %v472 = vshrl.u32 %v471, 7
    %v473 = vsub.s32 %v470, %v472
    %v474 = vrot.slane %v466, %v473
    %v476 = vunpack.c.l.s4 1966171168
    %v477 = vunpack.c.0.s8 %v476
    %v478 = vlaneseq
    %v479 = vshrl.u32 %v478, 7
    %v480 = vsub.s32 %v477, %v479
    %v481 = vrot.slane %v467, %v480
    %v482 = vcombine.high %v474, %v474
    %v483 = vcombine.high %v481, %v481
    %v484 = vlaneseq
    %v485 = vshrl.u32 %v484, 7
    %v486 = vsub.s32 0, %v485
    %v487 = vrot.slane %v474, %v486
    %v488 = vlaneseq
    %v489 = vshrl.u32 %v488, 7
    %v490 = vsub.s32 0, %v489
    %v491 = vrot.slane %v481, %v490
    %v492 = vlaneseq
    %v493 = vshrl.u32 %v492, 7
    %v494 = vsub.s32 0, %v493
    %v495 = vrot.slane %v482, %v494
    %v496 = vlaneseq
    %v497 = vshrl.u32 %v496, 7
    %v498 = vsub.s32 0, %v497
    %v499 = vrot.slane %v483, %v498
    %v504 = vsub.f32 %v487, %v409
    %v505 = vsub.f32 %v491, %v409
    %v506 = vsub.f32 %v495, %v409
    %v507 = vsub.f32 %v499, %v409
    %v508 = vsub.f32 %v438, %v409
    %v509 = vsub.f32 %v442, %v409
    %v510 = vsub.f32 %v446, %v409
    %v511 = vsub.f32 %v450, %v409
    %v512 = vmul.f32 %v455, %v455
    %v513 = vmul.f32 %v456, %v456
    %v514 = vmul.f32 %v457, %v457
    %v515 = vmul.f32 %v458, %v458
    %v516 = vadd.f32 %v386, %v512
    %v517 = vadd.f32 %v387, %v513
    %v518 = vadd.f32 %v388, %v514
    %v519 = vadd.f32 %v389, %v515
    %v520 = vmul.f32 %v504, %v504
    %v521 = vmul.f32 %v505, %v505
    %v522 = vmul.f32 %v506, %v506
    %v523 = vmul.f32 %v507, %v507
    %v524 = vadd.f32 %v394, %v520
    %v525 = vadd.f32 %v395, %v521
    %v526 = vadd.f32 %v396, %v522
    %v527 = vadd.f32 %v397, %v523
    %v528 = vmul.f32 %v508, %v508
    %v529 = vmul.f32 %v509, %v509
    %v530 = vmul.f32 %v510, %v510
    %v531 = vmul.f32 %v511, %v511
    %v532 = vadd.f32 %v402, %v528
    %v533 = vadd.f32 %v403, %v529
    %v534 = vadd.f32 %v404, %v530
    %v535 = vadd.f32 %v405, %v531
    %s536 = scalar_lea.vmem %s0, 16
    %v537 = vld [vmem:[%s536] sm:$0xf]
    %s538 = scalar_lea.vmem %s1, 16
    %v539 = vld [vmem:[%s538] sm:$0xf]
    %v542 = vunpack.c.l.s4 1966171168
    %v543 = vunpack.c.0.s8 %v542
    %v544 = vlaneseq
    %v545 = vshrl.u32 %v544, 7
    %v546 = vsub.s32 %v543, %v545
    %v547 = vrot.slane %v537, %v546
    %v548 = vcombine.high %v547, %v547
    %v550 = vunpack.c.l.s4 1966171168
    %v551 = vunpack.c.0.s8 %v550
    %v552 = vlaneseq
    %v553 = vshrl.u32 %v552, 7
    %v554 = vsub.s32 %v551, %v553
    %v555 = vrot.slane %v547, %v554
    %v557 = vunpack.c.l.s4 1966171168
    %v558 = vunpack.c.0.s8 %v557
    %v559 = vlaneseq
    %v560 = vshrl.u32 %v559, 7
    %v561 = vsub.s32 %v558, %v560
    %v562 = vrot.slane %v548, %v561
    %v563 = vcombine.high %v555, %v555
    %v564 = vcombine.high %v562, %v562
    %v565 = vlaneseq
    %v566 = vshrl.u32 %v565, 7
    %v567 = vsub.s32 0, %v566
    %v568 = vrot.slane %v555, %v567
    %v569 = vlaneseq
    %v570 = vshrl.u32 %v569, 7
    %v571 = vsub.s32 0, %v570
    %v572 = vrot.slane %v562, %v571
    %v573 = vlaneseq
    %v574 = vshrl.u32 %v573, 7
    %v575 = vsub.s32 0, %v574
    %v576 = vrot.slane %v563, %v575
    %v577 = vlaneseq
    %v578 = vshrl.u32 %v577, 7
    %v579 = vsub.s32 0, %v578
    %v580 = vrot.slane %v564, %v579
    %v585 = vsub.f32 %v568, %v537
    %v586 = vsub.f32 %v572, %v537
    %v587 = vsub.f32 %v576, %v537
    %v588 = vsub.f32 %v580, %v537
    %v591 = vunpack.c.l.s4 1966171168
    %v592 = vunpack.c.0.s8 %v591
    %v593 = vlaneseq
    %v594 = vshrl.u32 %v593, 7
    %v595 = vsub.s32 %v592, %v594
    %v596 = vrot.slane %v539, %v595
    %v597 = vcombine.high %v596, %v596
    %v599 = vunpack.c.l.s4 1966171168
    %v600 = vunpack.c.0.s8 %v599
    %v601 = vlaneseq
    %v602 = vshrl.u32 %v601, 7
    %v603 = vsub.s32 %v600, %v602
    %v604 = vrot.slane %v596, %v603
    %v606 = vunpack.c.l.s4 1966171168
    %v607 = vunpack.c.0.s8 %v606
    %v608 = vlaneseq
    %v609 = vshrl.u32 %v608, 7
    %v610 = vsub.s32 %v607, %v609
    %v611 = vrot.slane %v597, %v610
    %v612 = vcombine.high %v604, %v604
    %v613 = vcombine.high %v611, %v611
    %v614 = vlaneseq
    %v615 = vshrl.u32 %v614, 7
    %v616 = vsub.s32 0, %v615
    %v617 = vrot.slane %v604, %v616
    %v618 = vlaneseq
    %v619 = vshrl.u32 %v618, 7
    %v620 = vsub.s32 0, %v619
    %v621 = vrot.slane %v611, %v620
    %v622 = vlaneseq
    %v623 = vshrl.u32 %v622, 7
    %v624 = vsub.s32 0, %v623
    %v625 = vrot.slane %v612, %v624
    %v626 = vlaneseq
    %v627 = vshrl.u32 %v626, 7
    %v628 = vsub.s32 0, %v627
    %v629 = vrot.slane %v613, %v628
    %v634 = vsub.f32 %v617, %v539
    %v635 = vsub.f32 %v621, %v539
    %v636 = vsub.f32 %v625, %v539
    %v637 = vsub.f32 %v629, %v539
    %v638 = vsub.f32 %v568, %v539
    %v639 = vsub.f32 %v572, %v539
    %v640 = vsub.f32 %v576, %v539
    %v641 = vsub.f32 %v580, %v539
    %v642 = vmul.f32 %v585, %v585
    %v643 = vmul.f32 %v586, %v586
    %v644 = vmul.f32 %v587, %v587
    %v645 = vmul.f32 %v588, %v588
    %v646 = vadd.f32 %v516, %v642
    %v647 = vadd.f32 %v517, %v643
    %v648 = vadd.f32 %v518, %v644
    %v649 = vadd.f32 %v519, %v645
    %v650 = vmul.f32 %v634, %v634
    %v651 = vmul.f32 %v635, %v635
    %v652 = vmul.f32 %v636, %v636
    %v653 = vmul.f32 %v637, %v637
    %v654 = vadd.f32 %v524, %v650
    %v655 = vadd.f32 %v525, %v651
    %v656 = vadd.f32 %v526, %v652
    %v657 = vadd.f32 %v527, %v653
    %v658 = vmul.f32 %v638, %v638
    %v659 = vmul.f32 %v639, %v639
    %v660 = vmul.f32 %v640, %v640
    %v661 = vmul.f32 %v641, %v641
    %v662 = vadd.f32 %v532, %v658
    %v663 = vadd.f32 %v533, %v659
    %v664 = vadd.f32 %v534, %v660
    %v665 = vadd.f32 %v535, %v661
    %s666 = scalar_lea.vmem %s0, 20
    %v667 = vld [vmem:[%s666] sm:$0xf]
    %s668 = scalar_lea.vmem %s1, 20
    %v669 = vld [vmem:[%s668] sm:$0xf]
    %v672 = vunpack.c.l.s4 1966171168
    %v673 = vunpack.c.0.s8 %v672
    %v674 = vlaneseq
    %v675 = vshrl.u32 %v674, 7
    %v676 = vsub.s32 %v673, %v675
    %v677 = vrot.slane %v667, %v676
    %v678 = vcombine.high %v677, %v677
    %v680 = vunpack.c.l.s4 1966171168
    %v681 = vunpack.c.0.s8 %v680
    %v682 = vlaneseq
    %v683 = vshrl.u32 %v682, 7
    %v684 = vsub.s32 %v681, %v683
    %v685 = vrot.slane %v677, %v684
    %v687 = vunpack.c.l.s4 1966171168
    %v688 = vunpack.c.0.s8 %v687
    %v689 = vlaneseq
    %v690 = vshrl.u32 %v689, 7
    %v691 = vsub.s32 %v688, %v690
    %v692 = vrot.slane %v678, %v691
    %v693 = vcombine.high %v685, %v685
    %v694 = vcombine.high %v692, %v692
    %v695 = vlaneseq
    %v696 = vshrl.u32 %v695, 7
    %v697 = vsub.s32 0, %v696
    %v698 = vrot.slane %v685, %v697
    %v699 = vlaneseq
    %v700 = vshrl.u32 %v699, 7
    %v701 = vsub.s32 0, %v700
    %v702 = vrot.slane %v692, %v701
    %v703 = vlaneseq
    %v704 = vshrl.u32 %v703, 7
    %v705 = vsub.s32 0, %v704
    %v706 = vrot.slane %v693, %v705
    %v707 = vlaneseq
    %v708 = vshrl.u32 %v707, 7
    %v709 = vsub.s32 0, %v708
    %v710 = vrot.slane %v694, %v709
    %v715 = vsub.f32 %v698, %v667
    %v716 = vsub.f32 %v702, %v667
    %v717 = vsub.f32 %v706, %v667
    %v718 = vsub.f32 %v710, %v667
    %v721 = vunpack.c.l.s4 1966171168
    %v722 = vunpack.c.0.s8 %v721
    %v723 = vlaneseq
    %v724 = vshrl.u32 %v723, 7
    %v725 = vsub.s32 %v722, %v724
    %v726 = vrot.slane %v669, %v725
    %v727 = vcombine.high %v726, %v726
    %v729 = vunpack.c.l.s4 1966171168
    %v730 = vunpack.c.0.s8 %v729
    %v731 = vlaneseq
    %v732 = vshrl.u32 %v731, 7
    %v733 = vsub.s32 %v730, %v732
    %v734 = vrot.slane %v726, %v733
    %v736 = vunpack.c.l.s4 1966171168
    %v737 = vunpack.c.0.s8 %v736
    %v738 = vlaneseq
    %v739 = vshrl.u32 %v738, 7
    %v740 = vsub.s32 %v737, %v739
    %v741 = vrot.slane %v727, %v740
    %v742 = vcombine.high %v734, %v734
    %v743 = vcombine.high %v741, %v741
    %v744 = vlaneseq
    %v745 = vshrl.u32 %v744, 7
    %v746 = vsub.s32 0, %v745
    %v747 = vrot.slane %v734, %v746
    %v748 = vlaneseq
    %v749 = vshrl.u32 %v748, 7
    %v750 = vsub.s32 0, %v749
    %v751 = vrot.slane %v741, %v750
    %v752 = vlaneseq
    %v753 = vshrl.u32 %v752, 7
    %v754 = vsub.s32 0, %v753
    %v755 = vrot.slane %v742, %v754
    %v756 = vlaneseq
    %v757 = vshrl.u32 %v756, 7
    %v758 = vsub.s32 0, %v757
    %v759 = vrot.slane %v743, %v758
    %v764 = vsub.f32 %v747, %v669
    %v765 = vsub.f32 %v751, %v669
    %v766 = vsub.f32 %v755, %v669
    %v767 = vsub.f32 %v759, %v669
    %v768 = vsub.f32 %v698, %v669
    %v769 = vsub.f32 %v702, %v669
    %v770 = vsub.f32 %v706, %v669
    %v771 = vsub.f32 %v710, %v669
    %v772 = vmul.f32 %v715, %v715
    %v773 = vmul.f32 %v716, %v716
    %v774 = vmul.f32 %v717, %v717
    %v775 = vmul.f32 %v718, %v718
    %v776 = vadd.f32 %v646, %v772
    %v777 = vadd.f32 %v647, %v773
    %v778 = vadd.f32 %v648, %v774
    %v779 = vadd.f32 %v649, %v775
    %v780 = vmul.f32 %v764, %v764
    %v781 = vmul.f32 %v765, %v765
    %v782 = vmul.f32 %v766, %v766
    %v783 = vmul.f32 %v767, %v767
    %v784 = vadd.f32 %v654, %v780
    %v785 = vadd.f32 %v655, %v781
    %v786 = vadd.f32 %v656, %v782
    %v787 = vadd.f32 %v657, %v783
    %v788 = vmul.f32 %v768, %v768
    %v789 = vmul.f32 %v769, %v769
    %v790 = vmul.f32 %v770, %v770
    %v791 = vmul.f32 %v771, %v771
    %v792 = vadd.f32 %v662, %v788
    %v793 = vadd.f32 %v663, %v789
    %v794 = vadd.f32 %v664, %v790
    %v795 = vadd.f32 %v665, %v791
    %s796 = scalar_lea.vmem %s0, 24
    %v797 = vld [vmem:[%s796] sm:$0xf]
    %s798 = scalar_lea.vmem %s1, 24
    %v799 = vld [vmem:[%s798] sm:$0xf]
    %v802 = vunpack.c.l.s4 1966171168
    %v803 = vunpack.c.0.s8 %v802
    %v804 = vlaneseq
    %v805 = vshrl.u32 %v804, 7
    %v806 = vsub.s32 %v803, %v805
    %v807 = vrot.slane %v797, %v806
    %v808 = vcombine.high %v807, %v807
    %v810 = vunpack.c.l.s4 1966171168
    %v811 = vunpack.c.0.s8 %v810
    %v812 = vlaneseq
    %v813 = vshrl.u32 %v812, 7
    %v814 = vsub.s32 %v811, %v813
    %v815 = vrot.slane %v807, %v814
    %v817 = vunpack.c.l.s4 1966171168
    %v818 = vunpack.c.0.s8 %v817
    %v819 = vlaneseq
    %v820 = vshrl.u32 %v819, 7
    %v821 = vsub.s32 %v818, %v820
    %v822 = vrot.slane %v808, %v821
    %v823 = vcombine.high %v815, %v815
    %v824 = vcombine.high %v822, %v822
    %v825 = vlaneseq
    %v826 = vshrl.u32 %v825, 7
    %v827 = vsub.s32 0, %v826
    %v828 = vrot.slane %v815, %v827
    %v829 = vlaneseq
    %v830 = vshrl.u32 %v829, 7
    %v831 = vsub.s32 0, %v830
    %v832 = vrot.slane %v822, %v831
    %v833 = vlaneseq
    %v834 = vshrl.u32 %v833, 7
    %v835 = vsub.s32 0, %v834
    %v836 = vrot.slane %v823, %v835
    %v837 = vlaneseq
    %v838 = vshrl.u32 %v837, 7
    %v839 = vsub.s32 0, %v838
    %v840 = vrot.slane %v824, %v839
    %v845 = vsub.f32 %v828, %v797
    %v846 = vsub.f32 %v832, %v797
    %v847 = vsub.f32 %v836, %v797
    %v848 = vsub.f32 %v840, %v797
    %v851 = vunpack.c.l.s4 1966171168
    %v852 = vunpack.c.0.s8 %v851
    %v853 = vlaneseq
    %v854 = vshrl.u32 %v853, 7
    %v855 = vsub.s32 %v852, %v854
    %v856 = vrot.slane %v799, %v855
    %v857 = vcombine.high %v856, %v856
    %v859 = vunpack.c.l.s4 1966171168
    %v860 = vunpack.c.0.s8 %v859
    %v861 = vlaneseq
    %v862 = vshrl.u32 %v861, 7
    %v863 = vsub.s32 %v860, %v862
    %v864 = vrot.slane %v856, %v863
    %v866 = vunpack.c.l.s4 1966171168
    %v867 = vunpack.c.0.s8 %v866
    %v868 = vlaneseq
    %v869 = vshrl.u32 %v868, 7
    %v870 = vsub.s32 %v867, %v869
    %v871 = vrot.slane %v857, %v870
    %v872 = vcombine.high %v864, %v864
    %v873 = vcombine.high %v871, %v871
    %v874 = vlaneseq
    %v875 = vshrl.u32 %v874, 7
    %v876 = vsub.s32 0, %v875
    %v877 = vrot.slane %v864, %v876
    %v878 = vlaneseq
    %v879 = vshrl.u32 %v878, 7
    %v880 = vsub.s32 0, %v879
    %v881 = vrot.slane %v871, %v880
    %v882 = vlaneseq
    %v883 = vshrl.u32 %v882, 7
    %v884 = vsub.s32 0, %v883
    %v885 = vrot.slane %v872, %v884
    %v886 = vlaneseq
    %v887 = vshrl.u32 %v886, 7
    %v888 = vsub.s32 0, %v887
    %v889 = vrot.slane %v873, %v888
    %v894 = vsub.f32 %v877, %v799
    %v895 = vsub.f32 %v881, %v799
    %v896 = vsub.f32 %v885, %v799
    %v897 = vsub.f32 %v889, %v799
    %v898 = vsub.f32 %v828, %v799
    %v899 = vsub.f32 %v832, %v799
    %v900 = vsub.f32 %v836, %v799
    %v901 = vsub.f32 %v840, %v799
    %v902 = vmul.f32 %v845, %v845
    %v903 = vmul.f32 %v846, %v846
    %v904 = vmul.f32 %v847, %v847
    %v905 = vmul.f32 %v848, %v848
    %v906 = vadd.f32 %v776, %v902
    %v907 = vadd.f32 %v777, %v903
    %v908 = vadd.f32 %v778, %v904
    %v909 = vadd.f32 %v779, %v905
    %v910 = vmul.f32 %v894, %v894
    %v911 = vmul.f32 %v895, %v895
    %v912 = vmul.f32 %v896, %v896
    %v913 = vmul.f32 %v897, %v897
    %v914 = vadd.f32 %v784, %v910
    %v915 = vadd.f32 %v785, %v911
    %v916 = vadd.f32 %v786, %v912
    %v917 = vadd.f32 %v787, %v913
    %v918 = vmul.f32 %v898, %v898
    %v919 = vmul.f32 %v899, %v899
    %v920 = vmul.f32 %v900, %v900
    %v921 = vmul.f32 %v901, %v901
    %v922 = vadd.f32 %v792, %v918
    %v923 = vadd.f32 %v793, %v919
    %v924 = vadd.f32 %v794, %v920
    %v925 = vadd.f32 %v795, %v921
    %s926 = scalar_lea.vmem %s0, 28
    %v927 = vld [vmem:[%s926] sm:$0xf]
    %s928 = scalar_lea.vmem %s1, 28
    %v929 = vld [vmem:[%s928] sm:$0xf]
    %v932 = vunpack.c.l.s4 1966171168
    %v933 = vunpack.c.0.s8 %v932
    %v934 = vlaneseq
    %v935 = vshrl.u32 %v934, 7
    %v936 = vsub.s32 %v933, %v935
    %v937 = vrot.slane %v927, %v936
    %v938 = vcombine.high %v937, %v937
    %v940 = vunpack.c.l.s4 1966171168
    %v941 = vunpack.c.0.s8 %v940
    %v942 = vlaneseq
    %v943 = vshrl.u32 %v942, 7
    %v944 = vsub.s32 %v941, %v943
    %v945 = vrot.slane %v937, %v944
    %v947 = vunpack.c.l.s4 1966171168
    %v948 = vunpack.c.0.s8 %v947
    %v949 = vlaneseq
    %v950 = vshrl.u32 %v949, 7
    %v951 = vsub.s32 %v948, %v950
    %v952 = vrot.slane %v938, %v951
    %v953 = vcombine.high %v945, %v945
    %v954 = vcombine.high %v952, %v952
    %v955 = vlaneseq
    %v956 = vshrl.u32 %v955, 7
    %v957 = vsub.s32 0, %v956
    %v958 = vrot.slane %v945, %v957
    %v959 = vlaneseq
    %v960 = vshrl.u32 %v959, 7
    %v961 = vsub.s32 0, %v960
    %v962 = vrot.slane %v952, %v961
    %v963 = vlaneseq
    %v964 = vshrl.u32 %v963, 7
    %v965 = vsub.s32 0, %v964
    %v966 = vrot.slane %v953, %v965
    %v967 = vlaneseq
    %v968 = vshrl.u32 %v967, 7
    %v969 = vsub.s32 0, %v968
    %v970 = vrot.slane %v954, %v969
    %v975 = vsub.f32 %v958, %v927
    %v976 = vsub.f32 %v962, %v927
    %v977 = vsub.f32 %v966, %v927
    %v978 = vsub.f32 %v970, %v927
    %v981 = vunpack.c.l.s4 1966171168
    %v982 = vunpack.c.0.s8 %v981
    %v983 = vlaneseq
    %v984 = vshrl.u32 %v983, 7
    %v985 = vsub.s32 %v982, %v984
    %v986 = vrot.slane %v929, %v985
    %v987 = vcombine.high %v986, %v986
    %v989 = vunpack.c.l.s4 1966171168
    %v990 = vunpack.c.0.s8 %v989
    %v991 = vlaneseq
    %v992 = vshrl.u32 %v991, 7
    %v993 = vsub.s32 %v990, %v992
    %v994 = vrot.slane %v986, %v993
    %v996 = vunpack.c.l.s4 1966171168
    %v997 = vunpack.c.0.s8 %v996
    %v998 = vlaneseq
    %v999 = vshrl.u32 %v998, 7
    %v1000 = vsub.s32 %v997, %v999
    %v1001 = vrot.slane %v987, %v1000
    %v1002 = vcombine.high %v994, %v994
    %v1003 = vcombine.high %v1001, %v1001
    %v1004 = vlaneseq
    %v1005 = vshrl.u32 %v1004, 7
    %v1006 = vsub.s32 0, %v1005
    %v1007 = vrot.slane %v994, %v1006
    %v1008 = vlaneseq
    %v1009 = vshrl.u32 %v1008, 7
    %v1010 = vsub.s32 0, %v1009
    %v1011 = vrot.slane %v1001, %v1010
    %v1012 = vlaneseq
    %v1013 = vshrl.u32 %v1012, 7
    %v1014 = vsub.s32 0, %v1013
    %v1015 = vrot.slane %v1002, %v1014
    %v1016 = vlaneseq
    %v1017 = vshrl.u32 %v1016, 7
    %v1018 = vsub.s32 0, %v1017
    %v1019 = vrot.slane %v1003, %v1018
    %v1024 = vsub.f32 %v1007, %v929
    %v1025 = vsub.f32 %v1011, %v929
    %v1026 = vsub.f32 %v1015, %v929
    %v1027 = vsub.f32 %v1019, %v929
    %v1028 = vsub.f32 %v958, %v929
    %v1029 = vsub.f32 %v962, %v929
    %v1030 = vsub.f32 %v966, %v929
    %v1031 = vsub.f32 %v970, %v929
    %v1032 = vmul.f32 %v975, %v975
    %v1033 = vmul.f32 %v976, %v976
    %v1034 = vmul.f32 %v977, %v977
    %v1035 = vmul.f32 %v978, %v978
    %v1036 = vadd.f32 %v906, %v1032
    %v1037 = vadd.f32 %v907, %v1033
    %v1038 = vadd.f32 %v908, %v1034
    %v1039 = vadd.f32 %v909, %v1035
    %v1040 = vmul.f32 %v1024, %v1024
    %v1041 = vmul.f32 %v1025, %v1025
    %v1042 = vmul.f32 %v1026, %v1026
    %v1043 = vmul.f32 %v1027, %v1027
    %v1044 = vadd.f32 %v914, %v1040
    %v1045 = vadd.f32 %v915, %v1041
    %v1046 = vadd.f32 %v916, %v1042
    %v1047 = vadd.f32 %v917, %v1043
    %v1048 = vmul.f32 %v1028, %v1028
    %v1049 = vmul.f32 %v1029, %v1029
    %v1050 = vmul.f32 %v1030, %v1030
    %v1051 = vmul.f32 %v1031, %v1031
    %v1052 = vadd.f32 %v922, %v1048
    %v1053 = vadd.f32 %v923, %v1049
    %v1054 = vadd.f32 %v924, %v1050
    %v1055 = vadd.f32 %v925, %v1051
    %s1056 = scalar_lea.vmem %s0, 32
    %v1057 = vld [vmem:[%s1056] sm:$0xf]
    %s1058 = scalar_lea.vmem %s1, 32
    %v1059 = vld [vmem:[%s1058] sm:$0xf]
    %v1062 = vunpack.c.l.s4 1966171168
    %v1063 = vunpack.c.0.s8 %v1062
    %v1064 = vlaneseq
    %v1065 = vshrl.u32 %v1064, 7
    %v1066 = vsub.s32 %v1063, %v1065
    %v1067 = vrot.slane %v1057, %v1066
    %v1068 = vcombine.high %v1067, %v1067
    %v1070 = vunpack.c.l.s4 1966171168
    %v1071 = vunpack.c.0.s8 %v1070
    %v1072 = vlaneseq
    %v1073 = vshrl.u32 %v1072, 7
    %v1074 = vsub.s32 %v1071, %v1073
    %v1075 = vrot.slane %v1067, %v1074
    %v1077 = vunpack.c.l.s4 1966171168
    %v1078 = vunpack.c.0.s8 %v1077
    %v1079 = vlaneseq
    %v1080 = vshrl.u32 %v1079, 7
    %v1081 = vsub.s32 %v1078, %v1080
    %v1082 = vrot.slane %v1068, %v1081
    %v1083 = vcombine.high %v1075, %v1075
    %v1084 = vcombine.high %v1082, %v1082
    %v1085 = vlaneseq
    %v1086 = vshrl.u32 %v1085, 7
    %v1087 = vsub.s32 0, %v1086
    %v1088 = vrot.slane %v1075, %v1087
    %v1089 = vlaneseq
    %v1090 = vshrl.u32 %v1089, 7
    %v1091 = vsub.s32 0, %v1090
    %v1092 = vrot.slane %v1082, %v1091
    %v1093 = vlaneseq
    %v1094 = vshrl.u32 %v1093, 7
    %v1095 = vsub.s32 0, %v1094
    %v1096 = vrot.slane %v1083, %v1095
    %v1097 = vlaneseq
    %v1098 = vshrl.u32 %v1097, 7
    %v1099 = vsub.s32 0, %v1098
    %v1100 = vrot.slane %v1084, %v1099
    %v1105 = vsub.f32 %v1088, %v1057
    %v1106 = vsub.f32 %v1092, %v1057
    %v1107 = vsub.f32 %v1096, %v1057
    %v1108 = vsub.f32 %v1100, %v1057
    %v1111 = vunpack.c.l.s4 1966171168
    %v1112 = vunpack.c.0.s8 %v1111
    %v1113 = vlaneseq
    %v1114 = vshrl.u32 %v1113, 7
    %v1115 = vsub.s32 %v1112, %v1114
    %v1116 = vrot.slane %v1059, %v1115
    %v1117 = vcombine.high %v1116, %v1116
    %v1119 = vunpack.c.l.s4 1966171168
    %v1120 = vunpack.c.0.s8 %v1119
    %v1121 = vlaneseq
    %v1122 = vshrl.u32 %v1121, 7
    %v1123 = vsub.s32 %v1120, %v1122
    %v1124 = vrot.slane %v1116, %v1123
    %v1126 = vunpack.c.l.s4 1966171168
    %v1127 = vunpack.c.0.s8 %v1126
    %v1128 = vlaneseq
    %v1129 = vshrl.u32 %v1128, 7
    %v1130 = vsub.s32 %v1127, %v1129
    %v1131 = vrot.slane %v1117, %v1130
    %v1132 = vcombine.high %v1124, %v1124
    %v1133 = vcombine.high %v1131, %v1131
    %v1134 = vlaneseq
    %v1135 = vshrl.u32 %v1134, 7
    %v1136 = vsub.s32 0, %v1135
    %v1137 = vrot.slane %v1124, %v1136
    %v1138 = vlaneseq
    %v1139 = vshrl.u32 %v1138, 7
    %v1140 = vsub.s32 0, %v1139
    %v1141 = vrot.slane %v1131, %v1140
    %v1142 = vlaneseq
    %v1143 = vshrl.u32 %v1142, 7
    %v1144 = vsub.s32 0, %v1143
    %v1145 = vrot.slane %v1132, %v1144
    %v1146 = vlaneseq
    %v1147 = vshrl.u32 %v1146, 7
    %v1148 = vsub.s32 0, %v1147
    %v1149 = vrot.slane %v1133, %v1148
    %v1154 = vsub.f32 %v1137, %v1059
    %v1155 = vsub.f32 %v1141, %v1059
    %v1156 = vsub.f32 %v1145, %v1059
    %v1157 = vsub.f32 %v1149, %v1059
    %v1158 = vsub.f32 %v1088, %v1059
    %v1159 = vsub.f32 %v1092, %v1059
    %v1160 = vsub.f32 %v1096, %v1059
    %v1161 = vsub.f32 %v1100, %v1059
    %v1162 = vmul.f32 %v1105, %v1105
    %v1163 = vmul.f32 %v1106, %v1106
    %v1164 = vmul.f32 %v1107, %v1107
    %v1165 = vmul.f32 %v1108, %v1108
    %v1166 = vadd.f32 %v1036, %v1162
    %v1167 = vadd.f32 %v1037, %v1163
    %v1168 = vadd.f32 %v1038, %v1164
    %v1169 = vadd.f32 %v1039, %v1165
    %v1170 = vmul.f32 %v1154, %v1154
    %v1171 = vmul.f32 %v1155, %v1155
    %v1172 = vmul.f32 %v1156, %v1156
    %v1173 = vmul.f32 %v1157, %v1157
    %v1174 = vadd.f32 %v1044, %v1170
    %v1175 = vadd.f32 %v1045, %v1171
    %v1176 = vadd.f32 %v1046, %v1172
    %v1177 = vadd.f32 %v1047, %v1173
    %v1178 = vmul.f32 %v1158, %v1158
    %v1179 = vmul.f32 %v1159, %v1159
    %v1180 = vmul.f32 %v1160, %v1160
    %v1181 = vmul.f32 %v1161, %v1161
    %v1182 = vadd.f32 %v1052, %v1178
    %v1183 = vadd.f32 %v1053, %v1179
    %v1184 = vadd.f32 %v1054, %v1180
    %v1185 = vadd.f32 %v1055, %v1181
    %s1186 = scalar_lea.vmem %s0, 36
    %v1187 = vld [vmem:[%s1186] sm:$0xf]
    %s1188 = scalar_lea.vmem %s1, 36
    %v1189 = vld [vmem:[%s1188] sm:$0xf]
    %v1192 = vunpack.c.l.s4 1966171168
    %v1193 = vunpack.c.0.s8 %v1192
    %v1194 = vlaneseq
    %v1195 = vshrl.u32 %v1194, 7
    %v1196 = vsub.s32 %v1193, %v1195
    %v1197 = vrot.slane %v1187, %v1196
    %v1198 = vcombine.high %v1197, %v1197
    %v1200 = vunpack.c.l.s4 1966171168
    %v1201 = vunpack.c.0.s8 %v1200
    %v1202 = vlaneseq
    %v1203 = vshrl.u32 %v1202, 7
    %v1204 = vsub.s32 %v1201, %v1203
    %v1205 = vrot.slane %v1197, %v1204
    %v1207 = vunpack.c.l.s4 1966171168
    %v1208 = vunpack.c.0.s8 %v1207
    %v1209 = vlaneseq
    %v1210 = vshrl.u32 %v1209, 7
    %v1211 = vsub.s32 %v1208, %v1210
    %v1212 = vrot.slane %v1198, %v1211
    %v1213 = vcombine.high %v1205, %v1205
    %v1214 = vcombine.high %v1212, %v1212
    %v1215 = vlaneseq
    %v1216 = vshrl.u32 %v1215, 7
    %v1217 = vsub.s32 0, %v1216
    %v1218 = vrot.slane %v1205, %v1217
    %v1219 = vlaneseq
    %v1220 = vshrl.u32 %v1219, 7
    %v1221 = vsub.s32 0, %v1220
    %v1222 = vrot.slane %v1212, %v1221
    %v1223 = vlaneseq
    %v1224 = vshrl.u32 %v1223, 7
    %v1225 = vsub.s32 0, %v1224
    %v1226 = vrot.slane %v1213, %v1225
    %v1227 = vlaneseq
    %v1228 = vshrl.u32 %v1227, 7
    %v1229 = vsub.s32 0, %v1228
    %v1230 = vrot.slane %v1214, %v1229
    %v1235 = vsub.f32 %v1218, %v1187
    %v1236 = vsub.f32 %v1222, %v1187
    %v1237 = vsub.f32 %v1226, %v1187
    %v1238 = vsub.f32 %v1230, %v1187
    %v1241 = vunpack.c.l.s4 1966171168
    %v1242 = vunpack.c.0.s8 %v1241
    %v1243 = vlaneseq
    %v1244 = vshrl.u32 %v1243, 7
    %v1245 = vsub.s32 %v1242, %v1244
    %v1246 = vrot.slane %v1189, %v1245
    %v1247 = vcombine.high %v1246, %v1246
    %v1249 = vunpack.c.l.s4 1966171168
    %v1250 = vunpack.c.0.s8 %v1249
    %v1251 = vlaneseq
    %v1252 = vshrl.u32 %v1251, 7
    %v1253 = vsub.s32 %v1250, %v1252
    %v1254 = vrot.slane %v1246, %v1253
    %v1256 = vunpack.c.l.s4 1966171168
    %v1257 = vunpack.c.0.s8 %v1256
    %v1258 = vlaneseq
    %v1259 = vshrl.u32 %v1258, 7
    %v1260 = vsub.s32 %v1257, %v1259
    %v1261 = vrot.slane %v1247, %v1260
    %v1262 = vcombine.high %v1254, %v1254
    %v1263 = vcombine.high %v1261, %v1261
    %v1264 = vlaneseq
    %v1265 = vshrl.u32 %v1264, 7
    %v1266 = vsub.s32 0, %v1265
    %v1267 = vrot.slane %v1254, %v1266
    %v1268 = vlaneseq
    %v1269 = vshrl.u32 %v1268, 7
    %v1270 = vsub.s32 0, %v1269
    %v1271 = vrot.slane %v1261, %v1270
    %v1272 = vlaneseq
    %v1273 = vshrl.u32 %v1272, 7
    %v1274 = vsub.s32 0, %v1273
    %v1275 = vrot.slane %v1262, %v1274
    %v1276 = vlaneseq
    %v1277 = vshrl.u32 %v1276, 7
    %v1278 = vsub.s32 0, %v1277
    %v1279 = vrot.slane %v1263, %v1278
    %v1284 = vsub.f32 %v1267, %v1189
    %v1285 = vsub.f32 %v1271, %v1189
    %v1286 = vsub.f32 %v1275, %v1189
    %v1287 = vsub.f32 %v1279, %v1189
    %v1288 = vsub.f32 %v1218, %v1189
    %v1289 = vsub.f32 %v1222, %v1189
    %v1290 = vsub.f32 %v1226, %v1189
    %v1291 = vsub.f32 %v1230, %v1189
    %v1292 = vmul.f32 %v1235, %v1235
    %v1293 = vmul.f32 %v1236, %v1236
    %v1294 = vmul.f32 %v1237, %v1237
    %v1295 = vmul.f32 %v1238, %v1238
    %v1296 = vadd.f32 %v1166, %v1292
    %v1297 = vadd.f32 %v1167, %v1293
    %v1298 = vadd.f32 %v1168, %v1294
    %v1299 = vadd.f32 %v1169, %v1295
    %v1300 = vmul.f32 %v1284, %v1284
    %v1301 = vmul.f32 %v1285, %v1285
    %v1302 = vmul.f32 %v1286, %v1286
    %v1303 = vmul.f32 %v1287, %v1287
    %v1304 = vadd.f32 %v1174, %v1300
    %v1305 = vadd.f32 %v1175, %v1301
    %v1306 = vadd.f32 %v1176, %v1302
    %v1307 = vadd.f32 %v1177, %v1303
    %v1308 = vmul.f32 %v1288, %v1288
    %v1309 = vmul.f32 %v1289, %v1289
    %v1310 = vmul.f32 %v1290, %v1290
    %v1311 = vmul.f32 %v1291, %v1291
    %v1312 = vadd.f32 %v1182, %v1308
    %v1313 = vadd.f32 %v1183, %v1309
    %v1314 = vadd.f32 %v1184, %v1310
    %v1315 = vadd.f32 %v1185, %v1311
    %s1316 = scalar_lea.vmem %s0, 40
    %v1317 = vld [vmem:[%s1316] sm:$0xf]
    %s1318 = scalar_lea.vmem %s1, 40
    %v1319 = vld [vmem:[%s1318] sm:$0xf]
    %v1322 = vunpack.c.l.s4 1966171168
    %v1323 = vunpack.c.0.s8 %v1322
    %v1324 = vlaneseq
    %v1325 = vshrl.u32 %v1324, 7
    %v1326 = vsub.s32 %v1323, %v1325
    %v1327 = vrot.slane %v1317, %v1326
    %v1328 = vcombine.high %v1327, %v1327
    %v1330 = vunpack.c.l.s4 1966171168
    %v1331 = vunpack.c.0.s8 %v1330
    %v1332 = vlaneseq
    %v1333 = vshrl.u32 %v1332, 7
    %v1334 = vsub.s32 %v1331, %v1333
    %v1335 = vrot.slane %v1327, %v1334
    %v1337 = vunpack.c.l.s4 1966171168
    %v1338 = vunpack.c.0.s8 %v1337
    %v1339 = vlaneseq
    %v1340 = vshrl.u32 %v1339, 7
    %v1341 = vsub.s32 %v1338, %v1340
    %v1342 = vrot.slane %v1328, %v1341
    %v1343 = vcombine.high %v1335, %v1335
    %v1344 = vcombine.high %v1342, %v1342
    %v1345 = vlaneseq
    %v1346 = vshrl.u32 %v1345, 7
    %v1347 = vsub.s32 0, %v1346
    %v1348 = vrot.slane %v1335, %v1347
    %v1349 = vlaneseq
    %v1350 = vshrl.u32 %v1349, 7
    %v1351 = vsub.s32 0, %v1350
    %v1352 = vrot.slane %v1342, %v1351
    %v1353 = vlaneseq
    %v1354 = vshrl.u32 %v1353, 7
    %v1355 = vsub.s32 0, %v1354
    %v1356 = vrot.slane %v1343, %v1355
    %v1357 = vlaneseq
    %v1358 = vshrl.u32 %v1357, 7
    %v1359 = vsub.s32 0, %v1358
    %v1360 = vrot.slane %v1344, %v1359
    %v1365 = vsub.f32 %v1348, %v1317
    %v1366 = vsub.f32 %v1352, %v1317
    %v1367 = vsub.f32 %v1356, %v1317
    %v1368 = vsub.f32 %v1360, %v1317
    %v1371 = vunpack.c.l.s4 1966171168
    %v1372 = vunpack.c.0.s8 %v1371
    %v1373 = vlaneseq
    %v1374 = vshrl.u32 %v1373, 7
    %v1375 = vsub.s32 %v1372, %v1374
    %v1376 = vrot.slane %v1319, %v1375
    %v1377 = vcombine.high %v1376, %v1376
    %v1379 = vunpack.c.l.s4 1966171168
    %v1380 = vunpack.c.0.s8 %v1379
    %v1381 = vlaneseq
    %v1382 = vshrl.u32 %v1381, 7
    %v1383 = vsub.s32 %v1380, %v1382
    %v1384 = vrot.slane %v1376, %v1383
    %v1386 = vunpack.c.l.s4 1966171168
    %v1387 = vunpack.c.0.s8 %v1386
    %v1388 = vlaneseq
    %v1389 = vshrl.u32 %v1388, 7
    %v1390 = vsub.s32 %v1387, %v1389
    %v1391 = vrot.slane %v1377, %v1390
    %v1392 = vcombine.high %v1384, %v1384
    %v1393 = vcombine.high %v1391, %v1391
    %v1394 = vlaneseq
    %v1395 = vshrl.u32 %v1394, 7
    %v1396 = vsub.s32 0, %v1395
    %v1397 = vrot.slane %v1384, %v1396
    %v1398 = vlaneseq
    %v1399 = vshrl.u32 %v1398, 7
    %v1400 = vsub.s32 0, %v1399
    %v1401 = vrot.slane %v1391, %v1400
    %v1402 = vlaneseq
    %v1403 = vshrl.u32 %v1402, 7
    %v1404 = vsub.s32 0, %v1403
    %v1405 = vrot.slane %v1392, %v1404
    %v1406 = vlaneseq
    %v1407 = vshrl.u32 %v1406, 7
    %v1408 = vsub.s32 0, %v1407
    %v1409 = vrot.slane %v1393, %v1408
    %v1414 = vsub.f32 %v1397, %v1319
    %v1415 = vsub.f32 %v1401, %v1319
    %v1416 = vsub.f32 %v1405, %v1319
    %v1417 = vsub.f32 %v1409, %v1319
    %v1418 = vsub.f32 %v1348, %v1319
    %v1419 = vsub.f32 %v1352, %v1319
    %v1420 = vsub.f32 %v1356, %v1319
    %v1421 = vsub.f32 %v1360, %v1319
    %v1422 = vmul.f32 %v1365, %v1365
    %v1423 = vmul.f32 %v1366, %v1366
    %v1424 = vmul.f32 %v1367, %v1367
    %v1425 = vmul.f32 %v1368, %v1368
    %v1426 = vadd.f32 %v1296, %v1422
    %v1427 = vadd.f32 %v1297, %v1423
    %v1428 = vadd.f32 %v1298, %v1424
    %v1429 = vadd.f32 %v1299, %v1425
    %v1430 = vmul.f32 %v1414, %v1414
    %v1431 = vmul.f32 %v1415, %v1415
    %v1432 = vmul.f32 %v1416, %v1416
    %v1433 = vmul.f32 %v1417, %v1417
    %v1434 = vadd.f32 %v1304, %v1430
    %v1435 = vadd.f32 %v1305, %v1431
    %v1436 = vadd.f32 %v1306, %v1432
    %v1437 = vadd.f32 %v1307, %v1433
    %v1438 = vmul.f32 %v1418, %v1418
    %v1439 = vmul.f32 %v1419, %v1419
    %v1440 = vmul.f32 %v1420, %v1420
    %v1441 = vmul.f32 %v1421, %v1421
    %v1442 = vadd.f32 %v1312, %v1438
    %v1443 = vadd.f32 %v1313, %v1439
    %v1444 = vadd.f32 %v1314, %v1440
    %v1445 = vadd.f32 %v1315, %v1441
    %s1446 = scalar_lea.vmem %s0, 44
    %v1447 = vld [vmem:[%s1446] sm:$0xf]
    %s1448 = scalar_lea.vmem %s1, 44
    %v1449 = vld [vmem:[%s1448] sm:$0xf]
    %v1452 = vunpack.c.l.s4 1966171168
    %v1453 = vunpack.c.0.s8 %v1452
    %v1454 = vlaneseq
    %v1455 = vshrl.u32 %v1454, 7
    %v1456 = vsub.s32 %v1453, %v1455
    %v1457 = vrot.slane %v1447, %v1456
    %v1458 = vcombine.high %v1457, %v1457
    %v1460 = vunpack.c.l.s4 1966171168
    %v1461 = vunpack.c.0.s8 %v1460
    %v1462 = vlaneseq
    %v1463 = vshrl.u32 %v1462, 7
    %v1464 = vsub.s32 %v1461, %v1463
    %v1465 = vrot.slane %v1457, %v1464
    %v1467 = vunpack.c.l.s4 1966171168
    %v1468 = vunpack.c.0.s8 %v1467
    %v1469 = vlaneseq
    %v1470 = vshrl.u32 %v1469, 7
    %v1471 = vsub.s32 %v1468, %v1470
    %v1472 = vrot.slane %v1458, %v1471
    %v1473 = vcombine.high %v1465, %v1465
    %v1474 = vcombine.high %v1472, %v1472
    %v1475 = vlaneseq
    %v1476 = vshrl.u32 %v1475, 7
    %v1477 = vsub.s32 0, %v1476
    %v1478 = vrot.slane %v1465, %v1477
    %v1479 = vlaneseq
    %v1480 = vshrl.u32 %v1479, 7
    %v1481 = vsub.s32 0, %v1480
    %v1482 = vrot.slane %v1472, %v1481
    %v1483 = vlaneseq
    %v1484 = vshrl.u32 %v1483, 7
    %v1485 = vsub.s32 0, %v1484
    %v1486 = vrot.slane %v1473, %v1485
    %v1487 = vlaneseq
    %v1488 = vshrl.u32 %v1487, 7
    %v1489 = vsub.s32 0, %v1488
    %v1490 = vrot.slane %v1474, %v1489
    %v1495 = vsub.f32 %v1478, %v1447
    %v1496 = vsub.f32 %v1482, %v1447
    %v1497 = vsub.f32 %v1486, %v1447
    %v1498 = vsub.f32 %v1490, %v1447
    %v1501 = vunpack.c.l.s4 1966171168
    %v1502 = vunpack.c.0.s8 %v1501
    %v1503 = vlaneseq
    %v1504 = vshrl.u32 %v1503, 7
    %v1505 = vsub.s32 %v1502, %v1504
    %v1506 = vrot.slane %v1449, %v1505
    %v1507 = vcombine.high %v1506, %v1506
    %v1509 = vunpack.c.l.s4 1966171168
    %v1510 = vunpack.c.0.s8 %v1509
    %v1511 = vlaneseq
    %v1512 = vshrl.u32 %v1511, 7
    %v1513 = vsub.s32 %v1510, %v1512
    %v1514 = vrot.slane %v1506, %v1513
    %v1516 = vunpack.c.l.s4 1966171168
    %v1517 = vunpack.c.0.s8 %v1516
    %v1518 = vlaneseq
    %v1519 = vshrl.u32 %v1518, 7
    %v1520 = vsub.s32 %v1517, %v1519
    %v1521 = vrot.slane %v1507, %v1520
    %v1522 = vcombine.high %v1514, %v1514
    %v1523 = vcombine.high %v1521, %v1521
    %v1524 = vlaneseq
    %v1525 = vshrl.u32 %v1524, 7
    %v1526 = vsub.s32 0, %v1525
    %v1527 = vrot.slane %v1514, %v1526
    %v1528 = vlaneseq
    %v1529 = vshrl.u32 %v1528, 7
    %v1530 = vsub.s32 0, %v1529
    %v1531 = vrot.slane %v1521, %v1530
    %v1532 = vlaneseq
    %v1533 = vshrl.u32 %v1532, 7
    %v1534 = vsub.s32 0, %v1533
    %v1535 = vrot.slane %v1522, %v1534
    %v1536 = vlaneseq
    %v1537 = vshrl.u32 %v1536, 7
    %v1538 = vsub.s32 0, %v1537
    %v1539 = vrot.slane %v1523, %v1538
    %v1544 = vsub.f32 %v1527, %v1449
    %v1545 = vsub.f32 %v1531, %v1449
    %v1546 = vsub.f32 %v1535, %v1449
    %v1547 = vsub.f32 %v1539, %v1449
    %v1548 = vsub.f32 %v1478, %v1449
    %v1549 = vsub.f32 %v1482, %v1449
    %v1550 = vsub.f32 %v1486, %v1449
    %v1551 = vsub.f32 %v1490, %v1449
    %v1552 = vmul.f32 %v1495, %v1495
    %v1553 = vmul.f32 %v1496, %v1496
    %v1554 = vmul.f32 %v1497, %v1497
    %v1555 = vmul.f32 %v1498, %v1498
    %v1556 = vadd.f32 %v1426, %v1552
    %v1557 = vadd.f32 %v1427, %v1553
    %v1558 = vadd.f32 %v1428, %v1554
    %v1559 = vadd.f32 %v1429, %v1555
    %v1560 = vmul.f32 %v1544, %v1544
    %v1561 = vmul.f32 %v1545, %v1545
    %v1562 = vmul.f32 %v1546, %v1546
    %v1563 = vmul.f32 %v1547, %v1547
    %v1564 = vadd.f32 %v1434, %v1560
    %v1565 = vadd.f32 %v1435, %v1561
    %v1566 = vadd.f32 %v1436, %v1562
    %v1567 = vadd.f32 %v1437, %v1563
    %v1568 = vmul.f32 %v1548, %v1548
    %v1569 = vmul.f32 %v1549, %v1549
    %v1570 = vmul.f32 %v1550, %v1550
    %v1571 = vmul.f32 %v1551, %v1551
    %v1572 = vadd.f32 %v1442, %v1568
    %v1573 = vadd.f32 %v1443, %v1569
    %v1574 = vadd.f32 %v1444, %v1570
    %v1575 = vadd.f32 %v1445, %v1571
    %s1576 = scalar_lea.vmem %s0, 48
    %v1577 = vld [vmem:[%s1576] sm:$0xf]
    %s1578 = scalar_lea.vmem %s1, 48
    %v1579 = vld [vmem:[%s1578] sm:$0xf]
    %v1582 = vunpack.c.l.s4 1966171168
    %v1583 = vunpack.c.0.s8 %v1582
    %v1584 = vlaneseq
    %v1585 = vshrl.u32 %v1584, 7
    %v1586 = vsub.s32 %v1583, %v1585
    %v1587 = vrot.slane %v1577, %v1586
    %v1588 = vcombine.high %v1587, %v1587
    %v1590 = vunpack.c.l.s4 1966171168
    %v1591 = vunpack.c.0.s8 %v1590
    %v1592 = vlaneseq
    %v1593 = vshrl.u32 %v1592, 7
    %v1594 = vsub.s32 %v1591, %v1593
    %v1595 = vrot.slane %v1587, %v1594
    %v1597 = vunpack.c.l.s4 1966171168
    %v1598 = vunpack.c.0.s8 %v1597
    %v1599 = vlaneseq
    %v1600 = vshrl.u32 %v1599, 7
    %v1601 = vsub.s32 %v1598, %v1600
    %v1602 = vrot.slane %v1588, %v1601
    %v1603 = vcombine.high %v1595, %v1595
    %v1604 = vcombine.high %v1602, %v1602
    %v1605 = vlaneseq
    %v1606 = vshrl.u32 %v1605, 7
    %v1607 = vsub.s32 0, %v1606
    %v1608 = vrot.slane %v1595, %v1607
    %v1609 = vlaneseq
    %v1610 = vshrl.u32 %v1609, 7
    %v1611 = vsub.s32 0, %v1610
    %v1612 = vrot.slane %v1602, %v1611
    %v1613 = vlaneseq
    %v1614 = vshrl.u32 %v1613, 7
    %v1615 = vsub.s32 0, %v1614
    %v1616 = vrot.slane %v1603, %v1615
    %v1617 = vlaneseq
    %v1618 = vshrl.u32 %v1617, 7
    %v1619 = vsub.s32 0, %v1618
    %v1620 = vrot.slane %v1604, %v1619
    %v1625 = vsub.f32 %v1608, %v1577
    %v1626 = vsub.f32 %v1612, %v1577
    %v1627 = vsub.f32 %v1616, %v1577
    %v1628 = vsub.f32 %v1620, %v1577
    %v1631 = vunpack.c.l.s4 1966171168
    %v1632 = vunpack.c.0.s8 %v1631
    %v1633 = vlaneseq
    %v1634 = vshrl.u32 %v1633, 7
    %v1635 = vsub.s32 %v1632, %v1634
    %v1636 = vrot.slane %v1579, %v1635
    %v1637 = vcombine.high %v1636, %v1636
    %v1639 = vunpack.c.l.s4 1966171168
    %v1640 = vunpack.c.0.s8 %v1639
    %v1641 = vlaneseq
    %v1642 = vshrl.u32 %v1641, 7
    %v1643 = vsub.s32 %v1640, %v1642
    %v1644 = vrot.slane %v1636, %v1643
    %v1646 = vunpack.c.l.s4 1966171168
    %v1647 = vunpack.c.0.s8 %v1646
    %v1648 = vlaneseq
    %v1649 = vshrl.u32 %v1648, 7
    %v1650 = vsub.s32 %v1647, %v1649
    %v1651 = vrot.slane %v1637, %v1650
    %v1652 = vcombine.high %v1644, %v1644
    %v1653 = vcombine.high %v1651, %v1651
    %v1654 = vlaneseq
    %v1655 = vshrl.u32 %v1654, 7
    %v1656 = vsub.s32 0, %v1655
    %v1657 = vrot.slane %v1644, %v1656
    %v1658 = vlaneseq
    %v1659 = vshrl.u32 %v1658, 7
    %v1660 = vsub.s32 0, %v1659
    %v1661 = vrot.slane %v1651, %v1660
    %v1662 = vlaneseq
    %v1663 = vshrl.u32 %v1662, 7
    %v1664 = vsub.s32 0, %v1663
    %v1665 = vrot.slane %v1652, %v1664
    %v1666 = vlaneseq
    %v1667 = vshrl.u32 %v1666, 7
    %v1668 = vsub.s32 0, %v1667
    %v1669 = vrot.slane %v1653, %v1668
    %v1674 = vsub.f32 %v1657, %v1579
    %v1675 = vsub.f32 %v1661, %v1579
    %v1676 = vsub.f32 %v1665, %v1579
    %v1677 = vsub.f32 %v1669, %v1579
    %v1678 = vsub.f32 %v1608, %v1579
    %v1679 = vsub.f32 %v1612, %v1579
    %v1680 = vsub.f32 %v1616, %v1579
    %v1681 = vsub.f32 %v1620, %v1579
    %v1682 = vmul.f32 %v1625, %v1625
    %v1683 = vmul.f32 %v1626, %v1626
    %v1684 = vmul.f32 %v1627, %v1627
    %v1685 = vmul.f32 %v1628, %v1628
    %v1686 = vadd.f32 %v1556, %v1682
    %v1687 = vadd.f32 %v1557, %v1683
    %v1688 = vadd.f32 %v1558, %v1684
    %v1689 = vadd.f32 %v1559, %v1685
    %v1690 = vmul.f32 %v1674, %v1674
    %v1691 = vmul.f32 %v1675, %v1675
    %v1692 = vmul.f32 %v1676, %v1676
    %v1693 = vmul.f32 %v1677, %v1677
    %v1694 = vadd.f32 %v1564, %v1690
    %v1695 = vadd.f32 %v1565, %v1691
    %v1696 = vadd.f32 %v1566, %v1692
    %v1697 = vadd.f32 %v1567, %v1693
    %v1698 = vmul.f32 %v1678, %v1678
    %v1699 = vmul.f32 %v1679, %v1679
    %v1700 = vmul.f32 %v1680, %v1680
    %v1701 = vmul.f32 %v1681, %v1681
    %v1702 = vadd.f32 %v1572, %v1698
    %v1703 = vadd.f32 %v1573, %v1699
    %v1704 = vadd.f32 %v1574, %v1700
    %v1705 = vadd.f32 %v1575, %v1701
    %s1706 = scalar_lea.vmem %s0, 52
    %v1707 = vld [vmem:[%s1706] sm:$0xf]
    %s1708 = scalar_lea.vmem %s1, 52
    %v1709 = vld [vmem:[%s1708] sm:$0xf]
    %v1712 = vunpack.c.l.s4 1966171168
    %v1713 = vunpack.c.0.s8 %v1712
    %v1714 = vlaneseq
    %v1715 = vshrl.u32 %v1714, 7
    %v1716 = vsub.s32 %v1713, %v1715
    %v1717 = vrot.slane %v1707, %v1716
    %v1718 = vcombine.high %v1717, %v1717
    %v1720 = vunpack.c.l.s4 1966171168
    %v1721 = vunpack.c.0.s8 %v1720
    %v1722 = vlaneseq
    %v1723 = vshrl.u32 %v1722, 7
    %v1724 = vsub.s32 %v1721, %v1723
    %v1725 = vrot.slane %v1717, %v1724
    %v1727 = vunpack.c.l.s4 1966171168
    %v1728 = vunpack.c.0.s8 %v1727
    %v1729 = vlaneseq
    %v1730 = vshrl.u32 %v1729, 7
    %v1731 = vsub.s32 %v1728, %v1730
    %v1732 = vrot.slane %v1718, %v1731
    %v1733 = vcombine.high %v1725, %v1725
    %v1734 = vcombine.high %v1732, %v1732
    %v1735 = vlaneseq
    %v1736 = vshrl.u32 %v1735, 7
    %v1737 = vsub.s32 0, %v1736
    %v1738 = vrot.slane %v1725, %v1737
    %v1739 = vlaneseq
    %v1740 = vshrl.u32 %v1739, 7
    %v1741 = vsub.s32 0, %v1740
    %v1742 = vrot.slane %v1732, %v1741
    %v1743 = vlaneseq
    %v1744 = vshrl.u32 %v1743, 7
    %v1745 = vsub.s32 0, %v1744
    %v1746 = vrot.slane %v1733, %v1745
    %v1747 = vlaneseq
    %v1748 = vshrl.u32 %v1747, 7
    %v1749 = vsub.s32 0, %v1748
    %v1750 = vrot.slane %v1734, %v1749
    %v1755 = vsub.f32 %v1738, %v1707
    %v1756 = vsub.f32 %v1742, %v1707
    %v1757 = vsub.f32 %v1746, %v1707
    %v1758 = vsub.f32 %v1750, %v1707
    %v1761 = vunpack.c.l.s4 1966171168
    %v1762 = vunpack.c.0.s8 %v1761
    %v1763 = vlaneseq
    %v1764 = vshrl.u32 %v1763, 7
    %v1765 = vsub.s32 %v1762, %v1764
    %v1766 = vrot.slane %v1709, %v1765
    %v1767 = vcombine.high %v1766, %v1766
    %v1769 = vunpack.c.l.s4 1966171168
    %v1770 = vunpack.c.0.s8 %v1769
    %v1771 = vlaneseq
    %v1772 = vshrl.u32 %v1771, 7
    %v1773 = vsub.s32 %v1770, %v1772
    %v1774 = vrot.slane %v1766, %v1773
    %v1776 = vunpack.c.l.s4 1966171168
    %v1777 = vunpack.c.0.s8 %v1776
    %v1778 = vlaneseq
    %v1779 = vshrl.u32 %v1778, 7
    %v1780 = vsub.s32 %v1777, %v1779
    %v1781 = vrot.slane %v1767, %v1780
    %v1782 = vcombine.high %v1774, %v1774
    %v1783 = vcombine.high %v1781, %v1781
    %v1784 = vlaneseq
    %v1785 = vshrl.u32 %v1784, 7
    %v1786 = vsub.s32 0, %v1785
    %v1787 = vrot.slane %v1774, %v1786
    %v1788 = vlaneseq
    %v1789 = vshrl.u32 %v1788, 7
    %v1790 = vsub.s32 0, %v1789
    %v1791 = vrot.slane %v1781, %v1790
    %v1792 = vlaneseq
    %v1793 = vshrl.u32 %v1792, 7
    %v1794 = vsub.s32 0, %v1793
    %v1795 = vrot.slane %v1782, %v1794
    %v1796 = vlaneseq
    %v1797 = vshrl.u32 %v1796, 7
    %v1798 = vsub.s32 0, %v1797
    %v1799 = vrot.slane %v1783, %v1798
    %v1804 = vsub.f32 %v1787, %v1709
    %v1805 = vsub.f32 %v1791, %v1709
    %v1806 = vsub.f32 %v1795, %v1709
    %v1807 = vsub.f32 %v1799, %v1709
    %v1808 = vsub.f32 %v1738, %v1709
    %v1809 = vsub.f32 %v1742, %v1709
    %v1810 = vsub.f32 %v1746, %v1709
    %v1811 = vsub.f32 %v1750, %v1709
    %v1812 = vmul.f32 %v1755, %v1755
    %v1813 = vmul.f32 %v1756, %v1756
    %v1814 = vmul.f32 %v1757, %v1757
    %v1815 = vmul.f32 %v1758, %v1758
    %v1816 = vadd.f32 %v1686, %v1812
    %v1817 = vadd.f32 %v1687, %v1813
    %v1818 = vadd.f32 %v1688, %v1814
    %v1819 = vadd.f32 %v1689, %v1815
    %v1820 = vmul.f32 %v1804, %v1804
    %v1821 = vmul.f32 %v1805, %v1805
    %v1822 = vmul.f32 %v1806, %v1806
    %v1823 = vmul.f32 %v1807, %v1807
    %v1824 = vadd.f32 %v1694, %v1820
    %v1825 = vadd.f32 %v1695, %v1821
    %v1826 = vadd.f32 %v1696, %v1822
    %v1827 = vadd.f32 %v1697, %v1823
    %v1828 = vmul.f32 %v1808, %v1808
    %v1829 = vmul.f32 %v1809, %v1809
    %v1830 = vmul.f32 %v1810, %v1810
    %v1831 = vmul.f32 %v1811, %v1811
    %v1832 = vadd.f32 %v1702, %v1828
    %v1833 = vadd.f32 %v1703, %v1829
    %v1834 = vadd.f32 %v1704, %v1830
    %v1835 = vadd.f32 %v1705, %v1831
    %s1836 = scalar_lea.vmem %s0, 56
    %v1837 = vld [vmem:[%s1836] sm:$0xf]
    %s1838 = scalar_lea.vmem %s1, 56
    %v1839 = vld [vmem:[%s1838] sm:$0xf]
    %v1842 = vunpack.c.l.s4 1966171168
    %v1843 = vunpack.c.0.s8 %v1842
    %v1844 = vlaneseq
    %v1845 = vshrl.u32 %v1844, 7
    %v1846 = vsub.s32 %v1843, %v1845
    %v1847 = vrot.slane %v1837, %v1846
    %v1848 = vcombine.high %v1847, %v1847
    %v1850 = vunpack.c.l.s4 1966171168
    %v1851 = vunpack.c.0.s8 %v1850
    %v1852 = vlaneseq
    %v1853 = vshrl.u32 %v1852, 7
    %v1854 = vsub.s32 %v1851, %v1853
    %v1855 = vrot.slane %v1847, %v1854
    %v1857 = vunpack.c.l.s4 1966171168
    %v1858 = vunpack.c.0.s8 %v1857
    %v1859 = vlaneseq
    %v1860 = vshrl.u32 %v1859, 7
    %v1861 = vsub.s32 %v1858, %v1860
    %v1862 = vrot.slane %v1848, %v1861
    %v1863 = vcombine.high %v1855, %v1855
    %v1864 = vcombine.high %v1862, %v1862
    %v1865 = vlaneseq
    %v1866 = vshrl.u32 %v1865, 7
    %v1867 = vsub.s32 0, %v1866
    %v1868 = vrot.slane %v1855, %v1867
    %v1869 = vlaneseq
    %v1870 = vshrl.u32 %v1869, 7
    %v1871 = vsub.s32 0, %v1870
    %v1872 = vrot.slane %v1862, %v1871
    %v1873 = vlaneseq
    %v1874 = vshrl.u32 %v1873, 7
    %v1875 = vsub.s32 0, %v1874
    %v1876 = vrot.slane %v1863, %v1875
    %v1877 = vlaneseq
    %v1878 = vshrl.u32 %v1877, 7
    %v1879 = vsub.s32 0, %v1878
    %v1880 = vrot.slane %v1864, %v1879
    %v1885 = vsub.f32 %v1868, %v1837
    %v1886 = vsub.f32 %v1872, %v1837
    %v1887 = vsub.f32 %v1876, %v1837
    %v1888 = vsub.f32 %v1880, %v1837
    %v1891 = vunpack.c.l.s4 1966171168
    %v1892 = vunpack.c.0.s8 %v1891
    %v1893 = vlaneseq
    %v1894 = vshrl.u32 %v1893, 7
    %v1895 = vsub.s32 %v1892, %v1894
    %v1896 = vrot.slane %v1839, %v1895
    %v1897 = vcombine.high %v1896, %v1896
    %v1899 = vunpack.c.l.s4 1966171168
    %v1900 = vunpack.c.0.s8 %v1899
    %v1901 = vlaneseq
    %v1902 = vshrl.u32 %v1901, 7
    %v1903 = vsub.s32 %v1900, %v1902
    %v1904 = vrot.slane %v1896, %v1903
    %v1906 = vunpack.c.l.s4 1966171168
    %v1907 = vunpack.c.0.s8 %v1906
    %v1908 = vlaneseq
    %v1909 = vshrl.u32 %v1908, 7
    %v1910 = vsub.s32 %v1907, %v1909
    %v1911 = vrot.slane %v1897, %v1910
    %v1912 = vcombine.high %v1904, %v1904
    %v1913 = vcombine.high %v1911, %v1911
    %v1914 = vlaneseq
    %v1915 = vshrl.u32 %v1914, 7
    %v1916 = vsub.s32 0, %v1915
    %v1917 = vrot.slane %v1904, %v1916
    %v1918 = vlaneseq
    %v1919 = vshrl.u32 %v1918, 7
    %v1920 = vsub.s32 0, %v1919
    %v1921 = vrot.slane %v1911, %v1920
    %v1922 = vlaneseq
    %v1923 = vshrl.u32 %v1922, 7
    %v1924 = vsub.s32 0, %v1923
    %v1925 = vrot.slane %v1912, %v1924
    %v1926 = vlaneseq
    %v1927 = vshrl.u32 %v1926, 7
    %v1928 = vsub.s32 0, %v1927
    %v1929 = vrot.slane %v1913, %v1928
    %v1934 = vsub.f32 %v1917, %v1839
    %v1935 = vsub.f32 %v1921, %v1839
    %v1936 = vsub.f32 %v1925, %v1839
    %v1937 = vsub.f32 %v1929, %v1839
    %v1938 = vsub.f32 %v1868, %v1839
    %v1939 = vsub.f32 %v1872, %v1839
    %v1940 = vsub.f32 %v1876, %v1839
    %v1941 = vsub.f32 %v1880, %v1839
    %v1942 = vmul.f32 %v1885, %v1885
    %v1943 = vmul.f32 %v1886, %v1886
    %v1944 = vmul.f32 %v1887, %v1887
    %v1945 = vmul.f32 %v1888, %v1888
    %v1946 = vadd.f32 %v1816, %v1942
    %v1947 = vadd.f32 %v1817, %v1943
    %v1948 = vadd.f32 %v1818, %v1944
    %v1949 = vadd.f32 %v1819, %v1945
    %v1950 = vmul.f32 %v1934, %v1934
    %v1951 = vmul.f32 %v1935, %v1935
    %v1952 = vmul.f32 %v1936, %v1936
    %v1953 = vmul.f32 %v1937, %v1937
    %v1954 = vadd.f32 %v1824, %v1950
    %v1955 = vadd.f32 %v1825, %v1951
    %v1956 = vadd.f32 %v1826, %v1952
    %v1957 = vadd.f32 %v1827, %v1953
    %v1958 = vmul.f32 %v1938, %v1938
    %v1959 = vmul.f32 %v1939, %v1939
    %v1960 = vmul.f32 %v1940, %v1940
    %v1961 = vmul.f32 %v1941, %v1941
    %v1962 = vadd.f32 %v1832, %v1958
    %v1963 = vadd.f32 %v1833, %v1959
    %v1964 = vadd.f32 %v1834, %v1960
    %v1965 = vadd.f32 %v1835, %v1961
    %s1966 = scalar_lea.vmem %s0, 60
    %v1967 = vld [vmem:[%s1966] sm:$0xf]
    %s1968 = scalar_lea.vmem %s1, 60
    %v1969 = vld [vmem:[%s1968] sm:$0xf]
    %v1972 = vunpack.c.l.s4 1966171168
    %v1973 = vunpack.c.0.s8 %v1972
    %v1974 = vlaneseq
    %v1975 = vshrl.u32 %v1974, 7
    %v1976 = vsub.s32 %v1973, %v1975
    %v1977 = vrot.slane %v1967, %v1976
    %v1978 = vcombine.high %v1977, %v1977
    %v1980 = vunpack.c.l.s4 1966171168
    %v1981 = vunpack.c.0.s8 %v1980
    %v1982 = vlaneseq
    %v1983 = vshrl.u32 %v1982, 7
    %v1984 = vsub.s32 %v1981, %v1983
    %v1985 = vrot.slane %v1977, %v1984
    %v1987 = vunpack.c.l.s4 1966171168
    %v1988 = vunpack.c.0.s8 %v1987
    %v1989 = vlaneseq
    %v1990 = vshrl.u32 %v1989, 7
    %v1991 = vsub.s32 %v1988, %v1990
    %v1992 = vrot.slane %v1978, %v1991
    %v1993 = vcombine.high %v1985, %v1985
    %v1994 = vcombine.high %v1992, %v1992
    %v1995 = vlaneseq
    %v1996 = vshrl.u32 %v1995, 7
    %v1997 = vsub.s32 0, %v1996
    %v1998 = vrot.slane %v1985, %v1997
    %v1999 = vlaneseq
    %v2000 = vshrl.u32 %v1999, 7
    %v2001 = vsub.s32 0, %v2000
    %v2002 = vrot.slane %v1992, %v2001
    %v2003 = vlaneseq
    %v2004 = vshrl.u32 %v2003, 7
    %v2005 = vsub.s32 0, %v2004
    %v2006 = vrot.slane %v1993, %v2005
    %v2007 = vlaneseq
    %v2008 = vshrl.u32 %v2007, 7
    %v2009 = vsub.s32 0, %v2008
    %v2010 = vrot.slane %v1994, %v2009
    %v2015 = vsub.f32 %v1998, %v1967
    %v2016 = vsub.f32 %v2002, %v1967
    %v2017 = vsub.f32 %v2006, %v1967
    %v2018 = vsub.f32 %v2010, %v1967
    %v2021 = vunpack.c.l.s4 1966171168
    %v2022 = vunpack.c.0.s8 %v2021
    %v2023 = vlaneseq
    %v2024 = vshrl.u32 %v2023, 7
    %v2025 = vsub.s32 %v2022, %v2024
    %v2026 = vrot.slane %v1969, %v2025
    %v2027 = vcombine.high %v2026, %v2026
    %v2029 = vunpack.c.l.s4 1966171168
    %v2030 = vunpack.c.0.s8 %v2029
    %v2031 = vlaneseq
    %v2032 = vshrl.u32 %v2031, 7
    %v2033 = vsub.s32 %v2030, %v2032
    %v2034 = vrot.slane %v2026, %v2033
    %v2036 = vunpack.c.l.s4 1966171168
    %v2037 = vunpack.c.0.s8 %v2036
    %v2038 = vlaneseq
    %v2039 = vshrl.u32 %v2038, 7
    %v2040 = vsub.s32 %v2037, %v2039
    %v2041 = vrot.slane %v2027, %v2040
    %v2042 = vcombine.high %v2034, %v2034
    %v2043 = vcombine.high %v2041, %v2041
    %v2044 = vlaneseq
    %v2045 = vshrl.u32 %v2044, 7
    %v2046 = vsub.s32 0, %v2045
    %v2047 = vrot.slane %v2034, %v2046
    %v2048 = vlaneseq
    %v2049 = vshrl.u32 %v2048, 7
    %v2050 = vsub.s32 0, %v2049
    %v2051 = vrot.slane %v2041, %v2050
    %v2052 = vlaneseq
    %v2053 = vshrl.u32 %v2052, 7
    %v2054 = vsub.s32 0, %v2053
    %v2055 = vrot.slane %v2042, %v2054
    %v2056 = vlaneseq
    %v2057 = vshrl.u32 %v2056, 7
    %v2058 = vsub.s32 0, %v2057
    %v2059 = vrot.slane %v2043, %v2058
    %v2064 = vsub.f32 %v2047, %v1969
    %v2065 = vsub.f32 %v2051, %v1969
    %v2066 = vsub.f32 %v2055, %v1969
    %v2067 = vsub.f32 %v2059, %v1969
    %v2068 = vsub.f32 %v1998, %v1969
    %v2069 = vsub.f32 %v2002, %v1969
    %v2070 = vsub.f32 %v2006, %v1969
    %v2071 = vsub.f32 %v2010, %v1969
    %v2072 = vmul.f32 %v2015, %v2015
    %v2073 = vmul.f32 %v2016, %v2016
    %v2074 = vmul.f32 %v2017, %v2017
    %v2075 = vmul.f32 %v2018, %v2018
    %v2076 = vadd.f32 %v1946, %v2072
    %v2077 = vadd.f32 %v1947, %v2073
    %v2078 = vadd.f32 %v1948, %v2074
    %v2079 = vadd.f32 %v1949, %v2075
    %v2080 = vmul.f32 %v2064, %v2064
    %v2081 = vmul.f32 %v2065, %v2065
    %v2082 = vmul.f32 %v2066, %v2066
    %v2083 = vmul.f32 %v2067, %v2067
    %v2084 = vadd.f32 %v1954, %v2080
    %v2085 = vadd.f32 %v1955, %v2081
    %v2086 = vadd.f32 %v1956, %v2082
    %v2087 = vadd.f32 %v1957, %v2083
    %v2088 = vmul.f32 %v2068, %v2068
    %v2089 = vmul.f32 %v2069, %v2069
    %v2090 = vmul.f32 %v2070, %v2070
    %v2091 = vmul.f32 %v2071, %v2071
    %v2092 = vadd.f32 %v1962, %v2088
    %v2093 = vadd.f32 %v1963, %v2089
    %v2094 = vadd.f32 %v1964, %v2090
    %v2095 = vadd.f32 %v1965, %v2091
    %s2096 = scalar_lea.vmem %s0, 64
    %v2097 = vld [vmem:[%s2096] sm:$0xf]
    %s2098 = scalar_lea.vmem %s1, 64
    %v2099 = vld [vmem:[%s2098] sm:$0xf]
    %v2102 = vunpack.c.l.s4 1966171168
    %v2103 = vunpack.c.0.s8 %v2102
    %v2104 = vlaneseq
    %v2105 = vshrl.u32 %v2104, 7
    %v2106 = vsub.s32 %v2103, %v2105
    %v2107 = vrot.slane %v2097, %v2106
    %v2108 = vcombine.high %v2107, %v2107
    %v2110 = vunpack.c.l.s4 1966171168
    %v2111 = vunpack.c.0.s8 %v2110
    %v2112 = vlaneseq
    %v2113 = vshrl.u32 %v2112, 7
    %v2114 = vsub.s32 %v2111, %v2113
    %v2115 = vrot.slane %v2107, %v2114
    %v2117 = vunpack.c.l.s4 1966171168
    %v2118 = vunpack.c.0.s8 %v2117
    %v2119 = vlaneseq
    %v2120 = vshrl.u32 %v2119, 7
    %v2121 = vsub.s32 %v2118, %v2120
    %v2122 = vrot.slane %v2108, %v2121
    %v2123 = vcombine.high %v2115, %v2115
    %v2124 = vcombine.high %v2122, %v2122
    %v2125 = vlaneseq
    %v2126 = vshrl.u32 %v2125, 7
    %v2127 = vsub.s32 0, %v2126
    %v2128 = vrot.slane %v2115, %v2127
    %v2129 = vlaneseq
    %v2130 = vshrl.u32 %v2129, 7
    %v2131 = vsub.s32 0, %v2130
    %v2132 = vrot.slane %v2122, %v2131
    %v2133 = vlaneseq
    %v2134 = vshrl.u32 %v2133, 7
    %v2135 = vsub.s32 0, %v2134
    %v2136 = vrot.slane %v2123, %v2135
    %v2137 = vlaneseq
    %v2138 = vshrl.u32 %v2137, 7
    %v2139 = vsub.s32 0, %v2138
    %v2140 = vrot.slane %v2124, %v2139
    %v2145 = vsub.f32 %v2128, %v2097
    %v2146 = vsub.f32 %v2132, %v2097
    %v2147 = vsub.f32 %v2136, %v2097
    %v2148 = vsub.f32 %v2140, %v2097
    %v2151 = vunpack.c.l.s4 1966171168
    %v2152 = vunpack.c.0.s8 %v2151
    %v2153 = vlaneseq
    %v2154 = vshrl.u32 %v2153, 7
    %v2155 = vsub.s32 %v2152, %v2154
    %v2156 = vrot.slane %v2099, %v2155
    %v2157 = vcombine.high %v2156, %v2156
    %v2159 = vunpack.c.l.s4 1966171168
    %v2160 = vunpack.c.0.s8 %v2159
    %v2161 = vlaneseq
    %v2162 = vshrl.u32 %v2161, 7
    %v2163 = vsub.s32 %v2160, %v2162
    %v2164 = vrot.slane %v2156, %v2163
    %v2166 = vunpack.c.l.s4 1966171168
    %v2167 = vunpack.c.0.s8 %v2166
    %v2168 = vlaneseq
    %v2169 = vshrl.u32 %v2168, 7
    %v2170 = vsub.s32 %v2167, %v2169
    %v2171 = vrot.slane %v2157, %v2170
    %v2172 = vcombine.high %v2164, %v2164
    %v2173 = vcombine.high %v2171, %v2171
    %v2174 = vlaneseq
    %v2175 = vshrl.u32 %v2174, 7
    %v2176 = vsub.s32 0, %v2175
    %v2177 = vrot.slane %v2164, %v2176
    %v2178 = vlaneseq
    %v2179 = vshrl.u32 %v2178, 7
    %v2180 = vsub.s32 0, %v2179
    %v2181 = vrot.slane %v2171, %v2180
    %v2182 = vlaneseq
    %v2183 = vshrl.u32 %v2182, 7
    %v2184 = vsub.s32 0, %v2183
    %v2185 = vrot.slane %v2172, %v2184
    %v2186 = vlaneseq
    %v2187 = vshrl.u32 %v2186, 7
    %v2188 = vsub.s32 0, %v2187
    %v2189 = vrot.slane %v2173, %v2188
    %v2194 = vsub.f32 %v2177, %v2099
    %v2195 = vsub.f32 %v2181, %v2099
    %v2196 = vsub.f32 %v2185, %v2099
    %v2197 = vsub.f32 %v2189, %v2099
    %v2198 = vsub.f32 %v2128, %v2099
    %v2199 = vsub.f32 %v2132, %v2099
    %v2200 = vsub.f32 %v2136, %v2099
    %v2201 = vsub.f32 %v2140, %v2099
    %v2202 = vmul.f32 %v2145, %v2145
    %v2203 = vmul.f32 %v2146, %v2146
    %v2204 = vmul.f32 %v2147, %v2147
    %v2205 = vmul.f32 %v2148, %v2148
    %v2206 = vadd.f32 %v2076, %v2202
    %v2207 = vadd.f32 %v2077, %v2203
    %v2208 = vadd.f32 %v2078, %v2204
    %v2209 = vadd.f32 %v2079, %v2205
    %v2210 = vmul.f32 %v2194, %v2194
    %v2211 = vmul.f32 %v2195, %v2195
    %v2212 = vmul.f32 %v2196, %v2196
    %v2213 = vmul.f32 %v2197, %v2197
    %v2214 = vadd.f32 %v2084, %v2210
    %v2215 = vadd.f32 %v2085, %v2211
    %v2216 = vadd.f32 %v2086, %v2212
    %v2217 = vadd.f32 %v2087, %v2213
    %v2218 = vmul.f32 %v2198, %v2198
    %v2219 = vmul.f32 %v2199, %v2199
    %v2220 = vmul.f32 %v2200, %v2200
    %v2221 = vmul.f32 %v2201, %v2201
    %v2222 = vadd.f32 %v2092, %v2218
    %v2223 = vadd.f32 %v2093, %v2219
    %v2224 = vadd.f32 %v2094, %v2220
    %v2225 = vadd.f32 %v2095, %v2221
    %s2226 = scalar_lea.vmem %s0, 68
    %v2227 = vld [vmem:[%s2226] sm:$0xf]
    %s2228 = scalar_lea.vmem %s1, 68
    %v2229 = vld [vmem:[%s2228] sm:$0xf]
    %v2232 = vunpack.c.l.s4 1966171168
    %v2233 = vunpack.c.0.s8 %v2232
    %v2234 = vlaneseq
    %v2235 = vshrl.u32 %v2234, 7
    %v2236 = vsub.s32 %v2233, %v2235
    %v2237 = vrot.slane %v2227, %v2236
    %v2238 = vcombine.high %v2237, %v2237
    %v2240 = vunpack.c.l.s4 1966171168
    %v2241 = vunpack.c.0.s8 %v2240
    %v2242 = vlaneseq
    %v2243 = vshrl.u32 %v2242, 7
    %v2244 = vsub.s32 %v2241, %v2243
    %v2245 = vrot.slane %v2237, %v2244
    %v2247 = vunpack.c.l.s4 1966171168
    %v2248 = vunpack.c.0.s8 %v2247
    %v2249 = vlaneseq
    %v2250 = vshrl.u32 %v2249, 7
    %v2251 = vsub.s32 %v2248, %v2250
    %v2252 = vrot.slane %v2238, %v2251
    %v2253 = vcombine.high %v2245, %v2245
    %v2254 = vcombine.high %v2252, %v2252
    %v2255 = vlaneseq
    %v2256 = vshrl.u32 %v2255, 7
    %v2257 = vsub.s32 0, %v2256
    %v2258 = vrot.slane %v2245, %v2257
    %v2259 = vlaneseq
    %v2260 = vshrl.u32 %v2259, 7
    %v2261 = vsub.s32 0, %v2260
    %v2262 = vrot.slane %v2252, %v2261
    %v2263 = vlaneseq
    %v2264 = vshrl.u32 %v2263, 7
    %v2265 = vsub.s32 0, %v2264
    %v2266 = vrot.slane %v2253, %v2265
    %v2267 = vlaneseq
    %v2268 = vshrl.u32 %v2267, 7
    %v2269 = vsub.s32 0, %v2268
    %v2270 = vrot.slane %v2254, %v2269
    %v2275 = vsub.f32 %v2258, %v2227
    %v2276 = vsub.f32 %v2262, %v2227
    %v2277 = vsub.f32 %v2266, %v2227
    %v2278 = vsub.f32 %v2270, %v2227
    %v2281 = vunpack.c.l.s4 1966171168
    %v2282 = vunpack.c.0.s8 %v2281
    %v2283 = vlaneseq
    %v2284 = vshrl.u32 %v2283, 7
    %v2285 = vsub.s32 %v2282, %v2284
    %v2286 = vrot.slane %v2229, %v2285
    %v2287 = vcombine.high %v2286, %v2286
    %v2289 = vunpack.c.l.s4 1966171168
    %v2290 = vunpack.c.0.s8 %v2289
    %v2291 = vlaneseq
    %v2292 = vshrl.u32 %v2291, 7
    %v2293 = vsub.s32 %v2290, %v2292
    %v2294 = vrot.slane %v2286, %v2293
    %v2296 = vunpack.c.l.s4 1966171168
    %v2297 = vunpack.c.0.s8 %v2296
    %v2298 = vlaneseq
    %v2299 = vshrl.u32 %v2298, 7
    %v2300 = vsub.s32 %v2297, %v2299
    %v2301 = vrot.slane %v2287, %v2300
    %v2302 = vcombine.high %v2294, %v2294
    %v2303 = vcombine.high %v2301, %v2301
    %v2304 = vlaneseq
    %v2305 = vshrl.u32 %v2304, 7
    %v2306 = vsub.s32 0, %v2305
    %v2307 = vrot.slane %v2294, %v2306
    %v2308 = vlaneseq
    %v2309 = vshrl.u32 %v2308, 7
    %v2310 = vsub.s32 0, %v2309
    %v2311 = vrot.slane %v2301, %v2310
    %v2312 = vlaneseq
    %v2313 = vshrl.u32 %v2312, 7
    %v2314 = vsub.s32 0, %v2313
    %v2315 = vrot.slane %v2302, %v2314
    %v2316 = vlaneseq
    %v2317 = vshrl.u32 %v2316, 7
    %v2318 = vsub.s32 0, %v2317
    %v2319 = vrot.slane %v2303, %v2318
    %v2324 = vsub.f32 %v2307, %v2229
    %v2325 = vsub.f32 %v2311, %v2229
    %v2326 = vsub.f32 %v2315, %v2229
    %v2327 = vsub.f32 %v2319, %v2229
    %v2328 = vsub.f32 %v2258, %v2229
    %v2329 = vsub.f32 %v2262, %v2229
    %v2330 = vsub.f32 %v2266, %v2229
    %v2331 = vsub.f32 %v2270, %v2229
    %v2332 = vmul.f32 %v2275, %v2275
    %v2333 = vmul.f32 %v2276, %v2276
    %v2334 = vmul.f32 %v2277, %v2277
    %v2335 = vmul.f32 %v2278, %v2278
    %v2336 = vadd.f32 %v2206, %v2332
    %v2337 = vadd.f32 %v2207, %v2333
    %v2338 = vadd.f32 %v2208, %v2334
    %v2339 = vadd.f32 %v2209, %v2335
    %v2340 = vmul.f32 %v2324, %v2324
    %v2341 = vmul.f32 %v2325, %v2325
    %v2342 = vmul.f32 %v2326, %v2326
    %v2343 = vmul.f32 %v2327, %v2327
    %v2344 = vadd.f32 %v2214, %v2340
    %v2345 = vadd.f32 %v2215, %v2341
    %v2346 = vadd.f32 %v2216, %v2342
    %v2347 = vadd.f32 %v2217, %v2343
    %v2348 = vmul.f32 %v2328, %v2328
    %v2349 = vmul.f32 %v2329, %v2329
    %v2350 = vmul.f32 %v2330, %v2330
    %v2351 = vmul.f32 %v2331, %v2331
    %v2352 = vadd.f32 %v2222, %v2348
    %v2353 = vadd.f32 %v2223, %v2349
    %v2354 = vadd.f32 %v2224, %v2350
    %v2355 = vadd.f32 %v2225, %v2351
    %s2356 = scalar_lea.vmem %s0, 72
    %v2357 = vld [vmem:[%s2356] sm:$0xf]
    %s2358 = scalar_lea.vmem %s1, 72
    %v2359 = vld [vmem:[%s2358] sm:$0xf]
    %v2362 = vunpack.c.l.s4 1966171168
    %v2363 = vunpack.c.0.s8 %v2362
    %v2364 = vlaneseq
    %v2365 = vshrl.u32 %v2364, 7
    %v2366 = vsub.s32 %v2363, %v2365
    %v2367 = vrot.slane %v2357, %v2366
    %v2368 = vcombine.high %v2367, %v2367
    %v2370 = vunpack.c.l.s4 1966171168
    %v2371 = vunpack.c.0.s8 %v2370
    %v2372 = vlaneseq
    %v2373 = vshrl.u32 %v2372, 7
    %v2374 = vsub.s32 %v2371, %v2373
    %v2375 = vrot.slane %v2367, %v2374
    %v2377 = vunpack.c.l.s4 1966171168
    %v2378 = vunpack.c.0.s8 %v2377
    %v2379 = vlaneseq
    %v2380 = vshrl.u32 %v2379, 7
    %v2381 = vsub.s32 %v2378, %v2380
    %v2382 = vrot.slane %v2368, %v2381
    %v2383 = vcombine.high %v2375, %v2375
    %v2384 = vcombine.high %v2382, %v2382
    %v2385 = vlaneseq
    %v2386 = vshrl.u32 %v2385, 7
    %v2387 = vsub.s32 0, %v2386
    %v2388 = vrot.slane %v2375, %v2387
    %v2389 = vlaneseq
    %v2390 = vshrl.u32 %v2389, 7
    %v2391 = vsub.s32 0, %v2390
    %v2392 = vrot.slane %v2382, %v2391
    %v2393 = vlaneseq
    %v2394 = vshrl.u32 %v2393, 7
    %v2395 = vsub.s32 0, %v2394
    %v2396 = vrot.slane %v2383, %v2395
    %v2397 = vlaneseq
    %v2398 = vshrl.u32 %v2397, 7
    %v2399 = vsub.s32 0, %v2398
    %v2400 = vrot.slane %v2384, %v2399
    %v2405 = vsub.f32 %v2388, %v2357
    %v2406 = vsub.f32 %v2392, %v2357
    %v2407 = vsub.f32 %v2396, %v2357
    %v2408 = vsub.f32 %v2400, %v2357
    %v2411 = vunpack.c.l.s4 1966171168
    %v2412 = vunpack.c.0.s8 %v2411
    %v2413 = vlaneseq
    %v2414 = vshrl.u32 %v2413, 7
    %v2415 = vsub.s32 %v2412, %v2414
    %v2416 = vrot.slane %v2359, %v2415
    %v2417 = vcombine.high %v2416, %v2416
    %v2419 = vunpack.c.l.s4 1966171168
    %v2420 = vunpack.c.0.s8 %v2419
    %v2421 = vlaneseq
    %v2422 = vshrl.u32 %v2421, 7
    %v2423 = vsub.s32 %v2420, %v2422
    %v2424 = vrot.slane %v2416, %v2423
    %v2426 = vunpack.c.l.s4 1966171168
    %v2427 = vunpack.c.0.s8 %v2426
    %v2428 = vlaneseq
    %v2429 = vshrl.u32 %v2428, 7
    %v2430 = vsub.s32 %v2427, %v2429
    %v2431 = vrot.slane %v2417, %v2430
    %v2432 = vcombine.high %v2424, %v2424
    %v2433 = vcombine.high %v2431, %v2431
    %v2434 = vlaneseq
    %v2435 = vshrl.u32 %v2434, 7
    %v2436 = vsub.s32 0, %v2435
    %v2437 = vrot.slane %v2424, %v2436
    %v2438 = vlaneseq
    %v2439 = vshrl.u32 %v2438, 7
    %v2440 = vsub.s32 0, %v2439
    %v2441 = vrot.slane %v2431, %v2440
    %v2442 = vlaneseq
    %v2443 = vshrl.u32 %v2442, 7
    %v2444 = vsub.s32 0, %v2443
    %v2445 = vrot.slane %v2432, %v2444
    %v2446 = vlaneseq
    %v2447 = vshrl.u32 %v2446, 7
    %v2448 = vsub.s32 0, %v2447
    %v2449 = vrot.slane %v2433, %v2448
    %v2454 = vsub.f32 %v2437, %v2359
    %v2455 = vsub.f32 %v2441, %v2359
    %v2456 = vsub.f32 %v2445, %v2359
    %v2457 = vsub.f32 %v2449, %v2359
    %v2458 = vsub.f32 %v2388, %v2359
    %v2459 = vsub.f32 %v2392, %v2359
    %v2460 = vsub.f32 %v2396, %v2359
    %v2461 = vsub.f32 %v2400, %v2359
    %v2462 = vmul.f32 %v2405, %v2405
    %v2463 = vmul.f32 %v2406, %v2406
    %v2464 = vmul.f32 %v2407, %v2407
    %v2465 = vmul.f32 %v2408, %v2408
    %v2466 = vadd.f32 %v2336, %v2462
    %v2467 = vadd.f32 %v2337, %v2463
    %v2468 = vadd.f32 %v2338, %v2464
    %v2469 = vadd.f32 %v2339, %v2465
    %v2470 = vmul.f32 %v2454, %v2454
    %v2471 = vmul.f32 %v2455, %v2455
    %v2472 = vmul.f32 %v2456, %v2456
    %v2473 = vmul.f32 %v2457, %v2457
    %v2474 = vadd.f32 %v2344, %v2470
    %v2475 = vadd.f32 %v2345, %v2471
    %v2476 = vadd.f32 %v2346, %v2472
    %v2477 = vadd.f32 %v2347, %v2473
    %v2478 = vmul.f32 %v2458, %v2458
    %v2479 = vmul.f32 %v2459, %v2459
    %v2480 = vmul.f32 %v2460, %v2460
    %v2481 = vmul.f32 %v2461, %v2461
    %v2482 = vadd.f32 %v2352, %v2478
    %v2483 = vadd.f32 %v2353, %v2479
    %v2484 = vadd.f32 %v2354, %v2480
    %v2485 = vadd.f32 %v2355, %v2481
    %s2486 = scalar_lea.vmem %s0, 76
    %v2487 = vld [vmem:[%s2486] sm:$0xf]
    %s2488 = scalar_lea.vmem %s1, 76
    %v2489 = vld [vmem:[%s2488] sm:$0xf]
    %v2492 = vunpack.c.l.s4 1966171168
    %v2493 = vunpack.c.0.s8 %v2492
    %v2494 = vlaneseq
    %v2495 = vshrl.u32 %v2494, 7
    %v2496 = vsub.s32 %v2493, %v2495
    %v2497 = vrot.slane %v2487, %v2496
    %v2498 = vcombine.high %v2497, %v2497
    %v2500 = vunpack.c.l.s4 1966171168
    %v2501 = vunpack.c.0.s8 %v2500
    %v2502 = vlaneseq
    %v2503 = vshrl.u32 %v2502, 7
    %v2504 = vsub.s32 %v2501, %v2503
    %v2505 = vrot.slane %v2497, %v2504
    %v2507 = vunpack.c.l.s4 1966171168
    %v2508 = vunpack.c.0.s8 %v2507
    %v2509 = vlaneseq
    %v2510 = vshrl.u32 %v2509, 7
    %v2511 = vsub.s32 %v2508, %v2510
    %v2512 = vrot.slane %v2498, %v2511
    %v2513 = vcombine.high %v2505, %v2505
    %v2514 = vcombine.high %v2512, %v2512
    %v2515 = vlaneseq
    %v2516 = vshrl.u32 %v2515, 7
    %v2517 = vsub.s32 0, %v2516
    %v2518 = vrot.slane %v2505, %v2517
    %v2519 = vlaneseq
    %v2520 = vshrl.u32 %v2519, 7
    %v2521 = vsub.s32 0, %v2520
    %v2522 = vrot.slane %v2512, %v2521
    %v2523 = vlaneseq
    %v2524 = vshrl.u32 %v2523, 7
    %v2525 = vsub.s32 0, %v2524
    %v2526 = vrot.slane %v2513, %v2525
    %v2527 = vlaneseq
    %v2528 = vshrl.u32 %v2527, 7
    %v2529 = vsub.s32 0, %v2528
    %v2530 = vrot.slane %v2514, %v2529
    %v2535 = vsub.f32 %v2518, %v2487
    %v2536 = vsub.f32 %v2522, %v2487
    %v2537 = vsub.f32 %v2526, %v2487
    %v2538 = vsub.f32 %v2530, %v2487
    %v2541 = vunpack.c.l.s4 1966171168
    %v2542 = vunpack.c.0.s8 %v2541
    %v2543 = vlaneseq
    %v2544 = vshrl.u32 %v2543, 7
    %v2545 = vsub.s32 %v2542, %v2544
    %v2546 = vrot.slane %v2489, %v2545
    %v2547 = vcombine.high %v2546, %v2546
    %v2549 = vunpack.c.l.s4 1966171168
    %v2550 = vunpack.c.0.s8 %v2549
    %v2551 = vlaneseq
    %v2552 = vshrl.u32 %v2551, 7
    %v2553 = vsub.s32 %v2550, %v2552
    %v2554 = vrot.slane %v2546, %v2553
    %v2556 = vunpack.c.l.s4 1966171168
    %v2557 = vunpack.c.0.s8 %v2556
    %v2558 = vlaneseq
    %v2559 = vshrl.u32 %v2558, 7
    %v2560 = vsub.s32 %v2557, %v2559
    %v2561 = vrot.slane %v2547, %v2560
    %v2562 = vcombine.high %v2554, %v2554
    %v2563 = vcombine.high %v2561, %v2561
    %v2564 = vlaneseq
    %v2565 = vshrl.u32 %v2564, 7
    %v2566 = vsub.s32 0, %v2565
    %v2567 = vrot.slane %v2554, %v2566
    %v2568 = vlaneseq
    %v2569 = vshrl.u32 %v2568, 7
    %v2570 = vsub.s32 0, %v2569
    %v2571 = vrot.slane %v2561, %v2570
    %v2572 = vlaneseq
    %v2573 = vshrl.u32 %v2572, 7
    %v2574 = vsub.s32 0, %v2573
    %v2575 = vrot.slane %v2562, %v2574
    %v2576 = vlaneseq
    %v2577 = vshrl.u32 %v2576, 7
    %v2578 = vsub.s32 0, %v2577
    %v2579 = vrot.slane %v2563, %v2578
    %v2584 = vsub.f32 %v2567, %v2489
    %v2585 = vsub.f32 %v2571, %v2489
    %v2586 = vsub.f32 %v2575, %v2489
    %v2587 = vsub.f32 %v2579, %v2489
    %v2588 = vsub.f32 %v2518, %v2489
    %v2589 = vsub.f32 %v2522, %v2489
    %v2590 = vsub.f32 %v2526, %v2489
    %v2591 = vsub.f32 %v2530, %v2489
    %v2592 = vmul.f32 %v2535, %v2535
    %v2593 = vmul.f32 %v2536, %v2536
    %v2594 = vmul.f32 %v2537, %v2537
    %v2595 = vmul.f32 %v2538, %v2538
    %v2596 = vadd.f32 %v2466, %v2592
    %v2597 = vadd.f32 %v2467, %v2593
    %v2598 = vadd.f32 %v2468, %v2594
    %v2599 = vadd.f32 %v2469, %v2595
    %v2600 = vmul.f32 %v2584, %v2584
    %v2601 = vmul.f32 %v2585, %v2585
    %v2602 = vmul.f32 %v2586, %v2586
    %v2603 = vmul.f32 %v2587, %v2587
    %v2604 = vadd.f32 %v2474, %v2600
    %v2605 = vadd.f32 %v2475, %v2601
    %v2606 = vadd.f32 %v2476, %v2602
    %v2607 = vadd.f32 %v2477, %v2603
    %v2608 = vmul.f32 %v2588, %v2588
    %v2609 = vmul.f32 %v2589, %v2589
    %v2610 = vmul.f32 %v2590, %v2590
    %v2611 = vmul.f32 %v2591, %v2591
    %v2612 = vadd.f32 %v2482, %v2608
    %v2613 = vadd.f32 %v2483, %v2609
    %v2614 = vadd.f32 %v2484, %v2610
    %v2615 = vadd.f32 %v2485, %v2611
    %s2616 = scalar_lea.vmem %s0, 80
    %v2617 = vld [vmem:[%s2616] sm:$0xf]
    %s2618 = scalar_lea.vmem %s1, 80
    %v2619 = vld [vmem:[%s2618] sm:$0xf]
    %v2622 = vunpack.c.l.s4 1966171168
    %v2623 = vunpack.c.0.s8 %v2622
    %v2624 = vlaneseq
    %v2625 = vshrl.u32 %v2624, 7
    %v2626 = vsub.s32 %v2623, %v2625
    %v2627 = vrot.slane %v2617, %v2626
    %v2628 = vcombine.high %v2627, %v2627
    %v2630 = vunpack.c.l.s4 1966171168
    %v2631 = vunpack.c.0.s8 %v2630
    %v2632 = vlaneseq
    %v2633 = vshrl.u32 %v2632, 7
    %v2634 = vsub.s32 %v2631, %v2633
    %v2635 = vrot.slane %v2627, %v2634
    %v2637 = vunpack.c.l.s4 1966171168
    %v2638 = vunpack.c.0.s8 %v2637
    %v2639 = vlaneseq
    %v2640 = vshrl.u32 %v2639, 7
    %v2641 = vsub.s32 %v2638, %v2640
    %v2642 = vrot.slane %v2628, %v2641
    %v2643 = vcombine.high %v2635, %v2635
    %v2644 = vcombine.high %v2642, %v2642
    %v2645 = vlaneseq
    %v2646 = vshrl.u32 %v2645, 7
    %v2647 = vsub.s32 0, %v2646
    %v2648 = vrot.slane %v2635, %v2647
    %v2649 = vlaneseq
    %v2650 = vshrl.u32 %v2649, 7
    %v2651 = vsub.s32 0, %v2650
    %v2652 = vrot.slane %v2642, %v2651
    %v2653 = vlaneseq
    %v2654 = vshrl.u32 %v2653, 7
    %v2655 = vsub.s32 0, %v2654
    %v2656 = vrot.slane %v2643, %v2655
    %v2657 = vlaneseq
    %v2658 = vshrl.u32 %v2657, 7
    %v2659 = vsub.s32 0, %v2658
    %v2660 = vrot.slane %v2644, %v2659
    %v2665 = vsub.f32 %v2648, %v2617
    %v2666 = vsub.f32 %v2652, %v2617
    %v2667 = vsub.f32 %v2656, %v2617
    %v2668 = vsub.f32 %v2660, %v2617
    %v2671 = vunpack.c.l.s4 1966171168
    %v2672 = vunpack.c.0.s8 %v2671
    %v2673 = vlaneseq
    %v2674 = vshrl.u32 %v2673, 7
    %v2675 = vsub.s32 %v2672, %v2674
    %v2676 = vrot.slane %v2619, %v2675
    %v2677 = vcombine.high %v2676, %v2676
    %v2679 = vunpack.c.l.s4 1966171168
    %v2680 = vunpack.c.0.s8 %v2679
    %v2681 = vlaneseq
    %v2682 = vshrl.u32 %v2681, 7
    %v2683 = vsub.s32 %v2680, %v2682
    %v2684 = vrot.slane %v2676, %v2683
    %v2686 = vunpack.c.l.s4 1966171168
    %v2687 = vunpack.c.0.s8 %v2686
    %v2688 = vlaneseq
    %v2689 = vshrl.u32 %v2688, 7
    %v2690 = vsub.s32 %v2687, %v2689
    %v2691 = vrot.slane %v2677, %v2690
    %v2692 = vcombine.high %v2684, %v2684
    %v2693 = vcombine.high %v2691, %v2691
    %v2694 = vlaneseq
    %v2695 = vshrl.u32 %v2694, 7
    %v2696 = vsub.s32 0, %v2695
    %v2697 = vrot.slane %v2684, %v2696
    %v2698 = vlaneseq
    %v2699 = vshrl.u32 %v2698, 7
    %v2700 = vsub.s32 0, %v2699
    %v2701 = vrot.slane %v2691, %v2700
    %v2702 = vlaneseq
    %v2703 = vshrl.u32 %v2702, 7
    %v2704 = vsub.s32 0, %v2703
    %v2705 = vrot.slane %v2692, %v2704
    %v2706 = vlaneseq
    %v2707 = vshrl.u32 %v2706, 7
    %v2708 = vsub.s32 0, %v2707
    %v2709 = vrot.slane %v2693, %v2708
    %v2714 = vsub.f32 %v2697, %v2619
    %v2715 = vsub.f32 %v2701, %v2619
    %v2716 = vsub.f32 %v2705, %v2619
    %v2717 = vsub.f32 %v2709, %v2619
    %v2718 = vsub.f32 %v2648, %v2619
    %v2719 = vsub.f32 %v2652, %v2619
    %v2720 = vsub.f32 %v2656, %v2619
    %v2721 = vsub.f32 %v2660, %v2619
    %v2722 = vmul.f32 %v2665, %v2665
    %v2723 = vmul.f32 %v2666, %v2666
    %v2724 = vmul.f32 %v2667, %v2667
    %v2725 = vmul.f32 %v2668, %v2668
    %v2726 = vadd.f32 %v2596, %v2722
    %v2727 = vadd.f32 %v2597, %v2723
    %v2728 = vadd.f32 %v2598, %v2724
    %v2729 = vadd.f32 %v2599, %v2725
    %v2730 = vmul.f32 %v2714, %v2714
    %v2731 = vmul.f32 %v2715, %v2715
    %v2732 = vmul.f32 %v2716, %v2716
    %v2733 = vmul.f32 %v2717, %v2717
    %v2734 = vadd.f32 %v2604, %v2730
    %v2735 = vadd.f32 %v2605, %v2731
    %v2736 = vadd.f32 %v2606, %v2732
    %v2737 = vadd.f32 %v2607, %v2733
    %v2738 = vmul.f32 %v2718, %v2718
    %v2739 = vmul.f32 %v2719, %v2719
    %v2740 = vmul.f32 %v2720, %v2720
    %v2741 = vmul.f32 %v2721, %v2721
    %v2742 = vadd.f32 %v2612, %v2738
    %v2743 = vadd.f32 %v2613, %v2739
    %v2744 = vadd.f32 %v2614, %v2740
    %v2745 = vadd.f32 %v2615, %v2741
    %s2746 = scalar_lea.vmem %s0, 84
    %v2747 = vld [vmem:[%s2746] sm:$0xf]
    %s2748 = scalar_lea.vmem %s1, 84
    %v2749 = vld [vmem:[%s2748] sm:$0xf]
    %v2752 = vunpack.c.l.s4 1966171168
    %v2753 = vunpack.c.0.s8 %v2752
    %v2754 = vlaneseq
    %v2755 = vshrl.u32 %v2754, 7
    %v2756 = vsub.s32 %v2753, %v2755
    %v2757 = vrot.slane %v2747, %v2756
    %v2758 = vcombine.high %v2757, %v2757
    %v2760 = vunpack.c.l.s4 1966171168
    %v2761 = vunpack.c.0.s8 %v2760
    %v2762 = vlaneseq
    %v2763 = vshrl.u32 %v2762, 7
    %v2764 = vsub.s32 %v2761, %v2763
    %v2765 = vrot.slane %v2757, %v2764
    %v2767 = vunpack.c.l.s4 1966171168
    %v2768 = vunpack.c.0.s8 %v2767
    %v2769 = vlaneseq
    %v2770 = vshrl.u32 %v2769, 7
    %v2771 = vsub.s32 %v2768, %v2770
    %v2772 = vrot.slane %v2758, %v2771
    %v2773 = vcombine.high %v2765, %v2765
    %v2774 = vcombine.high %v2772, %v2772
    %v2775 = vlaneseq
    %v2776 = vshrl.u32 %v2775, 7
    %v2777 = vsub.s32 0, %v2776
    %v2778 = vrot.slane %v2765, %v2777
    %v2779 = vlaneseq
    %v2780 = vshrl.u32 %v2779, 7
    %v2781 = vsub.s32 0, %v2780
    %v2782 = vrot.slane %v2772, %v2781
    %v2783 = vlaneseq
    %v2784 = vshrl.u32 %v2783, 7
    %v2785 = vsub.s32 0, %v2784
    %v2786 = vrot.slane %v2773, %v2785
    %v2787 = vlaneseq
    %v2788 = vshrl.u32 %v2787, 7
    %v2789 = vsub.s32 0, %v2788
    %v2790 = vrot.slane %v2774, %v2789
    %v2795 = vsub.f32 %v2778, %v2747
    %v2796 = vsub.f32 %v2782, %v2747
    %v2797 = vsub.f32 %v2786, %v2747
    %v2798 = vsub.f32 %v2790, %v2747
    %v2801 = vunpack.c.l.s4 1966171168
    %v2802 = vunpack.c.0.s8 %v2801
    %v2803 = vlaneseq
    %v2804 = vshrl.u32 %v2803, 7
    %v2805 = vsub.s32 %v2802, %v2804
    %v2806 = vrot.slane %v2749, %v2805
    %v2807 = vcombine.high %v2806, %v2806
    %v2809 = vunpack.c.l.s4 1966171168
    %v2810 = vunpack.c.0.s8 %v2809
    %v2811 = vlaneseq
    %v2812 = vshrl.u32 %v2811, 7
    %v2813 = vsub.s32 %v2810, %v2812
    %v2814 = vrot.slane %v2806, %v2813
    %v2816 = vunpack.c.l.s4 1966171168
    %v2817 = vunpack.c.0.s8 %v2816
    %v2818 = vlaneseq
    %v2819 = vshrl.u32 %v2818, 7
    %v2820 = vsub.s32 %v2817, %v2819
    %v2821 = vrot.slane %v2807, %v2820
    %v2822 = vcombine.high %v2814, %v2814
    %v2823 = vcombine.high %v2821, %v2821
    %v2824 = vlaneseq
    %v2825 = vshrl.u32 %v2824, 7
    %v2826 = vsub.s32 0, %v2825
    %v2827 = vrot.slane %v2814, %v2826
    %v2828 = vlaneseq
    %v2829 = vshrl.u32 %v2828, 7
    %v2830 = vsub.s32 0, %v2829
    %v2831 = vrot.slane %v2821, %v2830
    %v2832 = vlaneseq
    %v2833 = vshrl.u32 %v2832, 7
    %v2834 = vsub.s32 0, %v2833
    %v2835 = vrot.slane %v2822, %v2834
    %v2836 = vlaneseq
    %v2837 = vshrl.u32 %v2836, 7
    %v2838 = vsub.s32 0, %v2837
    %v2839 = vrot.slane %v2823, %v2838
    %v2844 = vsub.f32 %v2827, %v2749
    %v2845 = vsub.f32 %v2831, %v2749
    %v2846 = vsub.f32 %v2835, %v2749
    %v2847 = vsub.f32 %v2839, %v2749
    %v2848 = vsub.f32 %v2778, %v2749
    %v2849 = vsub.f32 %v2782, %v2749
    %v2850 = vsub.f32 %v2786, %v2749
    %v2851 = vsub.f32 %v2790, %v2749
    %v2852 = vmul.f32 %v2795, %v2795
    %v2853 = vmul.f32 %v2796, %v2796
    %v2854 = vmul.f32 %v2797, %v2797
    %v2855 = vmul.f32 %v2798, %v2798
    %v2856 = vadd.f32 %v2726, %v2852
    %v2857 = vadd.f32 %v2727, %v2853
    %v2858 = vadd.f32 %v2728, %v2854
    %v2859 = vadd.f32 %v2729, %v2855
    %v2860 = vmul.f32 %v2844, %v2844
    %v2861 = vmul.f32 %v2845, %v2845
    %v2862 = vmul.f32 %v2846, %v2846
    %v2863 = vmul.f32 %v2847, %v2847
    %v2864 = vadd.f32 %v2734, %v2860
    %v2865 = vadd.f32 %v2735, %v2861
    %v2866 = vadd.f32 %v2736, %v2862
    %v2867 = vadd.f32 %v2737, %v2863
    %v2868 = vmul.f32 %v2848, %v2848
    %v2869 = vmul.f32 %v2849, %v2849
    %v2870 = vmul.f32 %v2850, %v2850
    %v2871 = vmul.f32 %v2851, %v2851
    %v2872 = vadd.f32 %v2742, %v2868
    %v2873 = vadd.f32 %v2743, %v2869
    %v2874 = vadd.f32 %v2744, %v2870
    %v2875 = vadd.f32 %v2745, %v2871
    %s2876 = scalar_lea.vmem %s0, 88
    %v2877 = vld [vmem:[%s2876] sm:$0xf]
    %s2878 = scalar_lea.vmem %s1, 88
    %v2879 = vld [vmem:[%s2878] sm:$0xf]
    %v2882 = vunpack.c.l.s4 1966171168
    %v2883 = vunpack.c.0.s8 %v2882
    %v2884 = vlaneseq
    %v2885 = vshrl.u32 %v2884, 7
    %v2886 = vsub.s32 %v2883, %v2885
    %v2887 = vrot.slane %v2877, %v2886
    %v2888 = vcombine.high %v2887, %v2887
    %v2890 = vunpack.c.l.s4 1966171168
    %v2891 = vunpack.c.0.s8 %v2890
    %v2892 = vlaneseq
    %v2893 = vshrl.u32 %v2892, 7
    %v2894 = vsub.s32 %v2891, %v2893
    %v2895 = vrot.slane %v2887, %v2894
    %v2897 = vunpack.c.l.s4 1966171168
    %v2898 = vunpack.c.0.s8 %v2897
    %v2899 = vlaneseq
    %v2900 = vshrl.u32 %v2899, 7
    %v2901 = vsub.s32 %v2898, %v2900
    %v2902 = vrot.slane %v2888, %v2901
    %v2903 = vcombine.high %v2895, %v2895
    %v2904 = vcombine.high %v2902, %v2902
    %v2905 = vlaneseq
    %v2906 = vshrl.u32 %v2905, 7
    %v2907 = vsub.s32 0, %v2906
    %v2908 = vrot.slane %v2895, %v2907
    %v2909 = vlaneseq
    %v2910 = vshrl.u32 %v2909, 7
    %v2911 = vsub.s32 0, %v2910
    %v2912 = vrot.slane %v2902, %v2911
    %v2913 = vlaneseq
    %v2914 = vshrl.u32 %v2913, 7
    %v2915 = vsub.s32 0, %v2914
    %v2916 = vrot.slane %v2903, %v2915
    %v2917 = vlaneseq
    %v2918 = vshrl.u32 %v2917, 7
    %v2919 = vsub.s32 0, %v2918
    %v2920 = vrot.slane %v2904, %v2919
    %v2925 = vsub.f32 %v2908, %v2877
    %v2926 = vsub.f32 %v2912, %v2877
    %v2927 = vsub.f32 %v2916, %v2877
    %v2928 = vsub.f32 %v2920, %v2877
    %v2931 = vunpack.c.l.s4 1966171168
    %v2932 = vunpack.c.0.s8 %v2931
    %v2933 = vlaneseq
    %v2934 = vshrl.u32 %v2933, 7
    %v2935 = vsub.s32 %v2932, %v2934
    %v2936 = vrot.slane %v2879, %v2935
    %v2937 = vcombine.high %v2936, %v2936
    %v2939 = vunpack.c.l.s4 1966171168
    %v2940 = vunpack.c.0.s8 %v2939
    %v2941 = vlaneseq
    %v2942 = vshrl.u32 %v2941, 7
    %v2943 = vsub.s32 %v2940, %v2942
    %v2944 = vrot.slane %v2936, %v2943
    %v2946 = vunpack.c.l.s4 1966171168
    %v2947 = vunpack.c.0.s8 %v2946
    %v2948 = vlaneseq
    %v2949 = vshrl.u32 %v2948, 7
    %v2950 = vsub.s32 %v2947, %v2949
    %v2951 = vrot.slane %v2937, %v2950
    %v2952 = vcombine.high %v2944, %v2944
    %v2953 = vcombine.high %v2951, %v2951
    %v2954 = vlaneseq
    %v2955 = vshrl.u32 %v2954, 7
    %v2956 = vsub.s32 0, %v2955
    %v2957 = vrot.slane %v2944, %v2956
    %v2958 = vlaneseq
    %v2959 = vshrl.u32 %v2958, 7
    %v2960 = vsub.s32 0, %v2959
    %v2961 = vrot.slane %v2951, %v2960
    %v2962 = vlaneseq
    %v2963 = vshrl.u32 %v2962, 7
    %v2964 = vsub.s32 0, %v2963
    %v2965 = vrot.slane %v2952, %v2964
    %v2966 = vlaneseq
    %v2967 = vshrl.u32 %v2966, 7
    %v2968 = vsub.s32 0, %v2967
    %v2969 = vrot.slane %v2953, %v2968
    %v2974 = vsub.f32 %v2957, %v2879
    %v2975 = vsub.f32 %v2961, %v2879
    %v2976 = vsub.f32 %v2965, %v2879
    %v2977 = vsub.f32 %v2969, %v2879
    %v2978 = vsub.f32 %v2908, %v2879
    %v2979 = vsub.f32 %v2912, %v2879
    %v2980 = vsub.f32 %v2916, %v2879
    %v2981 = vsub.f32 %v2920, %v2879
    %v2982 = vmul.f32 %v2925, %v2925
    %v2983 = vmul.f32 %v2926, %v2926
    %v2984 = vmul.f32 %v2927, %v2927
    %v2985 = vmul.f32 %v2928, %v2928
    %v2986 = vadd.f32 %v2856, %v2982
    %v2987 = vadd.f32 %v2857, %v2983
    %v2988 = vadd.f32 %v2858, %v2984
    %v2989 = vadd.f32 %v2859, %v2985
    %v2990 = vmul.f32 %v2974, %v2974
    %v2991 = vmul.f32 %v2975, %v2975
    %v2992 = vmul.f32 %v2976, %v2976
    %v2993 = vmul.f32 %v2977, %v2977
    %v2994 = vadd.f32 %v2864, %v2990
    %v2995 = vadd.f32 %v2865, %v2991
    %v2996 = vadd.f32 %v2866, %v2992
    %v2997 = vadd.f32 %v2867, %v2993
    %v2998 = vmul.f32 %v2978, %v2978
    %v2999 = vmul.f32 %v2979, %v2979
    %v3000 = vmul.f32 %v2980, %v2980
    %v3001 = vmul.f32 %v2981, %v2981
    %v3002 = vadd.f32 %v2872, %v2998
    %v3003 = vadd.f32 %v2873, %v2999
    %v3004 = vadd.f32 %v2874, %v3000
    %v3005 = vadd.f32 %v2875, %v3001
    %s3006 = scalar_lea.vmem %s0, 92
    %v3007 = vld [vmem:[%s3006] sm:$0xf]
    %s3008 = scalar_lea.vmem %s1, 92
    %v3009 = vld [vmem:[%s3008] sm:$0xf]
    %v3012 = vunpack.c.l.s4 1966171168
    %v3013 = vunpack.c.0.s8 %v3012
    %v3014 = vlaneseq
    %v3015 = vshrl.u32 %v3014, 7
    %v3016 = vsub.s32 %v3013, %v3015
    %v3017 = vrot.slane %v3007, %v3016
    %v3018 = vcombine.high %v3017, %v3017
    %v3020 = vunpack.c.l.s4 1966171168
    %v3021 = vunpack.c.0.s8 %v3020
    %v3022 = vlaneseq
    %v3023 = vshrl.u32 %v3022, 7
    %v3024 = vsub.s32 %v3021, %v3023
    %v3025 = vrot.slane %v3017, %v3024
    %v3027 = vunpack.c.l.s4 1966171168
    %v3028 = vunpack.c.0.s8 %v3027
    %v3029 = vlaneseq
    %v3030 = vshrl.u32 %v3029, 7
    %v3031 = vsub.s32 %v3028, %v3030
    %v3032 = vrot.slane %v3018, %v3031
    %v3033 = vcombine.high %v3025, %v3025
    %v3034 = vcombine.high %v3032, %v3032
    %v3035 = vlaneseq
    %v3036 = vshrl.u32 %v3035, 7
    %v3037 = vsub.s32 0, %v3036
    %v3038 = vrot.slane %v3025, %v3037
    %v3039 = vlaneseq
    %v3040 = vshrl.u32 %v3039, 7
    %v3041 = vsub.s32 0, %v3040
    %v3042 = vrot.slane %v3032, %v3041
    %v3043 = vlaneseq
    %v3044 = vshrl.u32 %v3043, 7
    %v3045 = vsub.s32 0, %v3044
    %v3046 = vrot.slane %v3033, %v3045
    %v3047 = vlaneseq
    %v3048 = vshrl.u32 %v3047, 7
    %v3049 = vsub.s32 0, %v3048
    %v3050 = vrot.slane %v3034, %v3049
    %v3055 = vsub.f32 %v3038, %v3007
    %v3056 = vsub.f32 %v3042, %v3007
    %v3057 = vsub.f32 %v3046, %v3007
    %v3058 = vsub.f32 %v3050, %v3007
    %v3061 = vunpack.c.l.s4 1966171168
    %v3062 = vunpack.c.0.s8 %v3061
    %v3063 = vlaneseq
    %v3064 = vshrl.u32 %v3063, 7
    %v3065 = vsub.s32 %v3062, %v3064
    %v3066 = vrot.slane %v3009, %v3065
    %v3067 = vcombine.high %v3066, %v3066
    %v3069 = vunpack.c.l.s4 1966171168
    %v3070 = vunpack.c.0.s8 %v3069
    %v3071 = vlaneseq
    %v3072 = vshrl.u32 %v3071, 7
    %v3073 = vsub.s32 %v3070, %v3072
    %v3074 = vrot.slane %v3066, %v3073
    %v3076 = vunpack.c.l.s4 1966171168
    %v3077 = vunpack.c.0.s8 %v3076
    %v3078 = vlaneseq
    %v3079 = vshrl.u32 %v3078, 7
    %v3080 = vsub.s32 %v3077, %v3079
    %v3081 = vrot.slane %v3067, %v3080
    %v3082 = vcombine.high %v3074, %v3074
    %v3083 = vcombine.high %v3081, %v3081
    %v3084 = vlaneseq
    %v3085 = vshrl.u32 %v3084, 7
    %v3086 = vsub.s32 0, %v3085
    %v3087 = vrot.slane %v3074, %v3086
    %v3088 = vlaneseq
    %v3089 = vshrl.u32 %v3088, 7
    %v3090 = vsub.s32 0, %v3089
    %v3091 = vrot.slane %v3081, %v3090
    %v3092 = vlaneseq
    %v3093 = vshrl.u32 %v3092, 7
    %v3094 = vsub.s32 0, %v3093
    %v3095 = vrot.slane %v3082, %v3094
    %v3096 = vlaneseq
    %v3097 = vshrl.u32 %v3096, 7
    %v3098 = vsub.s32 0, %v3097
    %v3099 = vrot.slane %v3083, %v3098
    %v3104 = vsub.f32 %v3087, %v3009
    %v3105 = vsub.f32 %v3091, %v3009
    %v3106 = vsub.f32 %v3095, %v3009
    %v3107 = vsub.f32 %v3099, %v3009
    %v3108 = vsub.f32 %v3038, %v3009
    %v3109 = vsub.f32 %v3042, %v3009
    %v3110 = vsub.f32 %v3046, %v3009
    %v3111 = vsub.f32 %v3050, %v3009
    %v3112 = vmul.f32 %v3055, %v3055
    %v3113 = vmul.f32 %v3056, %v3056
    %v3114 = vmul.f32 %v3057, %v3057
    %v3115 = vmul.f32 %v3058, %v3058
    %v3116 = vadd.f32 %v2986, %v3112
    %v3117 = vadd.f32 %v2987, %v3113
    %v3118 = vadd.f32 %v2988, %v3114
    %v3119 = vadd.f32 %v2989, %v3115
    %v3120 = vmul.f32 %v3104, %v3104
    %v3121 = vmul.f32 %v3105, %v3105
    %v3122 = vmul.f32 %v3106, %v3106
    %v3123 = vmul.f32 %v3107, %v3107
    %v3124 = vadd.f32 %v2994, %v3120
    %v3125 = vadd.f32 %v2995, %v3121
    %v3126 = vadd.f32 %v2996, %v3122
    %v3127 = vadd.f32 %v2997, %v3123
    %v3128 = vmul.f32 %v3108, %v3108
    %v3129 = vmul.f32 %v3109, %v3109
    %v3130 = vmul.f32 %v3110, %v3110
    %v3131 = vmul.f32 %v3111, %v3111
    %v3132 = vadd.f32 %v3002, %v3128
    %v3133 = vadd.f32 %v3003, %v3129
    %v3134 = vadd.f32 %v3004, %v3130
    %v3135 = vadd.f32 %v3005, %v3131
    %s3136 = scalar_lea.vmem %s0, 96
    %v3137 = vld [vmem:[%s3136] sm:$0xf]
    %s3138 = scalar_lea.vmem %s1, 96
    %v3139 = vld [vmem:[%s3138] sm:$0xf]
    %v3142 = vunpack.c.l.s4 1966171168
    %v3143 = vunpack.c.0.s8 %v3142
    %v3144 = vlaneseq
    %v3145 = vshrl.u32 %v3144, 7
    %v3146 = vsub.s32 %v3143, %v3145
    %v3147 = vrot.slane %v3137, %v3146
    %v3148 = vcombine.high %v3147, %v3147
    %v3150 = vunpack.c.l.s4 1966171168
    %v3151 = vunpack.c.0.s8 %v3150
    %v3152 = vlaneseq
    %v3153 = vshrl.u32 %v3152, 7
    %v3154 = vsub.s32 %v3151, %v3153
    %v3155 = vrot.slane %v3147, %v3154
    %v3157 = vunpack.c.l.s4 1966171168
    %v3158 = vunpack.c.0.s8 %v3157
    %v3159 = vlaneseq
    %v3160 = vshrl.u32 %v3159, 7
    %v3161 = vsub.s32 %v3158, %v3160
    %v3162 = vrot.slane %v3148, %v3161
    %v3163 = vcombine.high %v3155, %v3155
    %v3164 = vcombine.high %v3162, %v3162
    %v3165 = vlaneseq
    %v3166 = vshrl.u32 %v3165, 7
    %v3167 = vsub.s32 0, %v3166
    %v3168 = vrot.slane %v3155, %v3167
    %v3169 = vlaneseq
    %v3170 = vshrl.u32 %v3169, 7
    %v3171 = vsub.s32 0, %v3170
    %v3172 = vrot.slane %v3162, %v3171
    %v3173 = vlaneseq
    %v3174 = vshrl.u32 %v3173, 7
    %v3175 = vsub.s32 0, %v3174
    %v3176 = vrot.slane %v3163, %v3175
    %v3177 = vlaneseq
    %v3178 = vshrl.u32 %v3177, 7
    %v3179 = vsub.s32 0, %v3178
    %v3180 = vrot.slane %v3164, %v3179
    %v3185 = vsub.f32 %v3168, %v3137
    %v3186 = vsub.f32 %v3172, %v3137
    %v3187 = vsub.f32 %v3176, %v3137
    %v3188 = vsub.f32 %v3180, %v3137
    %v3191 = vunpack.c.l.s4 1966171168
    %v3192 = vunpack.c.0.s8 %v3191
    %v3193 = vlaneseq
    %v3194 = vshrl.u32 %v3193, 7
    %v3195 = vsub.s32 %v3192, %v3194
    %v3196 = vrot.slane %v3139, %v3195
    %v3197 = vcombine.high %v3196, %v3196
    %v3199 = vunpack.c.l.s4 1966171168
    %v3200 = vunpack.c.0.s8 %v3199
    %v3201 = vlaneseq
    %v3202 = vshrl.u32 %v3201, 7
    %v3203 = vsub.s32 %v3200, %v3202
    %v3204 = vrot.slane %v3196, %v3203
    %v3206 = vunpack.c.l.s4 1966171168
    %v3207 = vunpack.c.0.s8 %v3206
    %v3208 = vlaneseq
    %v3209 = vshrl.u32 %v3208, 7
    %v3210 = vsub.s32 %v3207, %v3209
    %v3211 = vrot.slane %v3197, %v3210
    %v3212 = vcombine.high %v3204, %v3204
    %v3213 = vcombine.high %v3211, %v3211
    %v3214 = vlaneseq
    %v3215 = vshrl.u32 %v3214, 7
    %v3216 = vsub.s32 0, %v3215
    %v3217 = vrot.slane %v3204, %v3216
    %v3218 = vlaneseq
    %v3219 = vshrl.u32 %v3218, 7
    %v3220 = vsub.s32 0, %v3219
    %v3221 = vrot.slane %v3211, %v3220
    %v3222 = vlaneseq
    %v3223 = vshrl.u32 %v3222, 7
    %v3224 = vsub.s32 0, %v3223
    %v3225 = vrot.slane %v3212, %v3224
    %v3226 = vlaneseq
    %v3227 = vshrl.u32 %v3226, 7
    %v3228 = vsub.s32 0, %v3227
    %v3229 = vrot.slane %v3213, %v3228
    %v3234 = vsub.f32 %v3217, %v3139
    %v3235 = vsub.f32 %v3221, %v3139
    %v3236 = vsub.f32 %v3225, %v3139
    %v3237 = vsub.f32 %v3229, %v3139
    %v3238 = vsub.f32 %v3168, %v3139
    %v3239 = vsub.f32 %v3172, %v3139
    %v3240 = vsub.f32 %v3176, %v3139
    %v3241 = vsub.f32 %v3180, %v3139
    %v3242 = vmul.f32 %v3185, %v3185
    %v3243 = vmul.f32 %v3186, %v3186
    %v3244 = vmul.f32 %v3187, %v3187
    %v3245 = vmul.f32 %v3188, %v3188
    %v3246 = vadd.f32 %v3116, %v3242
    %v3247 = vadd.f32 %v3117, %v3243
    %v3248 = vadd.f32 %v3118, %v3244
    %v3249 = vadd.f32 %v3119, %v3245
    %v3250 = vmul.f32 %v3234, %v3234
    %v3251 = vmul.f32 %v3235, %v3235
    %v3252 = vmul.f32 %v3236, %v3236
    %v3253 = vmul.f32 %v3237, %v3237
    %v3254 = vadd.f32 %v3124, %v3250
    %v3255 = vadd.f32 %v3125, %v3251
    %v3256 = vadd.f32 %v3126, %v3252
    %v3257 = vadd.f32 %v3127, %v3253
    %v3258 = vmul.f32 %v3238, %v3238
    %v3259 = vmul.f32 %v3239, %v3239
    %v3260 = vmul.f32 %v3240, %v3240
    %v3261 = vmul.f32 %v3241, %v3241
    %v3262 = vadd.f32 %v3132, %v3258
    %v3263 = vadd.f32 %v3133, %v3259
    %v3264 = vadd.f32 %v3134, %v3260
    %v3265 = vadd.f32 %v3135, %v3261
    %s3266 = scalar_lea.vmem %s0, 100
    %v3267 = vld [vmem:[%s3266] sm:$0xf]
    %s3268 = scalar_lea.vmem %s1, 100
    %v3269 = vld [vmem:[%s3268] sm:$0xf]
    %v3272 = vunpack.c.l.s4 1966171168
    %v3273 = vunpack.c.0.s8 %v3272
    %v3274 = vlaneseq
    %v3275 = vshrl.u32 %v3274, 7
    %v3276 = vsub.s32 %v3273, %v3275
    %v3277 = vrot.slane %v3267, %v3276
    %v3278 = vcombine.high %v3277, %v3277
    %v3280 = vunpack.c.l.s4 1966171168
    %v3281 = vunpack.c.0.s8 %v3280
    %v3282 = vlaneseq
    %v3283 = vshrl.u32 %v3282, 7
    %v3284 = vsub.s32 %v3281, %v3283
    %v3285 = vrot.slane %v3277, %v3284
    %v3287 = vunpack.c.l.s4 1966171168
    %v3288 = vunpack.c.0.s8 %v3287
    %v3289 = vlaneseq
    %v3290 = vshrl.u32 %v3289, 7
    %v3291 = vsub.s32 %v3288, %v3290
    %v3292 = vrot.slane %v3278, %v3291
    %v3293 = vcombine.high %v3285, %v3285
    %v3294 = vcombine.high %v3292, %v3292
    %v3295 = vlaneseq
    %v3296 = vshrl.u32 %v3295, 7
    %v3297 = vsub.s32 0, %v3296
    %v3298 = vrot.slane %v3285, %v3297
    %v3299 = vlaneseq
    %v3300 = vshrl.u32 %v3299, 7
    %v3301 = vsub.s32 0, %v3300
    %v3302 = vrot.slane %v3292, %v3301
    %v3303 = vlaneseq
    %v3304 = vshrl.u32 %v3303, 7
    %v3305 = vsub.s32 0, %v3304
    %v3306 = vrot.slane %v3293, %v3305
    %v3307 = vlaneseq
    %v3308 = vshrl.u32 %v3307, 7
    %v3309 = vsub.s32 0, %v3308
    %v3310 = vrot.slane %v3294, %v3309
    %v3315 = vsub.f32 %v3298, %v3267
    %v3316 = vsub.f32 %v3302, %v3267
    %v3317 = vsub.f32 %v3306, %v3267
    %v3318 = vsub.f32 %v3310, %v3267
    %v3321 = vunpack.c.l.s4 1966171168
    %v3322 = vunpack.c.0.s8 %v3321
    %v3323 = vlaneseq
    %v3324 = vshrl.u32 %v3323, 7
    %v3325 = vsub.s32 %v3322, %v3324
    %v3326 = vrot.slane %v3269, %v3325
    %v3327 = vcombine.high %v3326, %v3326
    %v3329 = vunpack.c.l.s4 1966171168
    %v3330 = vunpack.c.0.s8 %v3329
    %v3331 = vlaneseq
    %v3332 = vshrl.u32 %v3331, 7
    %v3333 = vsub.s32 %v3330, %v3332
    %v3334 = vrot.slane %v3326, %v3333
    %v3336 = vunpack.c.l.s4 1966171168
    %v3337 = vunpack.c.0.s8 %v3336
    %v3338 = vlaneseq
    %v3339 = vshrl.u32 %v3338, 7
    %v3340 = vsub.s32 %v3337, %v3339
    %v3341 = vrot.slane %v3327, %v3340
    %v3342 = vcombine.high %v3334, %v3334
    %v3343 = vcombine.high %v3341, %v3341
    %v3344 = vlaneseq
    %v3345 = vshrl.u32 %v3344, 7
    %v3346 = vsub.s32 0, %v3345
    %v3347 = vrot.slane %v3334, %v3346
    %v3348 = vlaneseq
    %v3349 = vshrl.u32 %v3348, 7
    %v3350 = vsub.s32 0, %v3349
    %v3351 = vrot.slane %v3341, %v3350
    %v3352 = vlaneseq
    %v3353 = vshrl.u32 %v3352, 7
    %v3354 = vsub.s32 0, %v3353
    %v3355 = vrot.slane %v3342, %v3354
    %v3356 = vlaneseq
    %v3357 = vshrl.u32 %v3356, 7
    %v3358 = vsub.s32 0, %v3357
    %v3359 = vrot.slane %v3343, %v3358
    %v3364 = vsub.f32 %v3347, %v3269
    %v3365 = vsub.f32 %v3351, %v3269
    %v3366 = vsub.f32 %v3355, %v3269
    %v3367 = vsub.f32 %v3359, %v3269
    %v3368 = vsub.f32 %v3298, %v3269
    %v3369 = vsub.f32 %v3302, %v3269
    %v3370 = vsub.f32 %v3306, %v3269
    %v3371 = vsub.f32 %v3310, %v3269
    %v3372 = vmul.f32 %v3315, %v3315
    %v3373 = vmul.f32 %v3316, %v3316
    %v3374 = vmul.f32 %v3317, %v3317
    %v3375 = vmul.f32 %v3318, %v3318
    %v3376 = vadd.f32 %v3246, %v3372
    %v3377 = vadd.f32 %v3247, %v3373
    %v3378 = vadd.f32 %v3248, %v3374
    %v3379 = vadd.f32 %v3249, %v3375
    %v3380 = vmul.f32 %v3364, %v3364
    %v3381 = vmul.f32 %v3365, %v3365
    %v3382 = vmul.f32 %v3366, %v3366
    %v3383 = vmul.f32 %v3367, %v3367
    %v3384 = vadd.f32 %v3254, %v3380
    %v3385 = vadd.f32 %v3255, %v3381
    %v3386 = vadd.f32 %v3256, %v3382
    %v3387 = vadd.f32 %v3257, %v3383
    %v3388 = vmul.f32 %v3368, %v3368
    %v3389 = vmul.f32 %v3369, %v3369
    %v3390 = vmul.f32 %v3370, %v3370
    %v3391 = vmul.f32 %v3371, %v3371
    %v3392 = vadd.f32 %v3262, %v3388
    %v3393 = vadd.f32 %v3263, %v3389
    %v3394 = vadd.f32 %v3264, %v3390
    %v3395 = vadd.f32 %v3265, %v3391
    %s3396 = scalar_lea.vmem %s0, 104
    %v3397 = vld [vmem:[%s3396] sm:$0xf]
    %s3398 = scalar_lea.vmem %s1, 104
    %v3399 = vld [vmem:[%s3398] sm:$0xf]
    %v3402 = vunpack.c.l.s4 1966171168
    %v3403 = vunpack.c.0.s8 %v3402
    %v3404 = vlaneseq
    %v3405 = vshrl.u32 %v3404, 7
    %v3406 = vsub.s32 %v3403, %v3405
    %v3407 = vrot.slane %v3397, %v3406
    %v3408 = vcombine.high %v3407, %v3407
    %v3410 = vunpack.c.l.s4 1966171168
    %v3411 = vunpack.c.0.s8 %v3410
    %v3412 = vlaneseq
    %v3413 = vshrl.u32 %v3412, 7
    %v3414 = vsub.s32 %v3411, %v3413
    %v3415 = vrot.slane %v3407, %v3414
    %v3417 = vunpack.c.l.s4 1966171168
    %v3418 = vunpack.c.0.s8 %v3417
    %v3419 = vlaneseq
    %v3420 = vshrl.u32 %v3419, 7
    %v3421 = vsub.s32 %v3418, %v3420
    %v3422 = vrot.slane %v3408, %v3421
    %v3423 = vcombine.high %v3415, %v3415
    %v3424 = vcombine.high %v3422, %v3422
    %v3425 = vlaneseq
    %v3426 = vshrl.u32 %v3425, 7
    %v3427 = vsub.s32 0, %v3426
    %v3428 = vrot.slane %v3415, %v3427
    %v3429 = vlaneseq
    %v3430 = vshrl.u32 %v3429, 7
    %v3431 = vsub.s32 0, %v3430
    %v3432 = vrot.slane %v3422, %v3431
    %v3433 = vlaneseq
    %v3434 = vshrl.u32 %v3433, 7
    %v3435 = vsub.s32 0, %v3434
    %v3436 = vrot.slane %v3423, %v3435
    %v3437 = vlaneseq
    %v3438 = vshrl.u32 %v3437, 7
    %v3439 = vsub.s32 0, %v3438
    %v3440 = vrot.slane %v3424, %v3439
    %v3445 = vsub.f32 %v3428, %v3397
    %v3446 = vsub.f32 %v3432, %v3397
    %v3447 = vsub.f32 %v3436, %v3397
    %v3448 = vsub.f32 %v3440, %v3397
    %v3451 = vunpack.c.l.s4 1966171168
    %v3452 = vunpack.c.0.s8 %v3451
    %v3453 = vlaneseq
    %v3454 = vshrl.u32 %v3453, 7
    %v3455 = vsub.s32 %v3452, %v3454
    %v3456 = vrot.slane %v3399, %v3455
    %v3457 = vcombine.high %v3456, %v3456
    %v3459 = vunpack.c.l.s4 1966171168
    %v3460 = vunpack.c.0.s8 %v3459
    %v3461 = vlaneseq
    %v3462 = vshrl.u32 %v3461, 7
    %v3463 = vsub.s32 %v3460, %v3462
    %v3464 = vrot.slane %v3456, %v3463
    %v3466 = vunpack.c.l.s4 1966171168
    %v3467 = vunpack.c.0.s8 %v3466
    %v3468 = vlaneseq
    %v3469 = vshrl.u32 %v3468, 7
    %v3470 = vsub.s32 %v3467, %v3469
    %v3471 = vrot.slane %v3457, %v3470
    %v3472 = vcombine.high %v3464, %v3464
    %v3473 = vcombine.high %v3471, %v3471
    %v3474 = vlaneseq
    %v3475 = vshrl.u32 %v3474, 7
    %v3476 = vsub.s32 0, %v3475
    %v3477 = vrot.slane %v3464, %v3476
    %v3478 = vlaneseq
    %v3479 = vshrl.u32 %v3478, 7
    %v3480 = vsub.s32 0, %v3479
    %v3481 = vrot.slane %v3471, %v3480
    %v3482 = vlaneseq
    %v3483 = vshrl.u32 %v3482, 7
    %v3484 = vsub.s32 0, %v3483
    %v3485 = vrot.slane %v3472, %v3484
    %v3486 = vlaneseq
    %v3487 = vshrl.u32 %v3486, 7
    %v3488 = vsub.s32 0, %v3487
    %v3489 = vrot.slane %v3473, %v3488
    %v3494 = vsub.f32 %v3477, %v3399
    %v3495 = vsub.f32 %v3481, %v3399
    %v3496 = vsub.f32 %v3485, %v3399
    %v3497 = vsub.f32 %v3489, %v3399
    %v3498 = vsub.f32 %v3428, %v3399
    %v3499 = vsub.f32 %v3432, %v3399
    %v3500 = vsub.f32 %v3436, %v3399
    %v3501 = vsub.f32 %v3440, %v3399
    %v3502 = vmul.f32 %v3445, %v3445
    %v3503 = vmul.f32 %v3446, %v3446
    %v3504 = vmul.f32 %v3447, %v3447
    %v3505 = vmul.f32 %v3448, %v3448
    %v3506 = vadd.f32 %v3376, %v3502
    %v3507 = vadd.f32 %v3377, %v3503
    %v3508 = vadd.f32 %v3378, %v3504
    %v3509 = vadd.f32 %v3379, %v3505
    %v3510 = vmul.f32 %v3494, %v3494
    %v3511 = vmul.f32 %v3495, %v3495
    %v3512 = vmul.f32 %v3496, %v3496
    %v3513 = vmul.f32 %v3497, %v3497
    %v3514 = vadd.f32 %v3384, %v3510
    %v3515 = vadd.f32 %v3385, %v3511
    %v3516 = vadd.f32 %v3386, %v3512
    %v3517 = vadd.f32 %v3387, %v3513
    %v3518 = vmul.f32 %v3498, %v3498
    %v3519 = vmul.f32 %v3499, %v3499
    %v3520 = vmul.f32 %v3500, %v3500
    %v3521 = vmul.f32 %v3501, %v3501
    %v3522 = vadd.f32 %v3392, %v3518
    %v3523 = vadd.f32 %v3393, %v3519
    %v3524 = vadd.f32 %v3394, %v3520
    %v3525 = vadd.f32 %v3395, %v3521
    %s3526 = scalar_lea.vmem %s0, 108
    %v3527 = vld [vmem:[%s3526] sm:$0xf]
    %s3528 = scalar_lea.vmem %s1, 108
    %v3529 = vld [vmem:[%s3528] sm:$0xf]
    %v3532 = vunpack.c.l.s4 1966171168
    %v3533 = vunpack.c.0.s8 %v3532
    %v3534 = vlaneseq
    %v3535 = vshrl.u32 %v3534, 7
    %v3536 = vsub.s32 %v3533, %v3535
    %v3537 = vrot.slane %v3527, %v3536
    %v3538 = vcombine.high %v3537, %v3537
    %v3540 = vunpack.c.l.s4 1966171168
    %v3541 = vunpack.c.0.s8 %v3540
    %v3542 = vlaneseq
    %v3543 = vshrl.u32 %v3542, 7
    %v3544 = vsub.s32 %v3541, %v3543
    %v3545 = vrot.slane %v3537, %v3544
    %v3547 = vunpack.c.l.s4 1966171168
    %v3548 = vunpack.c.0.s8 %v3547
    %v3549 = vlaneseq
    %v3550 = vshrl.u32 %v3549, 7
    %v3551 = vsub.s32 %v3548, %v3550
    %v3552 = vrot.slane %v3538, %v3551
    %v3553 = vcombine.high %v3545, %v3545
    %v3554 = vcombine.high %v3552, %v3552
    %v3555 = vlaneseq
    %v3556 = vshrl.u32 %v3555, 7
    %v3557 = vsub.s32 0, %v3556
    %v3558 = vrot.slane %v3545, %v3557
    %v3559 = vlaneseq
    %v3560 = vshrl.u32 %v3559, 7
    %v3561 = vsub.s32 0, %v3560
    %v3562 = vrot.slane %v3552, %v3561
    %v3563 = vlaneseq
    %v3564 = vshrl.u32 %v3563, 7
    %v3565 = vsub.s32 0, %v3564
    %v3566 = vrot.slane %v3553, %v3565
    %v3567 = vlaneseq
    %v3568 = vshrl.u32 %v3567, 7
    %v3569 = vsub.s32 0, %v3568
    %v3570 = vrot.slane %v3554, %v3569
    %v3575 = vsub.f32 %v3558, %v3527
    %v3576 = vsub.f32 %v3562, %v3527
    %v3577 = vsub.f32 %v3566, %v3527
    %v3578 = vsub.f32 %v3570, %v3527
    %v3581 = vunpack.c.l.s4 1966171168
    %v3582 = vunpack.c.0.s8 %v3581
    %v3583 = vlaneseq
    %v3584 = vshrl.u32 %v3583, 7
    %v3585 = vsub.s32 %v3582, %v3584
    %v3586 = vrot.slane %v3529, %v3585
    %v3587 = vcombine.high %v3586, %v3586
    %v3589 = vunpack.c.l.s4 1966171168
    %v3590 = vunpack.c.0.s8 %v3589
    %v3591 = vlaneseq
    %v3592 = vshrl.u32 %v3591, 7
    %v3593 = vsub.s32 %v3590, %v3592
    %v3594 = vrot.slane %v3586, %v3593
    %v3596 = vunpack.c.l.s4 1966171168
    %v3597 = vunpack.c.0.s8 %v3596
    %v3598 = vlaneseq
    %v3599 = vshrl.u32 %v3598, 7
    %v3600 = vsub.s32 %v3597, %v3599
    %v3601 = vrot.slane %v3587, %v3600
    %v3602 = vcombine.high %v3594, %v3594
    %v3603 = vcombine.high %v3601, %v3601
    %v3604 = vlaneseq
    %v3605 = vshrl.u32 %v3604, 7
    %v3606 = vsub.s32 0, %v3605
    %v3607 = vrot.slane %v3594, %v3606
    %v3608 = vlaneseq
    %v3609 = vshrl.u32 %v3608, 7
    %v3610 = vsub.s32 0, %v3609
    %v3611 = vrot.slane %v3601, %v3610
    %v3612 = vlaneseq
    %v3613 = vshrl.u32 %v3612, 7
    %v3614 = vsub.s32 0, %v3613
    %v3615 = vrot.slane %v3602, %v3614
    %v3616 = vlaneseq
    %v3617 = vshrl.u32 %v3616, 7
    %v3618 = vsub.s32 0, %v3617
    %v3619 = vrot.slane %v3603, %v3618
    %v3624 = vsub.f32 %v3607, %v3529
    %v3625 = vsub.f32 %v3611, %v3529
    %v3626 = vsub.f32 %v3615, %v3529
    %v3627 = vsub.f32 %v3619, %v3529
    %v3628 = vsub.f32 %v3558, %v3529
    %v3629 = vsub.f32 %v3562, %v3529
    %v3630 = vsub.f32 %v3566, %v3529
    %v3631 = vsub.f32 %v3570, %v3529
    %v3632 = vmul.f32 %v3575, %v3575
    %v3633 = vmul.f32 %v3576, %v3576
    %v3634 = vmul.f32 %v3577, %v3577
    %v3635 = vmul.f32 %v3578, %v3578
    %v3636 = vadd.f32 %v3506, %v3632
    %v3637 = vadd.f32 %v3507, %v3633
    %v3638 = vadd.f32 %v3508, %v3634
    %v3639 = vadd.f32 %v3509, %v3635
    %v3640 = vmul.f32 %v3624, %v3624
    %v3641 = vmul.f32 %v3625, %v3625
    %v3642 = vmul.f32 %v3626, %v3626
    %v3643 = vmul.f32 %v3627, %v3627
    %v3644 = vadd.f32 %v3514, %v3640
    %v3645 = vadd.f32 %v3515, %v3641
    %v3646 = vadd.f32 %v3516, %v3642
    %v3647 = vadd.f32 %v3517, %v3643
    %v3648 = vmul.f32 %v3628, %v3628
    %v3649 = vmul.f32 %v3629, %v3629
    %v3650 = vmul.f32 %v3630, %v3630
    %v3651 = vmul.f32 %v3631, %v3631
    %v3652 = vadd.f32 %v3522, %v3648
    %v3653 = vadd.f32 %v3523, %v3649
    %v3654 = vadd.f32 %v3524, %v3650
    %v3655 = vadd.f32 %v3525, %v3651
    %s3656 = scalar_lea.vmem %s0, 112
    %v3657 = vld [vmem:[%s3656] sm:$0xf]
    %s3658 = scalar_lea.vmem %s1, 112
    %v3659 = vld [vmem:[%s3658] sm:$0xf]
    %v3662 = vunpack.c.l.s4 1966171168
    %v3663 = vunpack.c.0.s8 %v3662
    %v3664 = vlaneseq
    %v3665 = vshrl.u32 %v3664, 7
    %v3666 = vsub.s32 %v3663, %v3665
    %v3667 = vrot.slane %v3657, %v3666
    %v3668 = vcombine.high %v3667, %v3667
    %v3670 = vunpack.c.l.s4 1966171168
    %v3671 = vunpack.c.0.s8 %v3670
    %v3672 = vlaneseq
    %v3673 = vshrl.u32 %v3672, 7
    %v3674 = vsub.s32 %v3671, %v3673
    %v3675 = vrot.slane %v3667, %v3674
    %v3677 = vunpack.c.l.s4 1966171168
    %v3678 = vunpack.c.0.s8 %v3677
    %v3679 = vlaneseq
    %v3680 = vshrl.u32 %v3679, 7
    %v3681 = vsub.s32 %v3678, %v3680
    %v3682 = vrot.slane %v3668, %v3681
    %v3683 = vcombine.high %v3675, %v3675
    %v3684 = vcombine.high %v3682, %v3682
    %v3685 = vlaneseq
    %v3686 = vshrl.u32 %v3685, 7
    %v3687 = vsub.s32 0, %v3686
    %v3688 = vrot.slane %v3675, %v3687
    %v3689 = vlaneseq
    %v3690 = vshrl.u32 %v3689, 7
    %v3691 = vsub.s32 0, %v3690
    %v3692 = vrot.slane %v3682, %v3691
    %v3693 = vlaneseq
    %v3694 = vshrl.u32 %v3693, 7
    %v3695 = vsub.s32 0, %v3694
    %v3696 = vrot.slane %v3683, %v3695
    %v3697 = vlaneseq
    %v3698 = vshrl.u32 %v3697, 7
    %v3699 = vsub.s32 0, %v3698
    %v3700 = vrot.slane %v3684, %v3699
    %v3705 = vsub.f32 %v3688, %v3657
    %v3706 = vsub.f32 %v3692, %v3657
    %v3707 = vsub.f32 %v3696, %v3657
    %v3708 = vsub.f32 %v3700, %v3657
    %v3711 = vunpack.c.l.s4 1966171168
    %v3712 = vunpack.c.0.s8 %v3711
    %v3713 = vlaneseq
    %v3714 = vshrl.u32 %v3713, 7
    %v3715 = vsub.s32 %v3712, %v3714
    %v3716 = vrot.slane %v3659, %v3715
    %v3717 = vcombine.high %v3716, %v3716
    %v3719 = vunpack.c.l.s4 1966171168
    %v3720 = vunpack.c.0.s8 %v3719
    %v3721 = vlaneseq
    %v3722 = vshrl.u32 %v3721, 7
    %v3723 = vsub.s32 %v3720, %v3722
    %v3724 = vrot.slane %v3716, %v3723
    %v3726 = vunpack.c.l.s4 1966171168
    %v3727 = vunpack.c.0.s8 %v3726
    %v3728 = vlaneseq
    %v3729 = vshrl.u32 %v3728, 7
    %v3730 = vsub.s32 %v3727, %v3729
    %v3731 = vrot.slane %v3717, %v3730
    %v3732 = vcombine.high %v3724, %v3724
    %v3733 = vcombine.high %v3731, %v3731
    %v3734 = vlaneseq
    %v3735 = vshrl.u32 %v3734, 7
    %v3736 = vsub.s32 0, %v3735
    %v3737 = vrot.slane %v3724, %v3736
    %v3738 = vlaneseq
    %v3739 = vshrl.u32 %v3738, 7
    %v3740 = vsub.s32 0, %v3739
    %v3741 = vrot.slane %v3731, %v3740
    %v3742 = vlaneseq
    %v3743 = vshrl.u32 %v3742, 7
    %v3744 = vsub.s32 0, %v3743
    %v3745 = vrot.slane %v3732, %v3744
    %v3746 = vlaneseq
    %v3747 = vshrl.u32 %v3746, 7
    %v3748 = vsub.s32 0, %v3747
    %v3749 = vrot.slane %v3733, %v3748
    %v3754 = vsub.f32 %v3737, %v3659
    %v3755 = vsub.f32 %v3741, %v3659
    %v3756 = vsub.f32 %v3745, %v3659
    %v3757 = vsub.f32 %v3749, %v3659
    %v3758 = vsub.f32 %v3688, %v3659
    %v3759 = vsub.f32 %v3692, %v3659
    %v3760 = vsub.f32 %v3696, %v3659
    %v3761 = vsub.f32 %v3700, %v3659
    %v3762 = vmul.f32 %v3705, %v3705
    %v3763 = vmul.f32 %v3706, %v3706
    %v3764 = vmul.f32 %v3707, %v3707
    %v3765 = vmul.f32 %v3708, %v3708
    %v3766 = vadd.f32 %v3636, %v3762
    %v3767 = vadd.f32 %v3637, %v3763
    %v3768 = vadd.f32 %v3638, %v3764
    %v3769 = vadd.f32 %v3639, %v3765
    %v3770 = vmul.f32 %v3754, %v3754
    %v3771 = vmul.f32 %v3755, %v3755
    %v3772 = vmul.f32 %v3756, %v3756
    %v3773 = vmul.f32 %v3757, %v3757
    %v3774 = vadd.f32 %v3644, %v3770
    %v3775 = vadd.f32 %v3645, %v3771
    %v3776 = vadd.f32 %v3646, %v3772
    %v3777 = vadd.f32 %v3647, %v3773
    %v3778 = vmul.f32 %v3758, %v3758
    %v3779 = vmul.f32 %v3759, %v3759
    %v3780 = vmul.f32 %v3760, %v3760
    %v3781 = vmul.f32 %v3761, %v3761
    %v3782 = vadd.f32 %v3652, %v3778
    %v3783 = vadd.f32 %v3653, %v3779
    %v3784 = vadd.f32 %v3654, %v3780
    %v3785 = vadd.f32 %v3655, %v3781
    %s3786 = scalar_lea.vmem %s0, 116
    %v3787 = vld [vmem:[%s3786] sm:$0xf]
    %s3788 = scalar_lea.vmem %s1, 116
    %v3789 = vld [vmem:[%s3788] sm:$0xf]
    %v3792 = vunpack.c.l.s4 1966171168
    %v3793 = vunpack.c.0.s8 %v3792
    %v3794 = vlaneseq
    %v3795 = vshrl.u32 %v3794, 7
    %v3796 = vsub.s32 %v3793, %v3795
    %v3797 = vrot.slane %v3787, %v3796
    %v3798 = vcombine.high %v3797, %v3797
    %v3800 = vunpack.c.l.s4 1966171168
    %v3801 = vunpack.c.0.s8 %v3800
    %v3802 = vlaneseq
    %v3803 = vshrl.u32 %v3802, 7
    %v3804 = vsub.s32 %v3801, %v3803
    %v3805 = vrot.slane %v3797, %v3804
    %v3807 = vunpack.c.l.s4 1966171168
    %v3808 = vunpack.c.0.s8 %v3807
    %v3809 = vlaneseq
    %v3810 = vshrl.u32 %v3809, 7
    %v3811 = vsub.s32 %v3808, %v3810
    %v3812 = vrot.slane %v3798, %v3811
    %v3813 = vcombine.high %v3805, %v3805
    %v3814 = vcombine.high %v3812, %v3812
    %v3815 = vlaneseq
    %v3816 = vshrl.u32 %v3815, 7
    %v3817 = vsub.s32 0, %v3816
    %v3818 = vrot.slane %v3805, %v3817
    %v3819 = vlaneseq
    %v3820 = vshrl.u32 %v3819, 7
    %v3821 = vsub.s32 0, %v3820
    %v3822 = vrot.slane %v3812, %v3821
    %v3823 = vlaneseq
    %v3824 = vshrl.u32 %v3823, 7
    %v3825 = vsub.s32 0, %v3824
    %v3826 = vrot.slane %v3813, %v3825
    %v3827 = vlaneseq
    %v3828 = vshrl.u32 %v3827, 7
    %v3829 = vsub.s32 0, %v3828
    %v3830 = vrot.slane %v3814, %v3829
    %v3835 = vsub.f32 %v3818, %v3787
    %v3836 = vsub.f32 %v3822, %v3787
    %v3837 = vsub.f32 %v3826, %v3787
    %v3838 = vsub.f32 %v3830, %v3787
    %v3841 = vunpack.c.l.s4 1966171168
    %v3842 = vunpack.c.0.s8 %v3841
    %v3843 = vlaneseq
    %v3844 = vshrl.u32 %v3843, 7
    %v3845 = vsub.s32 %v3842, %v3844
    %v3846 = vrot.slane %v3789, %v3845
    %v3847 = vcombine.high %v3846, %v3846
    %v3849 = vunpack.c.l.s4 1966171168
    %v3850 = vunpack.c.0.s8 %v3849
    %v3851 = vlaneseq
    %v3852 = vshrl.u32 %v3851, 7
    %v3853 = vsub.s32 %v3850, %v3852
    %v3854 = vrot.slane %v3846, %v3853
    %v3856 = vunpack.c.l.s4 1966171168
    %v3857 = vunpack.c.0.s8 %v3856
    %v3858 = vlaneseq
    %v3859 = vshrl.u32 %v3858, 7
    %v3860 = vsub.s32 %v3857, %v3859
    %v3861 = vrot.slane %v3847, %v3860
    %v3862 = vcombine.high %v3854, %v3854
    %v3863 = vcombine.high %v3861, %v3861
    %v3864 = vlaneseq
    %v3865 = vshrl.u32 %v3864, 7
    %v3866 = vsub.s32 0, %v3865
    %v3867 = vrot.slane %v3854, %v3866
    %v3868 = vlaneseq
    %v3869 = vshrl.u32 %v3868, 7
    %v3870 = vsub.s32 0, %v3869
    %v3871 = vrot.slane %v3861, %v3870
    %v3872 = vlaneseq
    %v3873 = vshrl.u32 %v3872, 7
    %v3874 = vsub.s32 0, %v3873
    %v3875 = vrot.slane %v3862, %v3874
    %v3876 = vlaneseq
    %v3877 = vshrl.u32 %v3876, 7
    %v3878 = vsub.s32 0, %v3877
    %v3879 = vrot.slane %v3863, %v3878
    %v3884 = vsub.f32 %v3867, %v3789
    %v3885 = vsub.f32 %v3871, %v3789
    %v3886 = vsub.f32 %v3875, %v3789
    %v3887 = vsub.f32 %v3879, %v3789
    %v3888 = vsub.f32 %v3818, %v3789
    %v3889 = vsub.f32 %v3822, %v3789
    %v3890 = vsub.f32 %v3826, %v3789
    %v3891 = vsub.f32 %v3830, %v3789
    %v3892 = vmul.f32 %v3835, %v3835
    %v3893 = vmul.f32 %v3836, %v3836
    %v3894 = vmul.f32 %v3837, %v3837
    %v3895 = vmul.f32 %v3838, %v3838
    %v3896 = vadd.f32 %v3766, %v3892
    %v3897 = vadd.f32 %v3767, %v3893
    %v3898 = vadd.f32 %v3768, %v3894
    %v3899 = vadd.f32 %v3769, %v3895
    %v3900 = vmul.f32 %v3884, %v3884
    %v3901 = vmul.f32 %v3885, %v3885
    %v3902 = vmul.f32 %v3886, %v3886
    %v3903 = vmul.f32 %v3887, %v3887
    %v3904 = vadd.f32 %v3774, %v3900
    %v3905 = vadd.f32 %v3775, %v3901
    %v3906 = vadd.f32 %v3776, %v3902
    %v3907 = vadd.f32 %v3777, %v3903
    %v3908 = vmul.f32 %v3888, %v3888
    %v3909 = vmul.f32 %v3889, %v3889
    %v3910 = vmul.f32 %v3890, %v3890
    %v3911 = vmul.f32 %v3891, %v3891
    %v3912 = vadd.f32 %v3782, %v3908
    %v3913 = vadd.f32 %v3783, %v3909
    %v3914 = vadd.f32 %v3784, %v3910
    %v3915 = vadd.f32 %v3785, %v3911
    %s3916 = scalar_lea.vmem %s0, 120
    %v3917 = vld [vmem:[%s3916] sm:$0xf]
    %s3918 = scalar_lea.vmem %s1, 120
    %v3919 = vld [vmem:[%s3918] sm:$0xf]
    %v3922 = vunpack.c.l.s4 1966171168
    %v3923 = vunpack.c.0.s8 %v3922
    %v3924 = vlaneseq
    %v3925 = vshrl.u32 %v3924, 7
    %v3926 = vsub.s32 %v3923, %v3925
    %v3927 = vrot.slane %v3917, %v3926
    %v3928 = vcombine.high %v3927, %v3927
    %v3930 = vunpack.c.l.s4 1966171168
    %v3931 = vunpack.c.0.s8 %v3930
    %v3932 = vlaneseq
    %v3933 = vshrl.u32 %v3932, 7
    %v3934 = vsub.s32 %v3931, %v3933
    %v3935 = vrot.slane %v3927, %v3934
    %v3937 = vunpack.c.l.s4 1966171168
    %v3938 = vunpack.c.0.s8 %v3937
    %v3939 = vlaneseq
    %v3940 = vshrl.u32 %v3939, 7
    %v3941 = vsub.s32 %v3938, %v3940
    %v3942 = vrot.slane %v3928, %v3941
    %v3943 = vcombine.high %v3935, %v3935
    %v3944 = vcombine.high %v3942, %v3942
    %v3945 = vlaneseq
    %v3946 = vshrl.u32 %v3945, 7
    %v3947 = vsub.s32 0, %v3946
    %v3948 = vrot.slane %v3935, %v3947
    %v3949 = vlaneseq
    %v3950 = vshrl.u32 %v3949, 7
    %v3951 = vsub.s32 0, %v3950
    %v3952 = vrot.slane %v3942, %v3951
    %v3953 = vlaneseq
    %v3954 = vshrl.u32 %v3953, 7
    %v3955 = vsub.s32 0, %v3954
    %v3956 = vrot.slane %v3943, %v3955
    %v3957 = vlaneseq
    %v3958 = vshrl.u32 %v3957, 7
    %v3959 = vsub.s32 0, %v3958
    %v3960 = vrot.slane %v3944, %v3959
    %v3965 = vsub.f32 %v3948, %v3917
    %v3966 = vsub.f32 %v3952, %v3917
    %v3967 = vsub.f32 %v3956, %v3917
    %v3968 = vsub.f32 %v3960, %v3917
    %v3971 = vunpack.c.l.s4 1966171168
    %v3972 = vunpack.c.0.s8 %v3971
    %v3973 = vlaneseq
    %v3974 = vshrl.u32 %v3973, 7
    %v3975 = vsub.s32 %v3972, %v3974
    %v3976 = vrot.slane %v3919, %v3975
    %v3977 = vcombine.high %v3976, %v3976
    %v3979 = vunpack.c.l.s4 1966171168
    %v3980 = vunpack.c.0.s8 %v3979
    %v3981 = vlaneseq
    %v3982 = vshrl.u32 %v3981, 7
    %v3983 = vsub.s32 %v3980, %v3982
    %v3984 = vrot.slane %v3976, %v3983
    %v3986 = vunpack.c.l.s4 1966171168
    %v3987 = vunpack.c.0.s8 %v3986
    %v3988 = vlaneseq
    %v3989 = vshrl.u32 %v3988, 7
    %v3990 = vsub.s32 %v3987, %v3989
    %v3991 = vrot.slane %v3977, %v3990
    %v3992 = vcombine.high %v3984, %v3984
    %v3993 = vcombine.high %v3991, %v3991
    %v3994 = vlaneseq
    %v3995 = vshrl.u32 %v3994, 7
    %v3996 = vsub.s32 0, %v3995
    %v3997 = vrot.slane %v3984, %v3996
    %v3998 = vlaneseq
    %v3999 = vshrl.u32 %v3998, 7
    %v4000 = vsub.s32 0, %v3999
    %v4001 = vrot.slane %v3991, %v4000
    %v4002 = vlaneseq
    %v4003 = vshrl.u32 %v4002, 7
    %v4004 = vsub.s32 0, %v4003
    %v4005 = vrot.slane %v3992, %v4004
    %v4006 = vlaneseq
    %v4007 = vshrl.u32 %v4006, 7
    %v4008 = vsub.s32 0, %v4007
    %v4009 = vrot.slane %v3993, %v4008
    %v4014 = vsub.f32 %v3997, %v3919
    %v4015 = vsub.f32 %v4001, %v3919
    %v4016 = vsub.f32 %v4005, %v3919
    %v4017 = vsub.f32 %v4009, %v3919
    %v4018 = vsub.f32 %v3948, %v3919
    %v4019 = vsub.f32 %v3952, %v3919
    %v4020 = vsub.f32 %v3956, %v3919
    %v4021 = vsub.f32 %v3960, %v3919
    %v4022 = vmul.f32 %v3965, %v3965
    %v4023 = vmul.f32 %v3966, %v3966
    %v4024 = vmul.f32 %v3967, %v3967
    %v4025 = vmul.f32 %v3968, %v3968
    %v4026 = vadd.f32 %v3896, %v4022
    %v4027 = vadd.f32 %v3897, %v4023
    %v4028 = vadd.f32 %v3898, %v4024
    %v4029 = vadd.f32 %v3899, %v4025
    %v4030 = vmul.f32 %v4014, %v4014
    %v4031 = vmul.f32 %v4015, %v4015
    %v4032 = vmul.f32 %v4016, %v4016
    %v4033 = vmul.f32 %v4017, %v4017
    %v4034 = vadd.f32 %v3904, %v4030
    %v4035 = vadd.f32 %v3905, %v4031
    %v4036 = vadd.f32 %v3906, %v4032
    %v4037 = vadd.f32 %v3907, %v4033
    %v4038 = vmul.f32 %v4018, %v4018
    %v4039 = vmul.f32 %v4019, %v4019
    %v4040 = vmul.f32 %v4020, %v4020
    %v4041 = vmul.f32 %v4021, %v4021
    %v4042 = vadd.f32 %v3912, %v4038
    %v4043 = vadd.f32 %v3913, %v4039
    %v4044 = vadd.f32 %v3914, %v4040
    %v4045 = vadd.f32 %v3915, %v4041
    %s4046 = scalar_lea.vmem %s0, 124
    %v4047 = vld [vmem:[%s4046] sm:$0xf]
    %s4048 = scalar_lea.vmem %s1, 124
    %v4049 = vld [vmem:[%s4048] sm:$0xf]
    %v4052 = vunpack.c.l.s4 1966171168
    %v4053 = vunpack.c.0.s8 %v4052
    %v4054 = vlaneseq
    %v4055 = vshrl.u32 %v4054, 7
    %v4056 = vsub.s32 %v4053, %v4055
    %v4057 = vrot.slane %v4047, %v4056
    %v4058 = vcombine.high %v4057, %v4057
    %v4060 = vunpack.c.l.s4 1966171168
    %v4061 = vunpack.c.0.s8 %v4060
    %v4062 = vlaneseq
    %v4063 = vshrl.u32 %v4062, 7
    %v4064 = vsub.s32 %v4061, %v4063
    %v4065 = vrot.slane %v4057, %v4064
    %v4067 = vunpack.c.l.s4 1966171168
    %v4068 = vunpack.c.0.s8 %v4067
    %v4069 = vlaneseq
    %v4070 = vshrl.u32 %v4069, 7
    %v4071 = vsub.s32 %v4068, %v4070
    %v4072 = vrot.slane %v4058, %v4071
    %v4073 = vcombine.high %v4065, %v4065
    %v4074 = vcombine.high %v4072, %v4072
    %v4075 = vlaneseq
    %v4076 = vshrl.u32 %v4075, 7
    %v4077 = vsub.s32 0, %v4076
    %v4078 = vrot.slane %v4065, %v4077
    %v4079 = vlaneseq
    %v4080 = vshrl.u32 %v4079, 7
    %v4081 = vsub.s32 0, %v4080
    %v4082 = vrot.slane %v4072, %v4081
    %v4083 = vlaneseq
    %v4084 = vshrl.u32 %v4083, 7
    %v4085 = vsub.s32 0, %v4084
    %v4086 = vrot.slane %v4073, %v4085
    %v4087 = vlaneseq
    %v4088 = vshrl.u32 %v4087, 7
    %v4089 = vsub.s32 0, %v4088
    %v4090 = vrot.slane %v4074, %v4089
    %v4095 = vsub.f32 %v4078, %v4047
    %v4096 = vsub.f32 %v4082, %v4047
    %v4097 = vsub.f32 %v4086, %v4047
    %v4098 = vsub.f32 %v4090, %v4047
    %v4101 = vunpack.c.l.s4 1966171168
    %v4102 = vunpack.c.0.s8 %v4101
    %v4103 = vlaneseq
    %v4104 = vshrl.u32 %v4103, 7
    %v4105 = vsub.s32 %v4102, %v4104
    %v4106 = vrot.slane %v4049, %v4105
    %v4107 = vcombine.high %v4106, %v4106
    %v4109 = vunpack.c.l.s4 1966171168
    %v4110 = vunpack.c.0.s8 %v4109
    %v4111 = vlaneseq
    %v4112 = vshrl.u32 %v4111, 7
    %v4113 = vsub.s32 %v4110, %v4112
    %v4114 = vrot.slane %v4106, %v4113
    %v4116 = vunpack.c.l.s4 1966171168
    %v4117 = vunpack.c.0.s8 %v4116
    %v4118 = vlaneseq
    %v4119 = vshrl.u32 %v4118, 7
    %v4120 = vsub.s32 %v4117, %v4119
    %v4121 = vrot.slane %v4107, %v4120
    %v4122 = vcombine.high %v4114, %v4114
    %v4123 = vcombine.high %v4121, %v4121
    %v4124 = vlaneseq
    %v4125 = vshrl.u32 %v4124, 7
    %v4126 = vsub.s32 0, %v4125
    %v4127 = vrot.slane %v4114, %v4126
    %v4128 = vlaneseq
    %v4129 = vshrl.u32 %v4128, 7
    %v4130 = vsub.s32 0, %v4129
    %v4131 = vrot.slane %v4121, %v4130
    %v4132 = vlaneseq
    %v4133 = vshrl.u32 %v4132, 7
    %v4134 = vsub.s32 0, %v4133
    %v4135 = vrot.slane %v4122, %v4134
    %v4136 = vlaneseq
    %v4137 = vshrl.u32 %v4136, 7
    %v4138 = vsub.s32 0, %v4137
    %v4139 = vrot.slane %v4123, %v4138
    %v4144 = vsub.f32 %v4127, %v4049
    %v4145 = vsub.f32 %v4131, %v4049
    %v4146 = vsub.f32 %v4135, %v4049
    %v4147 = vsub.f32 %v4139, %v4049
    %v4148 = vsub.f32 %v4078, %v4049
    %v4149 = vsub.f32 %v4082, %v4049
    %v4150 = vsub.f32 %v4086, %v4049
    %v4151 = vsub.f32 %v4090, %v4049
    %v4152 = vmul.f32 %v4095, %v4095
    %v4153 = vmul.f32 %v4096, %v4096
    %v4154 = vmul.f32 %v4097, %v4097
    %v4155 = vmul.f32 %v4098, %v4098
    %v4156 = vadd.f32 %v4026, %v4152
    %v4157 = vadd.f32 %v4027, %v4153
    %v4158 = vadd.f32 %v4028, %v4154
    %v4159 = vadd.f32 %v4029, %v4155
    %v4160 = vmul.f32 %v4144, %v4144
    %v4161 = vmul.f32 %v4145, %v4145
    %v4162 = vmul.f32 %v4146, %v4146
    %v4163 = vmul.f32 %v4147, %v4147
    %v4164 = vadd.f32 %v4034, %v4160
    %v4165 = vadd.f32 %v4035, %v4161
    %v4166 = vadd.f32 %v4036, %v4162
    %v4167 = vadd.f32 %v4037, %v4163
    %v4168 = vmul.f32 %v4148, %v4148
    %v4169 = vmul.f32 %v4149, %v4149
    %v4170 = vmul.f32 %v4150, %v4150
    %v4171 = vmul.f32 %v4151, %v4151
    %v4172 = vadd.f32 %v4042, %v4168
    %v4173 = vadd.f32 %v4043, %v4169
    %v4174 = vadd.f32 %v4044, %v4170
    %v4175 = vadd.f32 %v4045, %v4171
    %v4176 = vmul.f32 %v4156, -0.0625
    %v4177 = vmul.f32 %v4157, -0.0625
    %v4178 = vmul.f32 %v4158, -0.0625
    %v4179 = vmul.f32 %v4159, -0.0625
    %v4180 = vmul.f32 %v4176, 1.442695
    %v4181 = vpow.pop %v4180
    %v4182 = vmul.f32 %v4177, 1.442695
    %v4183 = vpow.pop %v4182
    %v4184 = vmul.f32 %v4178, 1.442695
    %v4185 = vpow.pop %v4184
    %v4186 = vmul.f32 %v4179, 1.442695
    %v4187 = vpow.pop %v4186
    %v4188 = vmul.f32 %v4181, %v4181
    %v4189 = vmul.f32 %v4183, %v4183
    %v4190 = vmul.f32 %v4185, %v4185
    %v4191 = vmul.f32 %v4187, %v4187
    %v4192 = vadd.f32 %v4181, %v4188
    %v4193 = vadd.f32 %v4183, %v4189
    %v4194 = vadd.f32 %v4185, %v4190
    %v4195 = vadd.f32 %v4187, %v4191
    %v4196 = vmul.f32 %v4188, %v4188
    %v4197 = vmul.f32 %v4189, %v4189
    %v4198 = vmul.f32 %v4190, %v4190
    %v4199 = vmul.f32 %v4191, %v4191
    %v4200 = vadd.f32 %v4192, %v4196
    %v4201 = vadd.f32 %v4193, %v4197
    %v4202 = vadd.f32 %v4194, %v4198
    %v4203 = vadd.f32 %v4195, %v4199
    %v4204 = vmul.f32 %v4196, %v4196
    %v4205 = vmul.f32 %v4197, %v4197
    %v4206 = vmul.f32 %v4198, %v4198
    %v4207 = vmul.f32 %v4199, %v4199
    %v4208 = vadd.f32 %v4200, %v4204
    %v4209 = vadd.f32 %v4201, %v4205
    %v4210 = vadd.f32 %v4202, %v4206
    %v4211 = vadd.f32 %v4203, %v4207
    %v4212 = vmul.f32 %v4204, %v4204
    %v4213 = vmul.f32 %v4205, %v4205
    %v4214 = vmul.f32 %v4206, %v4206
    %v4215 = vmul.f32 %v4207, %v4207
    %v4216 = vadd.f32 %v4208, %v4212
    %v4217 = vadd.f32 %v4209, %v4213
    %v4218 = vadd.f32 %v4210, %v4214
    %v4219 = vadd.f32 %v4211, %v4215
    %v4220 = vmul.f32 %v4164, -0.0625
    %v4221 = vmul.f32 %v4165, -0.0625
    %v4222 = vmul.f32 %v4166, -0.0625
    %v4223 = vmul.f32 %v4167, -0.0625
    %v4224 = vmul.f32 %v4220, 1.442695
    %v4225 = vpow.pop %v4224
    %v4226 = vmul.f32 %v4221, 1.442695
    %v4227 = vpow.pop %v4226
    %v4228 = vmul.f32 %v4222, 1.442695
    %v4229 = vpow.pop %v4228
    %v4230 = vmul.f32 %v4223, 1.442695
    %v4231 = vpow.pop %v4230
    %v4232 = vmul.f32 %v4225, %v4225
    %v4233 = vmul.f32 %v4227, %v4227
    %v4234 = vmul.f32 %v4229, %v4229
    %v4235 = vmul.f32 %v4231, %v4231
    %v4236 = vadd.f32 %v4225, %v4232
    %v4237 = vadd.f32 %v4227, %v4233
    %v4238 = vadd.f32 %v4229, %v4234
    %v4239 = vadd.f32 %v4231, %v4235
    %v4240 = vmul.f32 %v4232, %v4232
    %v4241 = vmul.f32 %v4233, %v4233
    %v4242 = vmul.f32 %v4234, %v4234
    %v4243 = vmul.f32 %v4235, %v4235
    %v4244 = vadd.f32 %v4236, %v4240
    %v4245 = vadd.f32 %v4237, %v4241
    %v4246 = vadd.f32 %v4238, %v4242
    %v4247 = vadd.f32 %v4239, %v4243
    %v4248 = vmul.f32 %v4240, %v4240
    %v4249 = vmul.f32 %v4241, %v4241
    %v4250 = vmul.f32 %v4242, %v4242
    %v4251 = vmul.f32 %v4243, %v4243
    %v4252 = vadd.f32 %v4244, %v4248
    %v4253 = vadd.f32 %v4245, %v4249
    %v4254 = vadd.f32 %v4246, %v4250
    %v4255 = vadd.f32 %v4247, %v4251
    %v4256 = vmul.f32 %v4248, %v4248
    %v4257 = vmul.f32 %v4249, %v4249
    %v4258 = vmul.f32 %v4250, %v4250
    %v4259 = vmul.f32 %v4251, %v4251
    %v4260 = vadd.f32 %v4252, %v4256
    %v4261 = vadd.f32 %v4253, %v4257
    %v4262 = vadd.f32 %v4254, %v4258
    %v4263 = vadd.f32 %v4255, %v4259
    %v4264 = vadd.f32 %v4216, %v4260
    %v4265 = vadd.f32 %v4217, %v4261
    %v4266 = vadd.f32 %v4218, %v4262
    %v4267 = vadd.f32 %v4219, %v4263
    %v4268 = vmul.f32 %v4172, -0.0625
    %v4269 = vmul.f32 %v4173, -0.0625
    %v4270 = vmul.f32 %v4174, -0.0625
    %v4271 = vmul.f32 %v4175, -0.0625
    %v4272 = vmul.f32 %v4268, 1.442695
    %v4273 = vpow.pop %v4272
    %v4274 = vmul.f32 %v4269, 1.442695
    %v4275 = vpow.pop %v4274
    %v4276 = vmul.f32 %v4270, 1.442695
    %v4277 = vpow.pop %v4276
    %v4278 = vmul.f32 %v4271, 1.442695
    %v4279 = vpow.pop %v4278
    %v4280 = vmul.f32 %v4273, %v4273
    %v4281 = vmul.f32 %v4275, %v4275
    %v4282 = vmul.f32 %v4277, %v4277
    %v4283 = vmul.f32 %v4279, %v4279
    %v4284 = vadd.f32 %v4273, %v4280
    %v4285 = vadd.f32 %v4275, %v4281
    %v4286 = vadd.f32 %v4277, %v4282
    %v4287 = vadd.f32 %v4279, %v4283
    %v4288 = vmul.f32 %v4280, %v4280
    %v4289 = vmul.f32 %v4281, %v4281
    %v4290 = vmul.f32 %v4282, %v4282
    %v4291 = vmul.f32 %v4283, %v4283
    %v4292 = vadd.f32 %v4284, %v4288
    %v4293 = vadd.f32 %v4285, %v4289
    %v4294 = vadd.f32 %v4286, %v4290
    %v4295 = vadd.f32 %v4287, %v4291
    %v4296 = vmul.f32 %v4288, %v4288
    %v4297 = vmul.f32 %v4289, %v4289
    %v4298 = vmul.f32 %v4290, %v4290
    %v4299 = vmul.f32 %v4291, %v4291
    %v4300 = vadd.f32 %v4292, %v4296
    %v4301 = vadd.f32 %v4293, %v4297
    %v4302 = vadd.f32 %v4294, %v4298
    %v4303 = vadd.f32 %v4295, %v4299
    %v4304 = vmul.f32 %v4296, %v4296
    %v4305 = vmul.f32 %v4297, %v4297
    %v4306 = vmul.f32 %v4298, %v4298
    %v4307 = vmul.f32 %v4299, %v4299
    %v4308 = vadd.f32 %v4300, %v4304
    %v4309 = vadd.f32 %v4301, %v4305
    %v4310 = vadd.f32 %v4302, %v4306
    %v4311 = vadd.f32 %v4303, %v4307
    %v4312 = vmul.f32 %v4308, 2.0
    %v4313 = vmul.f32 %v4309, 2.0
    %v4314 = vmul.f32 %v4310, 2.0
    %v4315 = vmul.f32 %v4311, 2.0
    %v4316 = vsub.f32 %v4264, %v4312
    %v4317 = vsub.f32 %v4265, %v4313
    %v4318 = vsub.f32 %v4266, %v4314
    %v4319 = vsub.f32 %v4267, %v4315
    %v4320 = vld [vmem:[#allocation2] sm:$0xf]
    %vm4321 = vcmask 60416
    %v4322 = vsel %vm4321, %v4316, 0.0
    %v4323 = vsel %vm4321, %v4317, 0.0
    %v4324 = vadd.f32 %v4322, %v4323
    %v4325 = vsel %vm4321, %v4318, 0.0
    %v4326 = vadd.f32 %v4324, %v4325
    %v4327 = vsel %vm4321, %v4319, 0.0
    %v4328 = vadd.f32 %v4326, %v4327
    %v4329 = vadd.f32 %v4320, %v4328
    %4330 = vst.msk [vmem:[#allocation2] sm:$0xf] %vm4321, %v4329
    // Predicated region
    $region14: #{tpu_custom_call.1} parent=1 // pred_check
      %p4331 = pneg %p12
    $region15: #{tpu_custom_call.1} parent=1 // pred_check_branch
      %4333 = sbr.rel (%p4331) target = $region17
    $region16: #{tpu_custom_call.1} parent=1 // pred_region
      %v4334 = vld [vmem:[#allocation2] sm:$0xf]
      %v4335 = vsel %vm4321, %v4334, 0.0
      %4336 = vadd.xlane.f32.xlu0 %v4335
      %v4337 = vpop.xlane.xlu0 %4336
      %v4338 = vrot.slane %v4337, 4
      %v4339 = vadd.f32 %v4337, %v4338
      %v4340 = vrot.slane %v4339, 2
      %v4341 = vadd.f32 %v4339, %v4340
      %v4342 = vrot.slane %v4341, 1
      %v4343 = vadd.f32 %v4341, %v4342
      %s4344 = vtos %v4343
      %v4345 = vstv %s4344
      %v4346 = vmul.f32 %v4345, 0.0625
      %v4347 = vadd.f32 %v4346, 0.0
      %4348 = vst [vmem:[#allocation3] sm:$0xff] %v4347
    $region17: #{tpu_custom_call.1} parent=1 // pred_fallthru
      _
    // Predicated region
    $region18: #{tpu_custom_call.1} parent=1 // pred_check
      _
    $region19: #{tpu_custom_call.1} parent=1 // pred_check_branch
      %4350 = sbr.rel (0) target = $region21
    $region20: #{tpu_custom_call.1} parent=1 // pred_region
      %s4352 = ssub.s32 128, 128
      %4353 = vsyncadd [#allocation4], %s4352
      %s4355 = sshll.u32 [#allocation3], 4
      %s4356 = int_to_ptr.vmem [resolvable:$true] %s4355
      %4358 = dma.vmem_to_hbm [thread:$0]  %s4356, 128, %s2, [#allocation4]
    $region21: #{tpu_custom_call.1} parent=1 // pred_fallthru
      _
    // Predicated region
    $region22: #{tpu_custom_call.1} parent=1 // pred_check
      _
    $region23: #{tpu_custom_call.1} parent=1 // pred_check_branch
      %4360 = sbr.rel (0) target = $region25
    $region24: #{tpu_custom_call.1} parent=1 // pred_region
      %4361 = dma.done [#allocation4], 128
    $region25: #{tpu_custom_call.1} parent=1 // pred_fallthru
      _
    %4362 = vsyncpa [#allocation4], 1

</llo_original>
